<compile_context>
chip_gen: v6e
topology: v6e:2x2x1
jax: 0.10.0
libtpu: 0.0.40
codegen_flags: <defaults>
</compile_context>

<pallas_src>
import functools
import math

import jax
import jax.numpy as jnp
from jax import lax
from jax.experimental import pallas as pl
from jax.experimental.pallas import tpu as pltpu

LN_EPS = 1e-5
GELU_CONST = math.sqrt(2.0 / math.pi)
NEG_INF = -1e30  # finite "-inf" mask value; exp() underflows to exactly 0


# ----------------------------------------------------------------------------- helpers
def _pick_tile(n, candidates):
    for c in candidates:
        if c <= n and n % c == 0:
            return c
    return n


def _nbytes(shape, dtype):
    return math.prod(shape) * jnp.dtype(dtype).itemsize


def _compiler_params(dim_semantics, per_step_block_bytes):
    # vmem_limit derived from the per-grid-step working set (double-buffered pipeline
    # blocks + headroom), clamped to a range that is safe on v5e/v6e/v7x.
    limit = int(min(max(8 * per_step_block_bytes + (8 << 20), 32 << 20), 96 << 20))
    return pltpu.CompilerParams(dimension_semantics=dim_semantics,
                                vmem_limit_bytes=limit)


def _layernorm_f32(x_f32, scale, shift):
    # mean / population variance over the embedding axis (unbiased=False), like PyTorch.
    mean = jnp.mean(x_f32, axis=-1, keepdims=True)
    var = jnp.mean((x_f32 - mean) ** 2, axis=-1, keepdims=True)
    inv = lax.rsqrt(var + LN_EPS)                      # EUP, not a VALU divide
    return (x_f32 - mean) * inv * scale.astype(jnp.float32) + shift.astype(jnp.float32)


def _gelu_f32(x):
    return 0.5 * x * (1.0 + jnp.tanh(GELU_CONST * (x + 0.044715 * x * x * x)))


# ----------------------------------------------------------------------------- kernels
def _ln_qkv_kernel(x_ref, ln_s_ref, ln_b_ref, wq_ref, wk_ref, wv_ref,
                   q_ref, k_ref, v_ref, *, sm_scale):
    xn = _layernorm_f32(x_ref[...].astype(jnp.float32), ln_s_ref[...], ln_b_ref[...])
    xn = xn.astype(wq_ref.dtype)                       # MXU-native input dtype (bf16)
    q = jnp.dot(xn, wq_ref[...], preferred_element_type=jnp.float32)
    q_ref[...] = (q * sm_scale).astype(q_ref.dtype)    # fold 1/sqrt(head_dim) into Q
    k_ref[...] = jnp.dot(xn, wk_ref[...], preferred_element_type=jnp.float32).astype(k_ref.dtype)
    v_ref[...] = jnp.dot(xn, wv_ref[...], preferred_element_type=jnp.float32).astype(v_ref.dtype)


def _flash_attn_kernel(q_ref, k_ref, v_ref, o_ref, m_sc, l_sc, acc_sc, *, block_t):
    qi = pl.program_id(1)
    ki = pl.program_id(2)

    @pl.when(ki == 0)
    def _init():
        m_sc[...] = jnp.full(m_sc.shape, NEG_INF, jnp.float32)
        l_sc[...] = jnp.zeros(l_sc.shape, jnp.float32)
        acc_sc[...] = jnp.zeros(acc_sc.shape, jnp.float32)

    @pl.when(ki <= qi)                                 # skip fully-masked (future) KV tiles
    def _update():
        q = q_ref[...]                                 # (H, Tq, hd), already pre-scaled
        k = k_ref[...]                                 # (H, Tk, hd)
        v = v_ref[...]
        # contract head_dim with heads batched -> no explicit K transpose, no head slicing
        s = jnp.einsum("hqd,hkd->hqk", q, k, preferred_element_type=jnp.float32)
        rows = qi * block_t + lax.broadcasted_iota(jnp.int32, s.shape, 1)
        cols = ki * block_t + lax.broadcasted_iota(jnp.int32, s.shape, 2)
        s = jnp.where(cols > rows, NEG_INF, s)         # causal mask (triu, diagonal=1)

        m_prev = m_sc[...]
        m_new = jnp.maximum(m_prev, jnp.max(s, axis=-1, keepdims=True))
        alpha = jnp.exp(m_prev - m_new)
        p = jnp.exp(s - m_new)
        l_sc[...] = alpha * l_sc[...] + jnp.sum(p, axis=-1, keepdims=True)
        acc_sc[...] = alpha * acc_sc[...] + jnp.einsum(
            "hqk,hkd->hqd", p.astype(v.dtype), v, preferred_element_type=jnp.float32)
        m_sc[...] = m_new

    @pl.when(ki == pl.num_programs(2) - 1)
    def _finalize():
        inv_l = pl.reciprocal(l_sc[...], approx=True)  # EUP slot, not a VALU divide
        o_ref[...] = (acc_sc[...] * inv_l).astype(o_ref.dtype)


def _attn_out_ffn_kernel(ctx_ref, x_ref, wo_ref, bo_ref, ln_s_ref, ln_b_ref,
                         w1_ref, b1_ref, w2_ref, b2_ref, o_ref, x2_sc, acc_sc):
    hi = pl.program_id(2)

    @pl.when(hi == 0)
    def _first():
        attn = jnp.dot(ctx_ref[...], wo_ref[...], preferred_element_type=jnp.float32)
        attn = attn + bo_ref[...].astype(jnp.float32)
        x1 = x_ref[...].astype(jnp.float32) + attn                       # residual 1
        x2_sc[...] = _layernorm_f32(x1, ln_s_ref[...], ln_b_ref[...]).astype(x2_sc.dtype)
        acc_sc[...] = x1 + b2_ref[...].astype(jnp.float32)               # residual 2 + b2

    # one (D, block_h) slab of the FFN; the full (T, 4D) intermediate is never formed
    h1 = jnp.dot(x2_sc[...], w1_ref[...], preferred_element_type=jnp.float32)
    h1 = h1 + b1_ref[...].astype(jnp.float32)
    g = _gelu_f32(h1)
    acc_sc[...] += jnp.dot(g.astype(w2_ref.dtype), w2_ref[...],
                           preferred_element_type=jnp.float32)

    @pl.when(hi == pl.num_programs(2) - 1)
    def _last():
        o_ref[...] = acc_sc[...].astype(o_ref.dtype)


def _final_head_kernel(x_ref, ln_s_ref, ln_b_ref, w_ref, o_ref):
    xn = _layernorm_f32(x_ref[...].astype(jnp.float32), ln_s_ref[...], ln_b_ref[...])
    o_ref[...] = jnp.dot(xn.astype(w_ref.dtype), w_ref[...],
                         preferred_element_type=jnp.float32).astype(o_ref.dtype)


# ----------------------------------------------------------------------------- wrappers
def transformer_block(x, layer_params, *, num_heads, block_t=None, block_h=None):
    (ln1_s, ln1_b, wq, wk, wv, wo, bo, w1, b1, w2, b2, ln2_s, ln2_b) = layer_params
    B, T, D = x.shape
    hidden = w1.shape[1]
    assert D % num_heads == 0, "emb_dim must be divisible by n_heads"
    hd = D // num_heads
    dt = x.dtype

    bt = block_t if block_t is not None else _pick_tile(T, (128, 64, 32, 16, 8))
    bh = block_h if block_h is not None else _pick_tile(hidden, (512, 256, 128))
    assert T % bt == 0 and hidden % bh == 0
    nt, nh = T // bt, hidden // bh

    # ---- 1) LayerNorm1 + fused QKV projection --------------------------------------
    qkv_spec = pl.BlockSpec((None, bt, D), lambda b, t: (b, t, 0))
    qkv_bytes = (4 * _nbytes((bt, D), dt) + 3 * _nbytes((D, D), dt)
                 + 2 * _nbytes((1, D), dt))
    q, k, v = pl.pallas_call(
        functools.partial(_ln_qkv_kernel, sm_scale=1.0 / math.sqrt(hd)),
        out_shape=(jax.ShapeDtypeStruct((B, T, D), dt),) * 3,
        grid=(B, nt),
        in_specs=[
            pl.BlockSpec((None, bt, D), lambda b, t: (b, t, 0)),   # x tile
            pl.BlockSpec((1, D), lambda b, t: (0, 0)),             # ln1 scale
            pl.BlockSpec((1, D), lambda b, t: (0, 0)),             # ln1 shift
            pl.BlockSpec((D, D), lambda b, t: (0, 0)),             # Wq
            pl.BlockSpec((D, D), lambda b, t: (0, 0)),             # Wk
            pl.BlockSpec((D, D), lambda b, t: (0, 0)),             # Wv
        ],
        out_specs=(qkv_spec, qkv_spec, qkv_spec),
        compiler_params=_compiler_params(("parallel", "parallel"), qkv_bytes),
    )(x, ln1_s, ln1_b, wq, wk, wv)

    # head split done once per layer at the XLA level (cheap, bandwidth-bound relayout);
    # keeps all per-head work inside the flash kernel free of sub-128-lane slicing.
    def to_heads(a):
        return a.reshape(B, T, num_heads, hd).transpose(0, 2, 1, 3)    # (B, H, T, hd)
    qh, kh, vh = to_heads(q), to_heads(k), to_heads(v)

    # ---- 2) causal flash attention (online softmax, KV-tile grid axis) -------------
    attn_bytes = (4 * _nbytes((num_heads, bt, hd), dt)
                  + 3 * _nbytes((num_heads, bt, hd), jnp.float32))
    ctx_h = pl.pallas_call(
        functools.partial(_flash_attn_kernel, block_t=bt),
        out_shape=jax.ShapeDtypeStruct((B, num_heads, T, hd), dt),
        grid=(B, nt, nt),
        in_specs=[
            pl.BlockSpec((None, num_heads, bt, hd), lambda b, qi, ki: (b, 0, qi, 0)),
            pl.BlockSpec((None, num_heads, bt, hd), lambda b, qi, ki: (b, 0, ki, 0)),
            pl.BlockSpec((None, num_heads, bt, hd), lambda b, qi, ki: (b, 0, ki, 0)),
        ],
        out_specs=pl.BlockSpec((None, num_heads, bt, hd), lambda b, qi, ki: (b, 0, qi, 0)),
        scratch_shapes=[
            pltpu.VMEM((num_heads, bt, 1), jnp.float32),    # running max m
            pltpu.VMEM((num_heads, bt, 1), jnp.float32),    # running sum l
            pltpu.VMEM((num_heads, bt, hd), jnp.float32),   # f32 output accumulator
        ],
        compiler_params=_compiler_params(("parallel", "parallel", "arbitrary"), attn_bytes),
    )(qh, kh, vh)

    ctx = ctx_h.transpose(0, 2, 1, 3).reshape(B, T, D)      # merge heads back (XLA level)

    # ---- 3) out-proj + residual + LN2 + FFN (hidden-blocked) + residual ------------
    ffn_bytes = (3 * _nbytes((bt, D), dt) + _nbytes((D, D), dt)
                 + _nbytes((D, bh), dt) + _nbytes((bh, D), dt)
                 + 2 * _nbytes((bt, D), jnp.float32))
    out = pl.pallas_call(
        _attn_out_ffn_kernel,
        out_shape=jax.ShapeDtypeStruct((B, T, D), dt),
        grid=(B, nt, nh),
        in_specs=[
            pl.BlockSpec((None, bt, D), lambda b, t, h: (b, t, 0)),   # attention context
            pl.BlockSpec((None, bt, D), lambda b, t, h: (b, t, 0)),   # block input (residual)
            pl.BlockSpec((D, D), lambda b, t, h: (0, 0)),             # Wo
            pl.BlockSpec((1, D), lambda b, t, h: (0, 0)),             # bo
            pl.BlockSpec((1, D), lambda b, t, h: (0, 0)),             # ln2 scale
            pl.BlockSpec((1, D), lambda b, t, h: (0, 0)),             # ln2 shift
            pl.BlockSpec((D, bh), lambda b, t, h: (0, h)),            # W1 hidden block
            pl.BlockSpec((1, bh), lambda b, t, h: (0, h)),            # b1 hidden block
            pl.BlockSpec((bh, D), lambda b, t, h: (h, 0)),            # W2 hidden block
            pl.BlockSpec((1, D), lambda b, t, h: (0, 0)),             # b2
        ],
        out_specs=pl.BlockSpec((None, bt, D), lambda b, t, h: (b, t, 0)),
        scratch_shapes=[
            pltpu.VMEM((bt, D), dt),            # x2 = LN2(x1), reused across hidden blocks
            pltpu.VMEM((bt, D), jnp.float32),   # f32 output accumulator
        ],
        compiler_params=_compiler_params(("parallel", "parallel", "arbitrary"), ffn_bytes),
    )(ctx, x, wo, bo, ln2_s, ln2_b, w1, b1, w2, b2)
    return out


def final_norm_and_head(x, ln_s, ln_b, w_out, *, block_t=None, block_v=None):
    B, T, D = x.shape
    V = w_out.shape[1]
    bt = block_t if block_t is not None else _pick_tile(T, (128, 64, 32, 16, 8))
    bv = block_v if block_v is not None else _pick_tile(V, (512, 256, 128))
    assert T % bt == 0 and V % bv == 0
    nt, nv = T // bt, V // bv
    head_bytes = (_nbytes((bt, D), x.dtype) + _nbytes((D, bv), w_out.dtype)
                  + _nbytes((bt, bv), jnp.float32))
    return pl.pallas_call(
        _final_head_kernel,
        out_shape=jax.ShapeDtypeStruct((B, T, V), jnp.float32),
        grid=(B, nt, nv),
        in_specs=[
            pl.BlockSpec((None, bt, D), lambda b, t, v: (b, t, 0)),
            pl.BlockSpec((1, D), lambda b, t, v: (0, 0)),
            pl.BlockSpec((1, D), lambda b, t, v: (0, 0)),
            pl.BlockSpec((D, bv), lambda b, t, v: (0, v)),
        ],
        out_specs=pl.BlockSpec((None, bt, bv), lambda b, t, v: (b, t, v)),
        compiler_params=_compiler_params(("parallel", "parallel", "parallel"), head_bytes),
    )(x, ln_s, ln_b, w_out)


def gpt_forward(in_idx, params, *, cfg, block_t=None, block_h=None, block_v=None):
    # TODO(synk): the nn.Embedding gathers are table lookups with no clean dense Pallas
    # equivalent here; they are done with jnp.take outside the kernels.
    T = in_idx.shape[1]
    dt = params["tok_emb"].dtype
    tok = jnp.take(params["tok_emb"], in_idx, axis=0).astype(jnp.float32)
    pos = params["pos_emb"][:T].astype(jnp.float32)[None, :, :]
    x = (tok + pos).astype(dt)
    # drop_emb / all dropout layers: drop_rate = 0.0 -> identity (eval semantics)

    for layer_params in params["blocks"]:
        x = transformer_block(x, layer_params, num_heads=cfg["n_heads"],
                              block_t=block_t, block_h=block_h)

    return final_norm_and_head(x, params["final_ln_s"], params["final_ln_b"],
                               params["out_w"], block_t=block_t, block_v=block_v)


# ----------------------------------------------------------------------------- reference
def gpt_forward_ref(in_idx, params, *, cfg):
    """Pure-JAX f32 reference mirroring the PyTorch forward exactly (eval mode)."""
    f32 = lambda a: a.astype(jnp.float32)

    def ln(v, s, b):
        m = jnp.mean(v, -1, keepdims=True)
        var = jnp.mean((v - m) ** 2, -1, keepdims=True)
        return f32(s) * (v - m) / jnp.sqrt(var + LN_EPS) + f32(b)

    H = cfg["n_heads"]
    T = in_idx.shape[1]
    x = f32(jnp.take(params["tok_emb"], in_idx, axis=0)) + f32(params["pos_emb"][:T])[None]
    for (ln1_s, ln1_b, wq, wk, wv, wo, bo, w1, b1, w2, b2, ln2_s, ln2_b) in params["blocks"]:
        B, _, D = x.shape
        hd = D // H
        xn = ln(x, ln1_s, ln1_b)
        q = (xn @ f32(wq)).reshape(B, T, H, hd).transpose(0, 2, 1, 3)
        k = (xn @ f32(wk)).reshape(B, T, H, hd).transpose(0, 2, 1, 3)
        v = (xn @ f32(wv)).reshape(B, T, H, hd).transpose(0, 2, 1, 3)
        s = jnp.einsum("bhqd,bhkd->bhqk", q, k) / math.sqrt(hd)
        mask = jnp.triu(jnp.ones((T, T), bool), k=1)
        s = jnp.where(mask, -jnp.inf, s)
        w = jax.nn.softmax(s, axis=-1)
        ctx = jnp.einsum("bhqk,bhkd->bhqd", w, v).transpose(0, 2, 1, 3).reshape(B, T, D)
        x1 = x + ctx @ f32(wo) + f32(bo)
        x2 = ln(x1, ln2_s, ln2_b)
        h1 = x2 @ f32(w1) + f32(b1)
        g = 0.5 * h1 * (1.0 + jnp.tanh(GELU_CONST * (h1 + 0.044715 * h1 ** 3)))
        x = x1 + g @ f32(w2) + f32(b2)
    xf = ln(x, params["final_ln_s"], params["final_ln_b"])
    return xf @ f32(params["out_w"])


# ----------------------------------------------------------------------------- test
if __name__ == "__main__":
    cfg = dict(vocab_size=512, context_length=64, emb_dim=64, n_heads=4,
               n_layers=2, drop_rate=0.0, qkv_bias=False)
    assert not cfg["qkv_bias"]
    B, T, D = 2, cfg["context_length"], cfg["emb_dim"]
    V, hidden = cfg["vocab_size"], 4 * cfg["emb_dim"]
    dtype = jnp.bfloat16           # MXU-native inputs; all matmuls accumulate in f32

    key = jax.random.PRNGKey(0)
    keys = iter(jax.random.split(key, 32))

    def init(shape, scale=0.02):
        return (scale * jax.random.normal(next(keys), shape, jnp.float32)).astype(dtype)

    def make_block():
        return (
            jnp.ones((1, D), dtype), jnp.zeros((1, D), dtype),   # LN1 scale / shift
            init((D, D)), init((D, D)), init((D, D)),            # Wq, Wk, Wv (qkv_bias=False)
            init((D, D)), init((1, D)),                          # Wo, bo
            init((D, hidden)), init((1, hidden)),                # FF W1, b1
            init((hidden, D)), init((1, D)),                     # FF W2, b2
            jnp.ones((1, D), dtype), jnp.zeros((1, D), dtype),   # LN2 scale / shift
        )

    params = dict(
        tok_emb=init((V, D), 1.0),
        pos_emb=init((cfg["context_length"], D), 1.0),
        blocks=[make_block() for _ in range(cfg["n_layers"])],
        final_ln_s=jnp.ones((1, D), dtype),
        final_ln_b=jnp.zeros((1, D), dtype),
        out_w=init((D, V)),
    )
    in_idx = jax.random.randint(next(keys), (B, T), 0, V, dtype=jnp.int32)

    fwd = jax.jit(functools.partial(gpt_forward, cfg=cfg,
                                    block_t=32, block_h=128, block_v=128))
    logits = jax.block_until_ready(fwd(in_idx, params))

    ref = gpt_forward_ref(in_idx, params, cfg=cfg)
    assert logits.shape == (B, T, V)
    assert bool(jnp.all(jnp.isfinite(logits)))
    # bf16 MXU inputs vs. f32 reference -> relaxed tolerance
    max_err = float(jnp.max(jnp.abs(logits - ref)))
    assert jnp.allclose(logits, ref, atol=3e-2, rtol=3e-2), f"max |err| = {max_err}"
    print("KERNEL_OK")
</pallas_src>

<mosaic_0001>
module attributes {stable_mosaic.version = 11 : i64} {
  func.func @_ln_qkv_kernel(%arg0: i32, %arg1: i32, %arg2: memref<1x32x64xbf16, #tpu.memory_space<vmem>>, %arg3: memref<1x64xbf16, #tpu.memory_space<vmem>>, %arg4: memref<1x64xbf16, #tpu.memory_space<vmem>>, %arg5: memref<64x64xbf16, #tpu.memory_space<vmem>>, %arg6: memref<64x64xbf16, #tpu.memory_space<vmem>>, %arg7: memref<64x64xbf16, #tpu.memory_space<vmem>>, %arg8: memref<1x32x64xbf16, #tpu.memory_space<vmem>>, %arg9: memref<1x32x64xbf16, #tpu.memory_space<vmem>>, %arg10: memref<1x32x64xbf16, #tpu.memory_space<vmem>>) attributes {dimension_semantics = [#tpu.dimension_semantics<parallel>, #tpu.dimension_semantics<parallel>], iteration_bounds = array<i64: 2, 2>, scalar_prefetch = 0 : i64, scratch_operands = 0 : i64, tpu.core_type = #tpu.core_type<tc>, window_params = [{transform_indices = @transform_0, window_bounds = array<i64: 1, 32, 64>}, {pipeline_mode = #tpu.pipeline_mode<synchronous>, transform_indices = @transform_1, window_bounds = array<i64: 1, 64>}, {pipeline_mode = #tpu.pipeline_mode<synchronous>, transform_indices = @transform_2, window_bounds = array<i64: 1, 64>}, {pipeline_mode = #tpu.pipeline_mode<synchronous>, transform_indices = @transform_3, window_bounds = array<i64: 64, 64>}, {pipeline_mode = #tpu.pipeline_mode<synchronous>, transform_indices = @transform_4, window_bounds = array<i64: 64, 64>}, {pipeline_mode = #tpu.pipeline_mode<synchronous>, transform_indices = @transform_5, window_bounds = array<i64: 64, 64>}, {transform_indices = @transform_6, window_bounds = array<i64: 1, 32, 64>}, {transform_indices = @transform_7, window_bounds = array<i64: 1, 32, 64>}, {transform_indices = @transform_8, window_bounds = array<i64: 1, 32, 64>}]} {
    %c0 = arith.constant 0 : index
    %c0_0 = arith.constant 0 : index
    %c0_1 = arith.constant 0 : index
    %0 = vector.load %arg2[%c0, %c0_0, %c0_1] : memref<1x32x64xbf16, #tpu.memory_space<vmem>>, vector<1x32x64xbf16>
    %1 = vector.shape_cast %0 : vector<1x32x64xbf16> to vector<32x64xbf16>
    %2 = arith.extf %1 : vector<32x64xbf16> to vector<32x64xf32>
    %c0_2 = arith.constant 0 : index
    %c0_3 = arith.constant 0 : index
    %3 = vector.load %arg3[%c0_2, %c0_3] : memref<1x64xbf16, #tpu.memory_space<vmem>>, vector<1x64xbf16>
    %c0_4 = arith.constant 0 : index
    %c0_5 = arith.constant 0 : index
    %4 = vector.load %arg4[%c0_4, %c0_5] : memref<1x64xbf16, #tpu.memory_space<vmem>>, vector<1x64xbf16>
    %cst = arith.constant dense<0.000000e+00> : vector<32xf32>
    %5 = vector.multi_reduction <add>, %2, %cst [1] : vector<32x64xf32> to vector<32xf32>
    %6 = vector.shape_cast %5 : vector<32xf32> to vector<32x1xf32>
    %cst_6 = arith.constant 6.400000e+01 : f32
    %7 = vector.broadcast %cst_6 : f32 to vector<32x1xf32>
    %8 = arith.divf %6, %7 : vector<32x1xf32>
    %9 = vector.broadcast %8 : vector<32x1xf32> to vector<32x64xf32>
    %10 = arith.subf %2, %9 : vector<32x64xf32>
    %11 = arith.mulf %10, %10 : vector<32x64xf32>
    %cst_7 = arith.constant dense<0.000000e+00> : vector<32xf32>
    %12 = vector.multi_reduction <add>, %11, %cst_7 [1] : vector<32x64xf32> to vector<32xf32>
    %13 = vector.shape_cast %12 : vector<32xf32> to vector<32x1xf32>
    %cst_8 = arith.constant 6.400000e+01 : f32
    %14 = vector.broadcast %cst_8 : f32 to vector<32x1xf32>
    %15 = arith.divf %13, %14 : vector<32x1xf32>
    %cst_9 = arith.constant 9.99999974E-6 : f32
    %16 = vector.broadcast %cst_9 : f32 to vector<32x1xf32>
    %17 = arith.addf %15, %16 : vector<32x1xf32>
    %18 = math.rsqrt %17 : vector<32x1xf32>
    %19 = vector.broadcast %8 : vector<32x1xf32> to vector<32x64xf32>
    %20 = arith.subf %2, %19 : vector<32x64xf32>
    %21 = vector.broadcast %18 : vector<32x1xf32> to vector<32x64xf32>
    %22 = arith.mulf %20, %21 : vector<32x64xf32>
    %23 = arith.extf %3 : vector<1x64xbf16> to vector<1x64xf32>
    %24 = vector.broadcast %23 : vector<1x64xf32> to vector<32x64xf32>
    %25 = arith.mulf %22, %24 : vector<32x64xf32>
    %26 = arith.extf %4 : vector<1x64xbf16> to vector<1x64xf32>
    %27 = vector.broadcast %26 : vector<1x64xf32> to vector<32x64xf32>
    %28 = arith.addf %25, %27 : vector<32x64xf32>
    %29 = arith.truncf %28 : vector<32x64xf32> to vector<32x64xbf16>
    %c0_10 = arith.constant 0 : index
    %c0_11 = arith.constant 0 : index
    %30 = vector.load %arg5[%c0_10, %c0_11] : memref<64x64xbf16, #tpu.memory_space<vmem>>, vector<64x64xbf16>
    %cst_12 = arith.constant dense<0.000000e+00> : vector<32x64xf32>
    %31 = tpu.matmul %29, %30, %cst_12 {dimension_numbers = #tpu.dot_dimension_numbers<[1], [0], [0], [1], [0, 0, 1, 1], [], []>} : vector<32x64xbf16>, vector<64x64xbf16>, vector<32x64xf32> -> vector<32x64xf32>
    %cst_13 = arith.constant 2.500000e-01 : f32
    %32 = vector.broadcast %cst_13 : f32 to vector<32x64xf32>
    %33 = arith.mulf %31, %32 : vector<32x64xf32>
    %34 = arith.truncf %33 : vector<32x64xf32> to vector<32x64xbf16>
    %c0_14 = arith.constant 0 : index
    %c0_15 = arith.constant 0 : index
    %c0_16 = arith.constant 0 : index
    %35 = vector.load %arg8[%c0_14, %c0_15, %c0_16] : memref<1x32x64xbf16, #tpu.memory_space<vmem>>, vector<1x32x64xbf16>
    %36 = vector.shape_cast %35 : vector<1x32x64xbf16> to vector<32x64xbf16>
    %37 = vector.shape_cast %34 : vector<32x64xbf16> to vector<1x32x64xbf16>
    tpu.vector_store %arg8[%c0_14, %c0_15, %c0_16], %37 {strides = array<i32>} : memref<1x32x64xbf16, #tpu.memory_space<vmem>>, vector<1x32x64xbf16>,
    %c0_17 = arith.constant 0 : index
    %c0_18 = arith.constant 0 : index
    %38 = vector.load %arg6[%c0_17, %c0_18] : memref<64x64xbf16, #tpu.memory_space<vmem>>, vector<64x64xbf16>
    %cst_19 = arith.constant dense<0.000000e+00> : vector<32x64xf32>
    %39 = tpu.matmul %29, %38, %cst_19 {dimension_numbers = #tpu.dot_dimension_numbers<[1], [0], [0], [1], [0, 0, 1, 1], [], []>} : vector<32x64xbf16>, vector<64x64xbf16>, vector<32x64xf32> -> vector<32x64xf32>
    %40 = arith.truncf %39 : vector<32x64xf32> to vector<32x64xbf16>
    %c0_20 = arith.constant 0 : index
    %c0_21 = arith.constant 0 : index
    %c0_22 = arith.constant 0 : index
    %41 = vector.load %arg9[%c0_20, %c0_21, %c0_22] : memref<1x32x64xbf16, #tpu.memory_space<vmem>>, vector<1x32x64xbf16>
    %42 = vector.shape_cast %41 : vector<1x32x64xbf16> to vector<32x64xbf16>
    %43 = vector.shape_cast %40 : vector<32x64xbf16> to vector<1x32x64xbf16>
    tpu.vector_store %arg9[%c0_20, %c0_21, %c0_22], %43 {strides = array<i32>} : memref<1x32x64xbf16, #tpu.memory_space<vmem>>, vector<1x32x64xbf16>,
    %c0_23 = arith.constant 0 : index
    %c0_24 = arith.constant 0 : index
    %44 = vector.load %arg7[%c0_23, %c0_24] : memref<64x64xbf16, #tpu.memory_space<vmem>>, vector<64x64xbf16>
    %cst_25 = arith.constant dense<0.000000e+00> : vector<32x64xf32>
    %45 = tpu.matmul %29, %44, %cst_25 {dimension_numbers = #tpu.dot_dimension_numbers<[1], [0], [0], [1], [0, 0, 1, 1], [], []>} : vector<32x64xbf16>, vector<64x64xbf16>, vector<32x64xf32> -> vector<32x64xf32>
    %46 = arith.truncf %45 : vector<32x64xf32> to vector<32x64xbf16>
    %c0_26 = arith.constant 0 : index
    %c0_27 = arith.constant 0 : index
    %c0_28 = arith.constant 0 : index
    %47 = vector.load %arg10[%c0_26, %c0_27, %c0_28] : memref<1x32x64xbf16, #tpu.memory_space<vmem>>, vector<1x32x64xbf16>
    %48 = vector.shape_cast %47 : vector<1x32x64xbf16> to vector<32x64xbf16>
    %49 = vector.shape_cast %46 : vector<32x64xbf16> to vector<1x32x64xbf16>
    tpu.vector_store %arg10[%c0_26, %c0_27, %c0_28], %49 {strides = array<i32>} : memref<1x32x64xbf16, #tpu.memory_space<vmem>>, vector<1x32x64xbf16>,
    return
  }
  func.func @transform_0(%arg0: i32, %arg1: i32) -> (i32, i32, i32) {
    %c0_i32 = arith.constant 0 : i32
    %c0_i32_0 = arith.constant 0 : i32
    return %arg0, %arg1, %c0_i32 : i32, i32, i32
  }
  func.func @transform_1(%arg0: i32, %arg1: i32) -> (i32, i32) {
    %c0_i32 = arith.constant 0 : i32
    %c0_i32_0 = arith.constant 0 : i32
    %c0_i32_1 = arith.constant 0 : i32
    return %c0_i32, %c0_i32_0 : i32, i32
  }
  func.func @transform_2(%arg0: i32, %arg1: i32) -> (i32, i32) {
    %c0_i32 = arith.constant 0 : i32
    %c0_i32_0 = arith.constant 0 : i32
    %c0_i32_1 = arith.constant 0 : i32
    return %c0_i32, %c0_i32_0 : i32, i32
  }
  func.func @transform_3(%arg0: i32, %arg1: i32) -> (i32, i32) {
    %c0_i32 = arith.constant 0 : i32
    %c0_i32_0 = arith.constant 0 : i32
    %c0_i32_1 = arith.constant 0 : i32
    return %c0_i32, %c0_i32_0 : i32, i32
  }
  func.func @transform_4(%arg0: i32, %arg1: i32) -> (i32, i32) {
    %c0_i32 = arith.constant 0 : i32
    %c0_i32_0 = arith.constant 0 : i32
    %c0_i32_1 = arith.constant 0 : i32
    return %c0_i32, %c0_i32_0 : i32, i32
  }
  func.func @transform_5(%arg0: i32, %arg1: i32) -> (i32, i32) {
    %c0_i32 = arith.constant 0 : i32
    %c0_i32_0 = arith.constant 0 : i32
    %c0_i32_1 = arith.constant 0 : i32
    return %c0_i32, %c0_i32_0 : i32, i32
  }
  func.func @transform_6(%arg0: i32, %arg1: i32) -> (i32, i32, i32) {
    %c0_i32 = arith.constant 0 : i32
    %c0_i32_0 = arith.constant 0 : i32
    return %arg0, %arg1, %c0_i32 : i32, i32, i32
  }
  func.func @transform_7(%arg0: i32, %arg1: i32) -> (i32, i32, i32) {
    %c0_i32 = arith.constant 0 : i32
    %c0_i32_0 = arith.constant 0 : i32
    return %arg0, %arg1, %c0_i32 : i32, i32, i32
  }
  func.func @transform_8(%arg0: i32, %arg1: i32) -> (i32, i32, i32) {
    %c0_i32 = arith.constant 0 : i32
    %c0_i32_0 = arith.constant 0 : i32
    return %arg0, %arg1, %c0_i32 : i32, i32, i32
  }
}

module attributes {stable_mosaic.version = 11 : i64} {
  func.func @_flash_attn_kernel(%arg0: i32, %arg1: i32, %arg2: i32, %arg3: memref<1x4x32x16xbf16, #tpu.memory_space<vmem>>, %arg4: memref<1x4x32x16xbf16, #tpu.memory_space<vmem>>, %arg5: memref<1x4x32x16xbf16, #tpu.memory_space<vmem>>, %arg6: memref<1x4x32x16xbf16, #tpu.memory_space<vmem>>, %arg7: memref<4x32x1xf32, #tpu.memory_space<vmem>>, %arg8: memref<4x32x1xf32, #tpu.memory_space<vmem>>, %arg9: memref<4x32x16xf32, #tpu.memory_space<vmem>>) attributes {dimension_semantics = [#tpu.dimension_semantics<parallel>, #tpu.dimension_semantics<parallel>, #tpu.dimension_semantics<arbitrary>], iteration_bounds = array<i64: 2, 2, 2>, scalar_prefetch = 0 : i64, scratch_operands = 3 : i64, tpu.core_type = #tpu.core_type<tc>, window_params = [{transform_indices = @transform_0, window_bounds = array<i64: 1, 4, 32, 16>}, {transform_indices = @transform_1, window_bounds = array<i64: 1, 4, 32, 16>}, {transform_indices = @transform_2, window_bounds = array<i64: 1, 4, 32, 16>}, {transform_indices = @transform_3, window_bounds = array<i64: 1, 4, 32, 16>}]} {
    %c0_i32 = arith.constant 0 : i32
    %0 = arith.cmpi eq, %arg2, %c0_i32 : i32
    %1 = arith.extui %0 : i1 to i32
    %c0_i32_0 = arith.constant 0 : i32
    %2 = arith.cmpi ne, %1, %c0_i32_0 : i32
    scf.if %2 {
      %cst = arith.constant -1.000000e+30 : f32
      %9 = vector.broadcast %cst : f32 to vector<4x32x1xf32>
      %c0 = arith.constant 0 : index
      %c0_3 = arith.constant 0 : index
      %c0_4 = arith.constant 0 : index
      %10 = vector.load %arg7[%c0, %c0_3, %c0_4] : memref<4x32x1xf32, #tpu.memory_space<vmem>>, vector<4x32x1xf32>
      tpu.vector_store %arg7[%c0, %c0_3, %c0_4], %9 {strides = array<i32>} : memref<4x32x1xf32, #tpu.memory_space<vmem>>, vector<4x32x1xf32>,
      %cst_5 = arith.constant 0.000000e+00 : f32
      %11 = vector.broadcast %cst_5 : f32 to vector<4x32x1xf32>
      %c0_6 = arith.constant 0 : index
      %c0_7 = arith.constant 0 : index
      %c0_8 = arith.constant 0 : index
      %12 = vector.load %arg8[%c0_6, %c0_7, %c0_8] : memref<4x32x1xf32, #tpu.memory_space<vmem>>, vector<4x32x1xf32>
      tpu.vector_store %arg8[%c0_6, %c0_7, %c0_8], %11 {strides = array<i32>} : memref<4x32x1xf32, #tpu.memory_space<vmem>>, vector<4x32x1xf32>,
      %cst_9 = arith.constant 0.000000e+00 : f32
      %13 = vector.broadcast %cst_9 : f32 to vector<4x32x16xf32>
      %c0_10 = arith.constant 0 : index
      %c0_11 = arith.constant 0 : index
      %c0_12 = arith.constant 0 : index
      %14 = vector.load %arg9[%c0_10, %c0_11, %c0_12] : memref<4x32x16xf32, #tpu.memory_space<vmem>>, vector<4x32x16xf32>
      tpu.vector_store %arg9[%c0_10, %c0_11, %c0_12], %13 {strides = array<i32>} : memref<4x32x16xf32, #tpu.memory_space<vmem>>, vector<4x32x16xf32>,
    } else {
    }
    %3 = arith.cmpi sle, %arg2, %arg1 : i32
    %4 = arith.extui %3 : i1 to i32
    %c0_i32_1 = arith.constant 0 : i32
    %5 = arith.cmpi ne, %4, %c0_i32_1 : i32
    scf.if %5 {
      %c0 = arith.constant 0 : index
      %c0_3 = arith.constant 0 : index
      %c0_4 = arith.constant 0 : index
      %c0_5 = arith.constant 0 : index
      %9 = vector.load %arg3[%c0, %c0_3, %c0_4, %c0_5] : memref<1x4x32x16xbf16, #tpu.memory_space<vmem>>, vector<1x4x32x16xbf16>
      %10 = vector.shape_cast %9 : vector<1x4x32x16xbf16> to vector<4x32x16xbf16>
      %c0_6 = arith.constant 0 : index
      %c0_7 = arith.constant 0 : index
      %c0_8 = arith.constant 0 : index
      %c0_9 = arith.constant 0 : index
      %11 = vector.load %arg4[%c0_6, %c0_7, %c0_8, %c0_9] : memref<1x4x32x16xbf16, #tpu.memory_space<vmem>>, vector<1x4x32x16xbf16>
      %12 = vector.shape_cast %11 : vector<1x4x32x16xbf16> to vector<4x32x16xbf16>
      %c0_10 = arith.constant 0 : index
      %c0_11 = arith.constant 0 : index
      %c0_12 = arith.constant 0 : index
      %c0_13 = arith.constant 0 : index
      %13 = vector.load %arg5[%c0_10, %c0_11, %c0_12, %c0_13] : memref<1x4x32x16xbf16, #tpu.memory_space<vmem>>, vector<1x4x32x16xbf16>
      %14 = vector.shape_cast %13 : vector<1x4x32x16xbf16> to vector<4x32x16xbf16>
      "tpu.trace_start"() <{level = 10 : i32, message = "hqd,hkd->hqk"}> : () -> ()
      %cst = arith.constant dense<0.000000e+00> : vector<4x32x32xf32>
      %15 = tpu.matmul %10, %12, %cst {dimension_numbers = #tpu.dot_dimension_numbers<[2], [2], [1], [1], [0, 0, 0, 1, 1, 1], [0], [0]>} : vector<4x32x16xbf16>, vector<4x32x16xbf16>, vector<4x32x32xf32> -> vector<4x32x32xf32>
      "tpu.trace_stop"() : () -> ()
      %c32_i32 = arith.constant 32 : i32
      %16 = arith.muli %arg1, %c32_i32 : i32
      %17 = tpu.iota {dimensions = array<i32: 1>} : vector<4x32x32xi32>
      %18 = vector.broadcast %16 : i32 to vector<4x32x32xi32>
      %19 = arith.addi %18, %17 : vector<4x32x32xi32>
      %c32_i32_14 = arith.constant 32 : i32
      %20 = arith.muli %arg2, %c32_i32_14 : i32
      %21 = tpu.iota {dimensions = array<i32: 2>} : vector<4x32x32xi32>
      %22 = vector.broadcast %20 : i32 to vector<4x32x32xi32>
      %23 = arith.addi %22, %21 : vector<4x32x32xi32>
      %24 = arith.cmpi sgt, %23, %19 : vector<4x32x32xi32>
      %cst_15 = arith.constant -1.000000e+30 : f32
      %25 = vector.broadcast %cst_15 : f32 to vector<4x32x32xf32>
      %26 = arith.select %24, %25, %15 : vector<4x32x32xi1>, vector<4x32x32xf32>
      %c0_16 = arith.constant 0 : index
      %c0_17 = arith.constant 0 : index
      %c0_18 = arith.constant 0 : index
      %27 = vector.load %arg7[%c0_16, %c0_17, %c0_18] : memref<4x32x1xf32, #tpu.memory_space<vmem>>, vector<4x32x1xf32>
      %cst_19 = arith.constant dense<0xFF800000> : vector<4x32xf32>
      %28 = vector.multi_reduction <maximumf>, %26, %cst_19 [2] : vector<4x32x32xf32> to vector<4x32xf32>
      %29 = vector.shape_cast %28 : vector<4x32xf32> to vector<4x32x1xf32>
      %30 = arith.maximumf %27, %29 : vector<4x32x1xf32>
      %31 = arith.subf %27, %30 : vector<4x32x1xf32>
      %32 = math.exp %31 : vector<4x32x1xf32>
      %33 = vector.broadcast %30 : vector<4x32x1xf32> to vector<4x32x32xf32>
      %34 = arith.subf %26, %33 : vector<4x32x32xf32>
      %35 = math.exp %34 : vector<4x32x32xf32>
      %c0_20 = arith.constant 0 : index
      %c0_21 = arith.constant 0 : index
      %c0_22 = arith.constant 0 : index
      %36 = vector.load %arg8[%c0_20, %c0_21, %c0_22] : memref<4x32x1xf32, #tpu.memory_space<vmem>>, vector<4x32x1xf32>
      %37 = arith.mulf %32, %36 : vector<4x32x1xf32>
      %cst_23 = arith.constant dense<0.000000e+00> : vector<4x32xf32>
      %38 = vector.multi_reduction <add>, %35, %cst_23 [2] : vector<4x32x32xf32> to vector<4x32xf32>
      %39 = vector.shape_cast %38 : vector<4x32xf32> to vector<4x32x1xf32>
      %40 = arith.addf %37, %39 : vector<4x32x1xf32>
      %c0_24 = arith.constant 0 : index
      %c0_25 = arith.constant 0 : index
      %c0_26 = arith.constant 0 : index
      %41 = vector.load %arg8[%c0_24, %c0_25, %c0_26] : memref<4x32x1xf32, #tpu.memory_space<vmem>>, vector<4x32x1xf32>
      tpu.vector_store %arg8[%c0_24, %c0_25, %c0_26], %40 {strides = array<i32>} : memref<4x32x1xf32, #tpu.memory_space<vmem>>, vector<4x32x1xf32>,
      %c0_27 = arith.constant 0 : index
      %c0_28 = arith.constant 0 : index
      %c0_29 = arith.constant 0 : index
      %42 = vector.load %arg9[%c0_27, %c0_28, %c0_29] : memref<4x32x16xf32, #tpu.memory_space<vmem>>, vector<4x32x16xf32>
      %43 = vector.broadcast %32 : vector<4x32x1xf32> to vector<4x32x16xf32>
      %44 = arith.mulf %43, %42 : vector<4x32x16xf32>
      %45 = arith.truncf %35 : vector<4x32x32xf32> to vector<4x32x32xbf16>
      "tpu.trace_start"() <{level = 10 : i32, message = "hqk,hkd->hqd"}> : () -> ()
      %cst_30 = arith.constant dense<0.000000e+00> : vector<4x32x16xf32>
      %46 = tpu.matmul %45, %14, %cst_30 {dimension_numbers = #tpu.dot_dimension_numbers<[2], [1], [1], [2], [0, 0, 0, 1, 1, 2], [0], [0]>} : vector<4x32x32xbf16>, vector<4x32x16xbf16>, vector<4x32x16xf32> -> vector<4x32x16xf32>
      "tpu.trace_stop"() : () -> ()
      %47 = arith.addf %44, %46 : vector<4x32x16xf32>
      %c0_31 = arith.constant 0 : index
      %c0_32 = arith.constant 0 : index
      %c0_33 = arith.constant 0 : index
      %48 = vector.load %arg9[%c0_31, %c0_32, %c0_33] : memref<4x32x16xf32, #tpu.memory_space<vmem>>, vector<4x32x16xf32>
      tpu.vector_store %arg9[%c0_31, %c0_32, %c0_33], %47 {strides = array<i32>} : memref<4x32x16xf32, #tpu.memory_space<vmem>>, vector<4x32x16xf32>,
      %c0_34 = arith.constant 0 : index
      %c0_35 = arith.constant 0 : index
      %c0_36 = arith.constant 0 : index
      %49 = vector.load %arg7[%c0_34, %c0_35, %c0_36] : memref<4x32x1xf32, #tpu.memory_space<vmem>>, vector<4x32x1xf32>
      tpu.vector_store %arg7[%c0_34, %c0_35, %c0_36], %30 {strides = array<i32>} : memref<4x32x1xf32, #tpu.memory_space<vmem>>, vector<4x32x1xf32>,
    } else {
    }
    %c1_i32 = arith.constant 1 : i32
    %6 = arith.cmpi eq, %arg2, %c1_i32 : i32
    %7 = arith.extui %6 : i1 to i32
    %c0_i32_2 = arith.constant 0 : i32
    %8 = arith.cmpi ne, %7, %c0_i32_2 : i32
    scf.if %8 {
      %c0 = arith.constant 0 : index
      %c0_3 = arith.constant 0 : index
      %c0_4 = arith.constant 0 : index
      %9 = vector.load %arg8[%c0, %c0_3, %c0_4] : memref<4x32x1xf32, #tpu.memory_space<vmem>>, vector<4x32x1xf32>
      %10 = tpu.reciprocal %9 {approx = true} : vector<4x32x1xf32> -> vector<4x32x1xf32>
      %c0_5 = arith.constant 0 : index
      %c0_6 = arith.constant 0 : index
      %c0_7 = arith.constant 0 : index
      %11 = vector.load %arg9[%c0_5, %c0_6, %c0_7] : memref<4x32x16xf32, #tpu.memory_space<vmem>>, vector<4x32x16xf32>
      %12 = vector.broadcast %10 : vector<4x32x1xf32> to vector<4x32x16xf32>
      %13 = arith.mulf %11, %12 : vector<4x32x16xf32>
      %14 = arith.truncf %13 : vector<4x32x16xf32> to vector<4x32x16xbf16>
      %c0_8 = arith.constant 0 : index
      %c0_9 = arith.constant 0 : index
      %c0_10 = arith.constant 0 : index
      %c0_11 = arith.constant 0 : index
      %15 = vector.load %arg6[%c0_8, %c0_9, %c0_10, %c0_11] : memref<1x4x32x16xbf16, #tpu.memory_space<vmem>>, vector<1x4x32x16xbf16>
      %16 = vector.shape_cast %15 : vector<1x4x32x16xbf16> to vector<4x32x16xbf16>
      %17 = vector.shape_cast %14 : vector<4x32x16xbf16> to vector<1x4x32x16xbf16>
      tpu.vector_store %arg6[%c0_8, %c0_9, %c0_10, %c0_11], %17 {strides = array<i32>} : memref<1x4x32x16xbf16, #tpu.memory_space<vmem>>, vector<1x4x32x16xbf16>,
    } else {
    }
    return
  }
  func.func @transform_0(%arg0: i32, %arg1: i32, %arg2: i32) -> (i32, i32, i32, i32) {
    %c0_i32 = arith.constant 0 : i32
    %c0_i32_0 = arith.constant 0 : i32
    %c0_i32_1 = arith.constant 0 : i32
    return %arg0, %c0_i32, %arg1, %c0_i32_0 : i32, i32, i32, i32
  }
  func.func @transform_1(%arg0: i32, %arg1: i32, %arg2: i32) -> (i32, i32, i32, i32) {
    %c0_i32 = arith.constant 0 : i32
    %c0_i32_0 = arith.constant 0 : i32
    %c0_i32_1 = arith.constant 0 : i32
    return %arg0, %c0_i32, %arg2, %c0_i32_0 : i32, i32, i32, i32
  }
  func.func @transform_2(%arg0: i32, %arg1: i32, %arg2: i32) -> (i32, i32, i32, i32) {
    %c0_i32 = arith.constant 0 : i32
    %c0_i32_0 = arith.constant 0 : i32
    %c0_i32_1 = arith.constant 0 : i32
    return %arg0, %c0_i32, %arg2, %c0_i32_0 : i32, i32, i32, i32
  }
  func.func @transform_3(%arg0: i32, %arg1: i32, %arg2: i32) -> (i32, i32, i32, i32) {
    %c0_i32 = arith.constant 0 : i32
    %c0_i32_0 = arith.constant 0 : i32
    %c0_i32_1 = arith.constant 0 : i32
    return %arg0, %c0_i32, %arg1, %c0_i32_0 : i32, i32, i32, i32
  }
}

module attributes {stable_mosaic.version = 11 : i64} {
  func.func @_attn_out_ffn_kernel(%arg0: i32, %arg1: i32, %arg2: i32, %arg3: memref<1x32x64xbf16, #tpu.memory_space<vmem>>, %arg4: memref<1x32x64xbf16, #tpu.memory_space<vmem>>, %arg5: memref<64x64xbf16, #tpu.memory_space<vmem>>, %arg6: memref<1x64xbf16, #tpu.memory_space<vmem>>, %arg7: memref<1x64xbf16, #tpu.memory_space<vmem>>, %arg8: memref<1x64xbf16, #tpu.memory_space<vmem>>, %arg9: memref<64x128xbf16, #tpu.memory_space<vmem>>, %arg10: memref<1x128xbf16, #tpu.memory_space<vmem>>, %arg11: memref<128x64xbf16, #tpu.memory_space<vmem>>, %arg12: memref<1x64xbf16, #tpu.memory_space<vmem>>, %arg13: memref<1x32x64xbf16, #tpu.memory_space<vmem>>, %arg14: memref<32x64xbf16, #tpu.memory_space<vmem>>, %arg15: memref<32x64xf32, #tpu.memory_space<vmem>>) attributes {dimension_semantics = [#tpu.dimension_semantics<parallel>, #tpu.dimension_semantics<parallel>, #tpu.dimension_semantics<arbitrary>], iteration_bounds = array<i64: 2, 2, 2>, scalar_prefetch = 0 : i64, scratch_operands = 2 : i64, tpu.core_type = #tpu.core_type<tc>, window_params = [{transform_indices = @transform_0, window_bounds = array<i64: 1, 32, 64>}, {transform_indices = @transform_1, window_bounds = array<i64: 1, 32, 64>}, {pipeline_mode = #tpu.pipeline_mode<synchronous>, transform_indices = @transform_2, window_bounds = array<i64: 64, 64>}, {pipeline_mode = #tpu.pipeline_mode<synchronous>, transform_indices = @transform_3, window_bounds = array<i64: 1, 64>}, {pipeline_mode = #tpu.pipeline_mode<synchronous>, transform_indices = @transform_4, window_bounds = array<i64: 1, 64>}, {pipeline_mode = #tpu.pipeline_mode<synchronous>, transform_indices = @transform_5, window_bounds = array<i64: 1, 64>}, {transform_indices = @transform_6, window_bounds = array<i64: 64, 128>}, {transform_indices = @transform_7, window_bounds = array<i64: 1, 128>}, {transform_indices = @transform_8, window_bounds = array<i64: 128, 64>}, {pipeline_mode = #tpu.pipeline_mode<synchronous>, transform_indices = @transform_9, window_bounds = array<i64: 1, 64>}, {transform_indices = @transform_10, window_bounds = array<i64: 1, 32, 64>}]} {
    %c0_i32 = arith.constant 0 : i32
    %0 = arith.cmpi eq, %arg2, %c0_i32 : i32
    %1 = arith.extui %0 : i1 to i32
    %c0_i32_0 = arith.constant 0 : i32
    %2 = arith.cmpi ne, %1, %c0_i32_0 : i32
    scf.if %2 {
      %c0_18 = arith.constant 0 : index
      %c0_19 = arith.constant 0 : index
      %c0_20 = arith.constant 0 : index
      %32 = vector.load %arg3[%c0_18, %c0_19, %c0_20] : memref<1x32x64xbf16, #tpu.memory_space<vmem>>, vector<1x32x64xbf16>
      %33 = vector.shape_cast %32 : vector<1x32x64xbf16> to vector<32x64xbf16>
      %c0_21 = arith.constant 0 : index
      %c0_22 = arith.constant 0 : index
      %34 = vector.load %arg5[%c0_21, %c0_22] : memref<64x64xbf16, #tpu.memory_space<vmem>>, vector<64x64xbf16>
      %cst_23 = arith.constant dense<0.000000e+00> : vector<32x64xf32>
      %35 = tpu.matmul %33, %34, %cst_23 {dimension_numbers = #tpu.dot_dimension_numbers<[1], [0], [0], [1], [0, 0, 1, 1], [], []>} : vector<32x64xbf16>, vector<64x64xbf16>, vector<32x64xf32> -> vector<32x64xf32>
      %c0_24 = arith.constant 0 : index
      %c0_25 = arith.constant 0 : index
      %36 = vector.load %arg6[%c0_24, %c0_25] : memref<1x64xbf16, #tpu.memory_space<vmem>>, vector<1x64xbf16>
      %37 = arith.extf %36 : vector<1x64xbf16> to vector<1x64xf32>
      %38 = vector.broadcast %37 : vector<1x64xf32> to vector<32x64xf32>
      %39 = arith.addf %35, %38 : vector<32x64xf32>
      %c0_26 = arith.constant 0 : index
      %c0_27 = arith.constant 0 : index
      %c0_28 = arith.constant 0 : index
      %40 = vector.load %arg4[%c0_26, %c0_27, %c0_28] : memref<1x32x64xbf16, #tpu.memory_space<vmem>>, vector<1x32x64xbf16>
      %41 = vector.shape_cast %40 : vector<1x32x64xbf16> to vector<32x64xbf16>
      %42 = arith.extf %41 : vector<32x64xbf16> to vector<32x64xf32>
      %43 = arith.addf %42, %39 : vector<32x64xf32>
      %c0_29 = arith.constant 0 : index
      %c0_30 = arith.constant 0 : index
      %44 = vector.load %arg7[%c0_29, %c0_30] : memref<1x64xbf16, #tpu.memory_space<vmem>>, vector<1x64xbf16>
      %c0_31 = arith.constant 0 : index
      %c0_32 = arith.constant 0 : index
      %45 = vector.load %arg8[%c0_31, %c0_32] : memref<1x64xbf16, #tpu.memory_space<vmem>>, vector<1x64xbf16>
      %cst_33 = arith.constant dense<0.000000e+00> : vector<32xf32>
      %46 = vector.multi_reduction <add>, %43, %cst_33 [1] : vector<32x64xf32> to vector<32xf32>
      %47 = vector.shape_cast %46 : vector<32xf32> to vector<32x1xf32>
      %cst_34 = arith.constant 6.400000e+01 : f32
      %48 = vector.broadcast %cst_34 : f32 to vector<32x1xf32>
      %49 = arith.divf %47, %48 : vector<32x1xf32>
      %50 = vector.broadcast %49 : vector<32x1xf32> to vector<32x64xf32>
      %51 = arith.subf %43, %50 : vector<32x64xf32>
      %52 = arith.mulf %51, %51 : vector<32x64xf32>
      %cst_35 = arith.constant dense<0.000000e+00> : vector<32xf32>
      %53 = vector.multi_reduction <add>, %52, %cst_35 [1] : vector<32x64xf32> to vector<32xf32>
      %54 = vector.shape_cast %53 : vector<32xf32> to vector<32x1xf32>
      %cst_36 = arith.constant 6.400000e+01 : f32
      %55 = vector.broadcast %cst_36 : f32 to vector<32x1xf32>
      %56 = arith.divf %54, %55 : vector<32x1xf32>
      %cst_37 = arith.constant 9.99999974E-6 : f32
      %57 = vector.broadcast %cst_37 : f32 to vector<32x1xf32>
      %58 = arith.addf %56, %57 : vector<32x1xf32>
      %59 = math.rsqrt %58 : vector<32x1xf32>
      %60 = vector.broadcast %49 : vector<32x1xf32> to vector<32x64xf32>
      %61 = arith.subf %43, %60 : vector<32x64xf32>
      %62 = vector.broadcast %59 : vector<32x1xf32> to vector<32x64xf32>
      %63 = arith.mulf %61, %62 : vector<32x64xf32>
      %64 = arith.extf %44 : vector<1x64xbf16> to vector<1x64xf32>
      %65 = vector.broadcast %64 : vector<1x64xf32> to vector<32x64xf32>
      %66 = arith.mulf %63, %65 : vector<32x64xf32>
      %67 = arith.extf %45 : vector<1x64xbf16> to vector<1x64xf32>
      %68 = vector.broadcast %67 : vector<1x64xf32> to vector<32x64xf32>
      %69 = arith.addf %66, %68 : vector<32x64xf32>
      %70 = arith.truncf %69 : vector<32x64xf32> to vector<32x64xbf16>
      %c0_38 = arith.constant 0 : index
      %c0_39 = arith.constant 0 : index
      %71 = vector.load %arg14[%c0_38, %c0_39] : memref<32x64xbf16, #tpu.memory_space<vmem>>, vector<32x64xbf16>
      tpu.vector_store %arg14[%c0_38, %c0_39], %70 {strides = array<i32>} : memref<32x64xbf16, #tpu.memory_space<vmem>>, vector<32x64xbf16>,
      %c0_40 = arith.constant 0 : index
      %c0_41 = arith.constant 0 : index
      %72 = vector.load %arg12[%c0_40, %c0_41] : memref<1x64xbf16, #tpu.memory_space<vmem>>, vector<1x64xbf16>
      %73 = arith.extf %72 : vector<1x64xbf16> to vector<1x64xf32>
      %74 = vector.broadcast %73 : vector<1x64xf32> to vector<32x64xf32>
      %75 = arith.addf %43, %74 : vector<32x64xf32>
      %c0_42 = arith.constant 0 : index
      %c0_43 = arith.constant 0 : index
      %76 = vector.load %arg15[%c0_42, %c0_43] : memref<32x64xf32, #tpu.memory_space<vmem>>, vector<32x64xf32>
      tpu.vector_store %arg15[%c0_42, %c0_43], %75 {strides = array<i32>} : memref<32x64xf32, #tpu.memory_space<vmem>>, vector<32x64xf32>,
    } else {
    }
    %c0 = arith.constant 0 : index
    %c0_1 = arith.constant 0 : index
    %3 = vector.load %arg14[%c0, %c0_1] : memref<32x64xbf16, #tpu.memory_space<vmem>>, vector<32x64xbf16>
    %c0_2 = arith.constant 0 : index
    %c0_3 = arith.constant 0 : index
    %4 = vector.load %arg9[%c0_2, %c0_3] : memref<64x128xbf16, #tpu.memory_space<vmem>>, vector<64x128xbf16>
    %cst = arith.constant dense<0.000000e+00> : vector<32x128xf32>
    %5 = tpu.matmul %3, %4, %cst {dimension_numbers = #tpu.dot_dimension_numbers<[1], [0], [0], [1], [0, 0, 1, 1], [], []>} : vector<32x64xbf16>, vector<64x128xbf16>, vector<32x128xf32> -> vector<32x128xf32>
    %c0_4 = arith.constant 0 : index
    %c0_5 = arith.constant 0 : index
    %6 = vector.load %arg10[%c0_4, %c0_5] : memref<1x128xbf16, #tpu.memory_space<vmem>>, vector<1x128xbf16>
    %7 = arith.extf %6 : vector<1x128xbf16> to vector<1x128xf32>
    %8 = vector.broadcast %7 : vector<1x128xf32> to vector<32x128xf32>
    %9 = arith.addf %5, %8 : vector<32x128xf32>
    %cst_6 = arith.constant 5.000000e-01 : f32
    %10 = vector.broadcast %cst_6 : f32 to vector<32x128xf32>
    %11 = arith.mulf %10, %9 : vector<32x128xf32>
    %cst_7 = arith.constant 4.471500e-02 : f32
    %12 = vector.broadcast %cst_7 : f32 to vector<32x128xf32>
    %13 = arith.mulf %12, %9 : vector<32x128xf32>
    %14 = arith.mulf %13, %9 : vector<32x128xf32>
    %15 = arith.mulf %14, %9 : vector<32x128xf32>
    %16 = arith.addf %9, %15 : vector<32x128xf32>
    %cst_8 = arith.constant 0.797884583 : f32
    %17 = vector.broadcast %cst_8 : f32 to vector<32x128xf32>
    %18 = arith.mulf %17, %16 : vector<32x128xf32>
    %19 = math.tanh %18 : vector<32x128xf32>
    %cst_9 = arith.constant 1.000000e+00 : f32
    %20 = vector.broadcast %cst_9 : f32 to vector<32x128xf32>
    %21 = arith.addf %20, %19 : vector<32x128xf32>
    %22 = arith.mulf %11, %21 : vector<32x128xf32>
    %c0_10 = arith.constant 0 : index
    %c0_11 = arith.constant 0 : index
    %23 = vector.load %arg15[%c0_10, %c0_11] : memref<32x64xf32, #tpu.memory_space<vmem>>, vector<32x64xf32>
    %24 = arith.truncf %22 : vector<32x128xf32> to vector<32x128xbf16>
    %c0_12 = arith.constant 0 : index
    %c0_13 = arith.constant 0 : index
    %25 = vector.load %arg11[%c0_12, %c0_13] : memref<128x64xbf16, #tpu.memory_space<vmem>>, vector<128x64xbf16>
    %cst_14 = arith.constant dense<0.000000e+00> : vector<32x64xf32>
    %26 = tpu.matmul %24, %25, %cst_14 {dimension_numbers = #tpu.dot_dimension_numbers<[1], [0], [0], [1], [0, 0, 1, 1], [], []>} : vector<32x128xbf16>, vector<128x64xbf16>, vector<32x64xf32> -> vector<32x64xf32>
    %27 = arith.addf %23, %26 : vector<32x64xf32>
    %c0_15 = arith.constant 0 : index
    %c0_16 = arith.constant 0 : index
    %28 = vector.load %arg15[%c0_15, %c0_16] : memref<32x64xf32, #tpu.memory_space<vmem>>, vector<32x64xf32>
    tpu.vector_store %arg15[%c0_15, %c0_16], %27 {strides = array<i32>} : memref<32x64xf32, #tpu.memory_space<vmem>>, vector<32x64xf32>,
    %c1_i32 = arith.constant 1 : i32
    %29 = arith.cmpi eq, %arg2, %c1_i32 : i32
    %30 = arith.extui %29 : i1 to i32
    %c0_i32_17 = arith.constant 0 : i32
    %31 = arith.cmpi ne, %30, %c0_i32_17 : i32
    scf.if %31 {
      %c0_18 = arith.constant 0 : index
      %c0_19 = arith.constant 0 : index
      %32 = vector.load %arg15[%c0_18, %c0_19] : memref<32x64xf32, #tpu.memory_space<vmem>>, vector<32x64xf32>
      %33 = arith.truncf %32 : vector<32x64xf32> to vector<32x64xbf16>
      %c0_20 = arith.constant 0 : index
      %c0_21 = arith.constant 0 : index
      %c0_22 = arith.constant 0 : index
      %34 = vector.load %arg13[%c0_20, %c0_21, %c0_22] : memref<1x32x64xbf16, #tpu.memory_space<vmem>>, vector<1x32x64xbf16>
      %35 = vector.shape_cast %34 : vector<1x32x64xbf16> to vector<32x64xbf16>
      %36 = vector.shape_cast %33 : vector<32x64xbf16> to vector<1x32x64xbf16>
      tpu.vector_store %arg13[%c0_20, %c0_21, %c0_22], %36 {strides = array<i32>} : memref<1x32x64xbf16, #tpu.memory_space<vmem>>, vector<1x32x64xbf16>,
    } else {
    }
    return
  }
  func.func @transform_0(%arg0: i32, %arg1: i32, %arg2: i32) -> (i32, i32, i32) {
    %c0_i32 = arith.constant 0 : i32
    %c0_i32_0 = arith.constant 0 : i32
    return %arg0, %arg1, %c0_i32 : i32, i32, i32
  }
  func.func @transform_1(%arg0: i32, %arg1: i32, %arg2: i32) -> (i32, i32, i32) {
    %c0_i32 = arith.constant 0 : i32
    %c0_i32_0 = arith.constant 0 : i32
    return %arg0, %arg1, %c0_i32 : i32, i32, i32
  }
  func.func @transform_2(%arg0: i32, %arg1: i32, %arg2: i32) -> (i32, i32) {
    %c0_i32 = arith.constant 0 : i32
    %c0_i32_0 = arith.constant 0 : i32
    %c0_i32_1 = arith.constant 0 : i32
    return %c0_i32, %c0_i32_0 : i32, i32
  }
  func.func @transform_3(%arg0: i32, %arg1: i32, %arg2: i32) -> (i32, i32) {
    %c0_i32 = arith.constant 0 : i32
    %c0_i32_0 = arith.constant 0 : i32
    %c0_i32_1 = arith.constant 0 : i32
    return %c0_i32, %c0_i32_0 : i32, i32
  }
  func.func @transform_4(%arg0: i32, %arg1: i32, %arg2: i32) -> (i32, i32) {
    %c0_i32 = arith.constant 0 : i32
    %c0_i32_0 = arith.constant 0 : i32
    %c0_i32_1 = arith.constant 0 : i32
    return %c0_i32, %c0_i32_0 : i32, i32
  }
  func.func @transform_5(%arg0: i32, %arg1: i32, %arg2: i32) -> (i32, i32) {
    %c0_i32 = arith.constant 0 : i32
    %c0_i32_0 = arith.constant 0 : i32
    %c0_i32_1 = arith.constant 0 : i32
    return %c0_i32, %c0_i32_0 : i32, i32
  }
  func.func @transform_6(%arg0: i32, %arg1: i32, %arg2: i32) -> (i32, i32) {
    %c0_i32 = arith.constant 0 : i32
    %c0_i32_0 = arith.constant 0 : i32
    return %c0_i32, %arg2 : i32, i32
  }
  func.func @transform_7(%arg0: i32, %arg1: i32, %arg2: i32) -> (i32, i32) {
    %c0_i32 = arith.constant 0 : i32
    %c0_i32_0 = arith.constant 0 : i32
    return %c0_i32, %arg2 : i32, i32
  }
  func.func @transform_8(%arg0: i32, %arg1: i32, %arg2: i32) -> (i32, i32) {
    %c0_i32 = arith.constant 0 : i32
    %c0_i32_0 = arith.constant 0 : i32
    return %arg2, %c0_i32 : i32, i32
  }
  func.func @transform_9(%arg0: i32, %arg1: i32, %arg2: i32) -> (i32, i32) {
    %c0_i32 = arith.constant 0 : i32
    %c0_i32_0 = arith.constant 0 : i32
    %c0_i32_1 = arith.constant 0 : i32
    return %c0_i32, %c0_i32_0 : i32, i32
  }
  func.func @transform_10(%arg0: i32, %arg1: i32, %arg2: i32) -> (i32, i32, i32) {
    %c0_i32 = arith.constant 0 : i32
    %c0_i32_0 = arith.constant 0 : i32
    return %arg0, %arg1, %c0_i32 : i32, i32, i32
  }
}

module attributes {stable_mosaic.version = 11 : i64} {
  func.func @_final_head_kernel(%arg0: i32, %arg1: i32, %arg2: i32, %arg3: memref<1x32x64xbf16, #tpu.memory_space<vmem>>, %arg4: memref<1x64xbf16, #tpu.memory_space<vmem>>, %arg5: memref<1x64xbf16, #tpu.memory_space<vmem>>, %arg6: memref<64x128xbf16, #tpu.memory_space<vmem>>, %arg7: memref<1x32x128xf32, #tpu.memory_space<vmem>>) attributes {dimension_semantics = [#tpu.dimension_semantics<parallel>, #tpu.dimension_semantics<parallel>, #tpu.dimension_semantics<parallel>], iteration_bounds = array<i64: 2, 2, 4>, scalar_prefetch = 0 : i64, scratch_operands = 0 : i64, tpu.core_type = #tpu.core_type<tc>, window_params = [{transform_indices = @transform_0, window_bounds = array<i64: 1, 32, 64>}, {pipeline_mode = #tpu.pipeline_mode<synchronous>, transform_indices = @transform_1, window_bounds = array<i64: 1, 64>}, {pipeline_mode = #tpu.pipeline_mode<synchronous>, transform_indices = @transform_2, window_bounds = array<i64: 1, 64>}, {transform_indices = @transform_3, window_bounds = array<i64: 64, 128>}, {transform_indices = @transform_4, window_bounds = array<i64: 1, 32, 128>}]} {
    %c0 = arith.constant 0 : index
    %c0_0 = arith.constant 0 : index
    %c0_1 = arith.constant 0 : index
    %0 = vector.load %arg3[%c0, %c0_0, %c0_1] : memref<1x32x64xbf16, #tpu.memory_space<vmem>>, vector<1x32x64xbf16>
    %1 = vector.shape_cast %0 : vector<1x32x64xbf16> to vector<32x64xbf16>
    %2 = arith.extf %1 : vector<32x64xbf16> to vector<32x64xf32>
    %c0_2 = arith.constant 0 : index
    %c0_3 = arith.constant 0 : index
    %3 = vector.load %arg4[%c0_2, %c0_3] : memref<1x64xbf16, #tpu.memory_space<vmem>>, vector<1x64xbf16>
    %c0_4 = arith.constant 0 : index
    %c0_5 = arith.constant 0 : index
    %4 = vector.load %arg5[%c0_4, %c0_5] : memref<1x64xbf16, #tpu.memory_space<vmem>>, vector<1x64xbf16>
    %cst = arith.constant dense<0.000000e+00> : vector<32xf32>
    %5 = vector.multi_reduction <add>, %2, %cst [1] : vector<32x64xf32> to vector<32xf32>
    %6 = vector.shape_cast %5 : vector<32xf32> to vector<32x1xf32>
    %cst_6 = arith.constant 6.400000e+01 : f32
    %7 = vector.broadcast %cst_6 : f32 to vector<32x1xf32>
    %8 = arith.divf %6, %7 : vector<32x1xf32>
    %9 = vector.broadcast %8 : vector<32x1xf32> to vector<32x64xf32>
    %10 = arith.subf %2, %9 : vector<32x64xf32>
    %11 = arith.mulf %10, %10 : vector<32x64xf32>
    %cst_7 = arith.constant dense<0.000000e+00> : vector<32xf32>
    %12 = vector.multi_reduction <add>, %11, %cst_7 [1] : vector<32x64xf32> to vector<32xf32>
    %13 = vector.shape_cast %12 : vector<32xf32> to vector<32x1xf32>
    %cst_8 = arith.constant 6.400000e+01 : f32
    %14 = vector.broadcast %cst_8 : f32 to vector<32x1xf32>
    %15 = arith.divf %13, %14 : vector<32x1xf32>
    %cst_9 = arith.constant 9.99999974E-6 : f32
    %16 = vector.broadcast %cst_9 : f32 to vector<32x1xf32>
    %17 = arith.addf %15, %16 : vector<32x1xf32>
    %18 = math.rsqrt %17 : vector<32x1xf32>
    %19 = vector.broadcast %8 : vector<32x1xf32> to vector<32x64xf32>
    %20 = arith.subf %2, %19 : vector<32x64xf32>
    %21 = vector.broadcast %18 : vector<32x1xf32> to vector<32x64xf32>
    %22 = arith.mulf %20, %21 : vector<32x64xf32>
    %23 = arith.extf %3 : vector<1x64xbf16> to vector<1x64xf32>
    %24 = vector.broadcast %23 : vector<1x64xf32> to vector<32x64xf32>
    %25 = arith.mulf %22, %24 : vector<32x64xf32>
    %26 = arith.extf %4 : vector<1x64xbf16> to vector<1x64xf32>
    %27 = vector.broadcast %26 : vector<1x64xf32> to vector<32x64xf32>
    %28 = arith.addf %25, %27 : vector<32x64xf32>
    %29 = arith.truncf %28 : vector<32x64xf32> to vector<32x64xbf16>
    %c0_10 = arith.constant 0 : index
    %c0_11 = arith.constant 0 : index
    %30 = vector.load %arg6[%c0_10, %c0_11] : memref<64x128xbf16, #tpu.memory_space<vmem>>, vector<64x128xbf16>
    %cst_12 = arith.constant dense<0.000000e+00> : vector<32x128xf32>
    %31 = tpu.matmul %29, %30, %cst_12 {dimension_numbers = #tpu.dot_dimension_numbers<[1], [0], [0], [1], [0, 0, 1, 1], [], []>} : vector<32x64xbf16>, vector<64x128xbf16>, vector<32x128xf32> -> vector<32x128xf32>
    %c0_13 = arith.constant 0 : index
    %c0_14 = arith.constant 0 : index
    %c0_15 = arith.constant 0 : index
    %32 = vector.load %arg7[%c0_13, %c0_14, %c0_15] : memref<1x32x128xf32, #tpu.memory_space<vmem>>, vector<1x32x128xf32>
    %33 = vector.shape_cast %32 : vector<1x32x128xf32> to vector<32x128xf32>
    %34 = vector.shape_cast %31 : vector<32x128xf32> to vector<1x32x128xf32>
    tpu.vector_store %arg7[%c0_13, %c0_14, %c0_15], %34 {strides = array<i32>} : memref<1x32x128xf32, #tpu.memory_space<vmem>>, vector<1x32x128xf32>,
    return
  }
  func.func @transform_0(%arg0: i32, %arg1: i32, %arg2: i32) -> (i32, i32, i32) {
    %c0_i32 = arith.constant 0 : i32
    %c0_i32_0 = arith.constant 0 : i32
    return %arg0, %arg1, %c0_i32 : i32, i32, i32
  }
  func.func @transform_1(%arg0: i32, %arg1: i32, %arg2: i32) -> (i32, i32) {
    %c0_i32 = arith.constant 0 : i32
    %c0_i32_0 = arith.constant 0 : i32
    %c0_i32_1 = arith.constant 0 : i32
    return %c0_i32, %c0_i32_0 : i32, i32
  }
  func.func @transform_2(%arg0: i32, %arg1: i32, %arg2: i32) -> (i32, i32) {
    %c0_i32 = arith.constant 0 : i32
    %c0_i32_0 = arith.constant 0 : i32
    %c0_i32_1 = arith.constant 0 : i32
    return %c0_i32, %c0_i32_0 : i32, i32
  }
  func.func @transform_3(%arg0: i32, %arg1: i32, %arg2: i32) -> (i32, i32) {
    %c0_i32 = arith.constant 0 : i32
    %c0_i32_0 = arith.constant 0 : i32
    return %c0_i32, %arg2 : i32, i32
  }
  func.func @transform_4(%arg0: i32, %arg1: i32, %arg2: i32) -> (i32, i32, i32) {
    %c0_i32 = arith.constant 0 : i32
    return %arg0, %arg1, %arg2 : i32, i32, i32
  }
}

</mosaic_0001>

<llo_original>
// kernel: gpt_forward.7
$region0: #{gpt_forward.7}
  #allocation0 [shape = 'u32[]', space=smem, size = 0x4, offset = 0x4, fixed_abs, tag = 'smem constant byte address 0x4 - core index']
  #allocation1 [shape = 'u32[144,128]{1,0:T(1,128)}', space=vmem, size = 0x12000, scoped, tag = 'internal scratch']
  %s0 = inlined_call_operand.vmem [shape: bf16[2,64,64], index: 0, kind: input, shape index: {}]
  %s1 = inlined_call_operand.vmem [shape: bf16[1,64], index: 1, kind: input, shape index: {}]
  %s2 = inlined_call_operand.vmem [shape: bf16[1,64], index: 2, kind: input, shape index: {}]
  %s3 = inlined_call_operand.vmem [shape: bf16[64,64], index: 3, kind: input, shape index: {}]
  %s4 = inlined_call_operand.vmem [shape: bf16[64,64], index: 4, kind: input, shape index: {}]
  %s5 = inlined_call_operand.vmem [shape: bf16[64,64], index: 5, kind: input, shape index: {}]
  %s6 = inlined_call_operand.vmem [shape: bf16[2,64,64], index: 6, kind: output, shape index: {0}]
  %s7 = inlined_call_operand.vmem [shape: bf16[2,64,64], index: 7, kind: output, shape index: {1}]
  %s8 = inlined_call_operand.vmem [shape: bf16[2,64,64], index: 8, kind: output, shape index: {2}]
  %9 = xla_tuple %s6, %s7, %s8
  %s10 = sld [smem:[#allocation0]]
  $region73: #{gpt_forward.7} parent=0
    _
  %s12 = ssub.s32 1, %s10
  %s13 = scalar_select 0, %s12, %s10
  loop: start=0, step=1, limit=6
  $region2: #{gpt_forward.7} parent=0 // loop_pre_header
    _
  $region3: #{gpt_forward.7} parent=0 // loop_header
    %s15 = sphi 0, %s19
    %p16 = scmp.ge.s32.totalorder %s15, 6
    %s22 = sphi 0, %s34
    %s23 = sphi 0, %s30
    %s24 = sphi 0, %s22
    %s25 = sphi 0, %s23
    %s26 = sphi 0, %s24
    %s27 = sphi 0, %s25
    %s39 = sphi 0, %s41
    %s42 = sphi 0, %s39
    %s43 = sphi 0, %s42
    %s59 = sphi 0, %s43
    %s63 = sphi 0, %s63
    %s65 = sphi 0, %s63
    %s66 = sphi 0, %s65
    %s80 = sphi 0, %s66
    %s84 = sphi 0, %s84
    %s86 = sphi 0, %s84
    %s87 = sphi 0, %s86
    %s101 = sphi 0, %s87
    %s105 = sphi 0, %s105
    %s107 = sphi 0, %s105
    %s108 = sphi 0, %s107
    %s122 = sphi 0, %s108
    %s126 = sphi 0, %s126
    %s128 = sphi 0, %s126
    %s129 = sphi 0, %s128
    %s143 = sphi 0, %s129
    %s147 = sphi 0, %s147
    %s149 = sphi 0, %s147
    %s150 = sphi 0, %s149
    %s164 = sphi 0, %s150
    %s172 = sphi 0, %s174
    %s175 = sphi 0, %s172
    %s176 = sphi 0, %s175
    %s192 = sphi 0, %s176
    %s200 = sphi 0, %s202
    %s203 = sphi 0, %s200
    %s204 = sphi 0, %s203
    %s220 = sphi 0, %s204
    %s228 = sphi 0, %s230
    %s231 = sphi 0, %s228
    %s232 = sphi 0, %s231
    %s248 = sphi 0, %s232
  $region4: #{gpt_forward.7} parent=0 // loop_header_branch
    %18 = sbr.rel (%p16) target = $region8
  $region5: #{gpt_forward.7} parent=0 // loop_body
    %s20 = ssub.s32 %s15, 1
    %s21 = ssub.s32 %s15, 2
    %s28 = sadd.s32 1, %s23
    %p29 = scmp.ge.s32.totalorder %s28, 2
    %s30 = scalar_select %p29, 0, %s28
    %s31 = sadd.s32 1, %s22
    %s32 = scalar_select %p29, %s31, %s22
    %p33 = scmp.ge.s32.totalorder %s32, 2
    %s34 = scalar_select %p33, 0, %s32
    %s35 = ssub.s32 %s22, %s34
    %s36 = ssub.s32 %s23, %s30
    %s37 = sor.u32 %s35, %s36
    %p38 = scmp.eq.s32.totalorder %s37, 0
    %s40 = sadd.s32 %s39, 1
    %s41 = scalar_select %p38, %s39, %s40
    %p44 = pneg %p38
    %p45 = scmp.eq.s32.totalorder %s15, 3
    %p46 = por %p44, %p45
    %p47 = scmp.ne.s32.totalorder %s39, %s42
    %p48 = scmp.eq.s32.totalorder %s15, 0
    %p49 = por %p47, %p48
    %p50 = scmp.ne.s32.totalorder %s39, %s42
    %p51 = scmp.eq.s32.totalorder %s20, 3
    %p52 = por %p50, %p51
    %p53 = scmp.ne.s32.totalorder %s42, %s43
    %p54 = scmp.eq.s32.totalorder %s20, 0
    %p55 = por %p53, %p54
    %p56 = scmp.ne.s32.totalorder %s42, %s43
    %p57 = scmp.eq.s32.totalorder %s21, 3
    %p58 = por %p56, %p57
    %p60 = scmp.ne.s32.totalorder %s43, %s59
    %p61 = scmp.eq.s32.totalorder %s21, 0
    %p62 = por %p60, %p61
    %s64 = sadd.s32 %s63, 1
    %p67 = scmp.eq.s32.totalorder %s15, 3
    %p68 = scmp.ne.s32.totalorder %s63, %s65
    %p69 = scmp.eq.s32.totalorder %s15, 0
    %p70 = por %p68, %p69
    %p71 = scmp.ne.s32.totalorder %s63, %s65
    %p72 = scmp.eq.s32.totalorder %s20, 3
    %p73 = por %p71, %p72
    %p74 = scmp.ne.s32.totalorder %s65, %s66
    %p75 = scmp.eq.s32.totalorder %s20, 0
    %p76 = por %p74, %p75
    %p77 = scmp.ne.s32.totalorder %s65, %s66
    %p78 = scmp.eq.s32.totalorder %s21, 3
    %p79 = por %p77, %p78
    %p81 = scmp.ne.s32.totalorder %s66, %s80
    %p82 = scmp.eq.s32.totalorder %s21, 0
    %p83 = por %p81, %p82
    %s85 = sadd.s32 %s84, 1
    %p88 = scmp.eq.s32.totalorder %s15, 3
    %p89 = scmp.ne.s32.totalorder %s84, %s86
    %p90 = scmp.eq.s32.totalorder %s15, 0
    %p91 = por %p89, %p90
    %p92 = scmp.ne.s32.totalorder %s84, %s86
    %p93 = scmp.eq.s32.totalorder %s20, 3
    %p94 = por %p92, %p93
    %p95 = scmp.ne.s32.totalorder %s86, %s87
    %p96 = scmp.eq.s32.totalorder %s20, 0
    %p97 = por %p95, %p96
    %p98 = scmp.ne.s32.totalorder %s86, %s87
    %p99 = scmp.eq.s32.totalorder %s21, 3
    %p100 = por %p98, %p99
    %p102 = scmp.ne.s32.totalorder %s87, %s101
    %p103 = scmp.eq.s32.totalorder %s21, 0
    %p104 = por %p102, %p103
    %s106 = sadd.s32 %s105, 1
    %p109 = scmp.eq.s32.totalorder %s15, 3
    %p110 = scmp.ne.s32.totalorder %s105, %s107
    %p111 = scmp.eq.s32.totalorder %s15, 0
    %p112 = por %p110, %p111
    %p113 = scmp.ne.s32.totalorder %s105, %s107
    %p114 = scmp.eq.s32.totalorder %s20, 3
    %p115 = por %p113, %p114
    %p116 = scmp.ne.s32.totalorder %s107, %s108
    %p117 = scmp.eq.s32.totalorder %s20, 0
    %p118 = por %p116, %p117
    %p119 = scmp.ne.s32.totalorder %s107, %s108
    %p120 = scmp.eq.s32.totalorder %s21, 3
    %p121 = por %p119, %p120
    %p123 = scmp.ne.s32.totalorder %s108, %s122
    %p124 = scmp.eq.s32.totalorder %s21, 0
    %p125 = por %p123, %p124
    %s127 = sadd.s32 %s126, 1
    %p130 = scmp.eq.s32.totalorder %s15, 3
    %p131 = scmp.ne.s32.totalorder %s126, %s128
    %p132 = scmp.eq.s32.totalorder %s15, 0
    %p133 = por %p131, %p132
    %p134 = scmp.ne.s32.totalorder %s126, %s128
    %p135 = scmp.eq.s32.totalorder %s20, 3
    %p136 = por %p134, %p135
    %p137 = scmp.ne.s32.totalorder %s128, %s129
    %p138 = scmp.eq.s32.totalorder %s20, 0
    %p139 = por %p137, %p138
    %p140 = scmp.ne.s32.totalorder %s128, %s129
    %p141 = scmp.eq.s32.totalorder %s21, 3
    %p142 = por %p140, %p141
    %p144 = scmp.ne.s32.totalorder %s129, %s143
    %p145 = scmp.eq.s32.totalorder %s21, 0
    %p146 = por %p144, %p145
    %s148 = sadd.s32 %s147, 1
    %p151 = scmp.eq.s32.totalorder %s15, 3
    %p152 = scmp.ne.s32.totalorder %s147, %s149
    %p153 = scmp.eq.s32.totalorder %s15, 0
    %p154 = por %p152, %p153
    %p155 = scmp.ne.s32.totalorder %s147, %s149
    %p156 = scmp.eq.s32.totalorder %s20, 3
    %p157 = por %p155, %p156
    %p158 = scmp.ne.s32.totalorder %s149, %s150
    %p159 = scmp.eq.s32.totalorder %s20, 0
    %p160 = por %p158, %p159
    %p161 = scmp.ne.s32.totalorder %s149, %s150
    %p162 = scmp.eq.s32.totalorder %s21, 3
    %p163 = por %p161, %p162
    %p165 = scmp.ne.s32.totalorder %s150, %s164
    %p166 = scmp.eq.s32.totalorder %s21, 0
    %p167 = por %p165, %p166
    %s168 = ssub.s32 %s22, %s34
    %s169 = ssub.s32 %s23, %s30
    %s170 = sor.u32 %s168, %s169
    %p171 = scmp.eq.s32.totalorder %s170, 0
    %s173 = sadd.s32 %s172, 1
    %s174 = scalar_select %p171, %s172, %s173
    %p177 = pneg %p171
    %p178 = scmp.eq.s32.totalorder %s15, 3
    %p179 = por %p177, %p178
    %p180 = scmp.ne.s32.totalorder %s172, %s175
    %p181 = scmp.eq.s32.totalorder %s15, 0
    %p182 = por %p180, %p181
    %p183 = scmp.ne.s32.totalorder %s172, %s175
    %p184 = scmp.eq.s32.totalorder %s20, 3
    %p185 = por %p183, %p184
    %p186 = scmp.ne.s32.totalorder %s175, %s176
    %p187 = scmp.eq.s32.totalorder %s20, 0
    %p188 = por %p186, %p187
    %p189 = scmp.ne.s32.totalorder %s175, %s176
    %p190 = scmp.eq.s32.totalorder %s21, 3
    %p191 = por %p189, %p190
    %p193 = scmp.ne.s32.totalorder %s176, %s192
    %p194 = scmp.eq.s32.totalorder %s21, 0
    %p195 = por %p193, %p194
    %s196 = ssub.s32 %s22, %s34
    %s197 = ssub.s32 %s23, %s30
    %s198 = sor.u32 %s196, %s197
    %p199 = scmp.eq.s32.totalorder %s198, 0
    %s201 = sadd.s32 %s200, 1
    %s202 = scalar_select %p199, %s200, %s201
    %p205 = pneg %p199
    %p206 = scmp.eq.s32.totalorder %s15, 3
    %p207 = por %p205, %p206
    %p208 = scmp.ne.s32.totalorder %s200, %s203
    %p209 = scmp.eq.s32.totalorder %s15, 0
    %p210 = por %p208, %p209
    %p211 = scmp.ne.s32.totalorder %s200, %s203
    %p212 = scmp.eq.s32.totalorder %s20, 3
    %p213 = por %p211, %p212
    %p214 = scmp.ne.s32.totalorder %s203, %s204
    %p215 = scmp.eq.s32.totalorder %s20, 0
    %p216 = por %p214, %p215
    %p217 = scmp.ne.s32.totalorder %s203, %s204
    %p218 = scmp.eq.s32.totalorder %s21, 3
    %p219 = por %p217, %p218
    %p221 = scmp.ne.s32.totalorder %s204, %s220
    %p222 = scmp.eq.s32.totalorder %s21, 0
    %p223 = por %p221, %p222
    %s224 = ssub.s32 %s22, %s34
    %s225 = ssub.s32 %s23, %s30
    %s226 = sor.u32 %s224, %s225
    %p227 = scmp.eq.s32.totalorder %s226, 0
    %s229 = sadd.s32 %s228, 1
    %s230 = scalar_select %p227, %s228, %s229
    %p233 = pneg %p227
    %p234 = scmp.eq.s32.totalorder %s15, 3
    %p235 = por %p233, %p234
    %p236 = scmp.ne.s32.totalorder %s228, %s231
    %p237 = scmp.eq.s32.totalorder %s15, 0
    %p238 = por %p236, %p237
    %p239 = scmp.ne.s32.totalorder %s228, %s231
    %p240 = scmp.eq.s32.totalorder %s20, 3
    %p241 = por %p239, %p240
    %p242 = scmp.ne.s32.totalorder %s231, %s232
    %p243 = scmp.eq.s32.totalorder %s20, 0
    %p244 = por %p242, %p243
    %p245 = scmp.ne.s32.totalorder %s231, %s232
    %p246 = scmp.eq.s32.totalorder %s21, 3
    %p247 = por %p245, %p246
    %p249 = scmp.ne.s32.totalorder %s232, %s248
    %p250 = scmp.eq.s32.totalorder %s21, 0
    %p251 = por %p249, %p250
    %p252 = scmp.le.s32.totalorder 1, %s15
    %p253 = scmp.lt.s32.totalorder %s15, 5
    %p254 = pnand %p252, %p253
    %p255 = pneg %p254
    // Predicated region
    $region9: #{gpt_forward.7} parent=5 // pred_check
      _
    $region10: #{gpt_forward.7} parent=5 // pred_check_branch
      %257 = sbr.rel (%p254) target = $region12
    $region11: #{gpt_forward.7} parent=5 // pred_region
      %s258 = ssub.s32 %s15, 1
      // Predicated region
      $region13: #{gpt_forward.7} parent=11 // pred_check
        %p259 = pneg %p76
      $region14: #{gpt_forward.7} parent=11 // pred_check_branch
        %261 = sbr.rel (%p259) target = $region16
      $region15: #{gpt_forward.7} parent=11 // pred_region
        _
      $region16: #{gpt_forward.7} parent=11 // pred_fallthru
        _
      // Predicated region
      $region17: #{gpt_forward.7} parent=11 // pred_check
        %p262 = pneg %p97
      $region18: #{gpt_forward.7} parent=11 // pred_check_branch
        %264 = sbr.rel (%p262) target = $region20
      $region19: #{gpt_forward.7} parent=11 // pred_region
        _
      $region20: #{gpt_forward.7} parent=11 // pred_fallthru
        _
      // Predicated region
      $region21: #{gpt_forward.7} parent=11 // pred_check
        %p265 = pneg %p118
      $region22: #{gpt_forward.7} parent=11 // pred_check_branch
        %267 = sbr.rel (%p265) target = $region24
      $region23: #{gpt_forward.7} parent=11 // pred_region
        _
      $region24: #{gpt_forward.7} parent=11 // pred_fallthru
        _
      // Predicated region
      $region25: #{gpt_forward.7} parent=11 // pred_check
        %p268 = pneg %p139
      $region26: #{gpt_forward.7} parent=11 // pred_check_branch
        %270 = sbr.rel (%p268) target = $region28
      $region27: #{gpt_forward.7} parent=11 // pred_region
        _
      $region28: #{gpt_forward.7} parent=11 // pred_fallthru
        _
      // Predicated region
      $region29: #{gpt_forward.7} parent=11 // pred_check
        %p271 = pneg %p160
      $region30: #{gpt_forward.7} parent=11 // pred_check_branch
        %273 = sbr.rel (%p271) target = $region32
      $region31: #{gpt_forward.7} parent=11 // pred_region
        _
      $region32: #{gpt_forward.7} parent=11 // pred_fallthru
        _
    $region12: #{gpt_forward.7} parent=5 // pred_fallthru
      _
    %p274 = scmp.lt.s32.totalorder %s15, 4
    // Predicated region
    $region33: #{gpt_forward.7} parent=5 // pred_check
      %p275 = pneg %p274
    $region34: #{gpt_forward.7} parent=5 // pred_check_branch
      %277 = sbr.rel (%p275) target = $region36
    $region35: #{gpt_forward.7} parent=5 // pred_region
      // Predicated region
      $region37: #{gpt_forward.7} parent=35 // pred_check
        %p278 = pneg %p49
      $region38: #{gpt_forward.7} parent=35 // pred_check_branch
        %280 = sbr.rel (%p278) target = $region40
      $region39: #{gpt_forward.7} parent=35 // pred_region
        %s281 = smul.u32 4, %s23
        %p282 = scmp.lt.s32.totalorder %s22, 1
        %s283 = scalar_select %p282, %s22, 1
        %p284 = scmp.lt.s32.totalorder %s281, 7
        %s285 = scalar_select %p284, %s281, 7
        %s286 = smul.addr %s283, 8
        %s287 = sadd.s32 %s285, %s286
        %s288 = smul.addr %s287, 4
        %s289 = scalar_lea.vmem %s0, %s288
        %s290 = smul.u32 4, %s23
      $region40: #{gpt_forward.7} parent=35 // pred_fallthru
        _
    $region36: #{gpt_forward.7} parent=5 // pred_fallthru
      _
    %p291 = scmp.le.s32.totalorder 1, %s15
    %p292 = scmp.lt.s32.totalorder %s15, 5
    %p293 = pnand %p291, %p292
    %p294 = pneg %p293
    // Predicated region
    $region41: #{gpt_forward.7} parent=5 // pred_check
      _
    $region42: #{gpt_forward.7} parent=5 // pred_check_branch
      %296 = sbr.rel (%p293) target = $region44
    $region43: #{gpt_forward.7} parent=5 // pred_region
      %s297 = ssub.s32 %s15, 1
      %s298 = smul.u32 4, %s25
      %p299 = scmp.lt.s32.totalorder %s24, 1
      %s300 = scalar_select %p299, %s24, 1
      %p301 = scmp.lt.s32.totalorder %s298, 7
      %s302 = scalar_select %p301, %s298, 7
      %s303 = smul.addr %s300, 8
      %s304 = sadd.s32 %s302, %s303
      %s305 = smul.addr %s304, 4
      %s306 = scalar_lea.vmem %s0, %s305
      %p307 = pneg %p55
      %p308 = pneg %p52
      %p309 = pneg %p76
      %p310 = pneg %p73
      %p311 = pneg %p97
      %p312 = pneg %p94
      %p313 = pneg %p118
      %p314 = pneg %p115
      %p315 = pneg %p139
      %p316 = pneg %p136
      %p317 = pneg %p160
      %p318 = pneg %p157
      %p319 = pneg %p188
      %p320 = pneg %p185
      %s321 = smul.u32 4, %s25
      %p322 = scmp.lt.s32.totalorder %s24, 1
      %s323 = scalar_select %p322, %s24, 1
      %p324 = scmp.lt.s32.totalorder %s321, 7
      %s325 = scalar_select %p324, %s321, 7
      %s326 = smul.addr %s323, 8
      %s327 = sadd.s32 %s325, %s326
      %s328 = smul.addr %s327, 4
      %s329 = scalar_lea.vmem %s6, %s328
      %p330 = pneg %p216
      %p331 = pneg %p213
      %s332 = smul.u32 4, %s25
      %p333 = scmp.lt.s32.totalorder %s24, 1
      %s334 = scalar_select %p333, %s24, 1
      %p335 = scmp.lt.s32.totalorder %s332, 7
      %s336 = scalar_select %p335, %s332, 7
      %s337 = smul.addr %s334, 8
      %s338 = sadd.s32 %s336, %s337
      %s339 = smul.addr %s338, 4
      %s340 = scalar_lea.vmem %s7, %s339
      %p341 = pneg %p244
      %p342 = pneg %p241
      %s343 = smul.u32 4, %s25
      %p344 = scmp.lt.s32.totalorder %s24, 1
      %s345 = scalar_select %p344, %s24, 1
      %p346 = scmp.lt.s32.totalorder %s343, 7
      %s347 = scalar_select %p346, %s343, 7
      %s348 = smul.addr %s345, 8
      %s349 = sadd.s32 %s347, %s348
      %s350 = smul.addr %s349, 4
      %s351 = scalar_lea.vmem %s8, %s350
      %s352 = smul.u32 4, %s25
      %p353 = scmp.lt.s32.totalorder %s24, 1
      %s354 = scalar_select %p353, %s24, 1
      %p355 = scmp.lt.s32.totalorder %s352, 7
      %s356 = scalar_select %p355, %s352, 7
      %s357 = smul.addr %s354, 8
      %s358 = sadd.s32 %s356, %s357
      %s359 = smul.addr %s358, 4
      %s360 = scalar_lea.vmem %s0, %s359
      %s361 = smul.u32 4, %s25
      %s362 = smul.u32 4, %s25
      %p363 = scmp.lt.s32.totalorder %s24, 1
      %s364 = scalar_select %p363, %s24, 1
      %p365 = scmp.lt.s32.totalorder %s362, 7
      %s366 = scalar_select %p365, %s362, 7
      %s367 = smul.addr %s364, 8
      %s368 = sadd.s32 %s366, %s367
      %s369 = smul.addr %s368, 4
      %s370 = scalar_lea.vmem %s6, %s369
      %s371 = smul.u32 4, %s25
      %s372 = smul.u32 4, %s25
      %p373 = scmp.lt.s32.totalorder %s24, 1
      %s374 = scalar_select %p373, %s24, 1
      %p375 = scmp.lt.s32.totalorder %s372, 7
      %s376 = scalar_select %p375, %s372, 7
      %s377 = smul.addr %s374, 8
      %s378 = sadd.s32 %s376, %s377
      %s379 = smul.addr %s378, 4
      %s380 = scalar_lea.vmem %s7, %s379
      %s381 = smul.u32 4, %s25
      %s382 = smul.u32 4, %s25
      %p383 = scmp.lt.s32.totalorder %s24, 1
      %s384 = scalar_select %p383, %s24, 1
      %p385 = scmp.lt.s32.totalorder %s382, 7
      %s386 = scalar_select %p385, %s382, 7
      %s387 = smul.addr %s384, 8
      %s388 = sadd.s32 %s386, %s387
      %s389 = smul.addr %s388, 4
      %s390 = scalar_lea.vmem %s8, %s389
      %s391 = smul.u32 4, %s25
      %v393 = vld [vmem:[%s360] sm:$0xf]
      %v394 = vld [vmem:[%s360 + $0x4] sm:$0xf]
      %v395 = vld [vmem:[%s360 + $0x8] sm:$0xf]
      %v396 = vld [vmem:[%s360 + $0xc] sm:$0xf]
      %v397 = vunpack.c.l.bf16 %v393
      %v398 = vunpack.c.l.bf16 %v394
      %v399 = vunpack.c.l.bf16 %v395
      %v400 = vunpack.c.l.bf16 %v396
      %v401 = vld [vmem:[%s1] sm:$0x1]
      %v402 = vld [vmem:[%s2] sm:$0x1]
      %vm403 = vcmask 523264
      %v404 = vsel %vm403, %v397, 0.0
      %405 = vadd.xlane.f32.xlu0 %v404
      %v406 = vpop.xlane.xlu0 %405
      %v407 = vsel %vm403, %v398, 0.0
      %408 = vadd.xlane.f32.xlu0 %v407
      %v409 = vpop.xlane.xlu0 %408
      %v410 = vsel %vm403, %v399, 0.0
      %411 = vadd.xlane.f32.xlu0 %v410
      %v412 = vpop.xlane.xlu0 %411
      %v413 = vsel %vm403, %v400, 0.0
      %414 = vadd.xlane.f32.xlu0 %v413
      %v415 = vpop.xlane.xlu0 %414
      %v416 = vrcp.pop 64.0
      %v417 = vmul.f32 %v406, %v416
      %v418 = vmul.f32 %v409, %v416
      %v419 = vmul.f32 %v412, %v416
      %v420 = vmul.f32 %v415, %v416
      %v421 = vsub.f32 %v397, %v417
      %v422 = vsub.f32 %v398, %v418
      %v423 = vsub.f32 %v399, %v419
      %v424 = vsub.f32 %v400, %v420
      %v425 = vmul.f32 %v421, %v421
      %v426 = vmul.f32 %v422, %v422
      %v427 = vmul.f32 %v423, %v423
      %v428 = vmul.f32 %v424, %v424
      %v429 = vsel %vm403, %v425, 0.0
      %430 = vadd.xlane.f32.xlu0 %v429
      %v431 = vpop.xlane.xlu0 %430
      %v432 = vsel %vm403, %v426, 0.0
      %433 = vadd.xlane.f32.xlu0 %v432
      %v434 = vpop.xlane.xlu0 %433
      %v435 = vsel %vm403, %v427, 0.0
      %436 = vadd.xlane.f32.xlu0 %v435
      %v437 = vpop.xlane.xlu0 %436
      %v438 = vsel %vm403, %v428, 0.0
      %439 = vadd.xlane.f32.xlu0 %v438
      %v440 = vpop.xlane.xlu0 %439
      %v441 = vmul.f32 %v431, %v416
      %v442 = vmul.f32 %v434, %v416
      %v443 = vmul.f32 %v437, %v416
      %v444 = vmul.f32 %v440, %v416
      %v445 = vadd.f32 %v441, 1e-05
      %v446 = vadd.f32 %v442, 1e-05
      %v447 = vadd.f32 %v443, 1e-05
      %v448 = vadd.f32 %v444, 1e-05
      %v449 = vrsqrt.pop %v445
      %v450 = vrsqrt.pop %v446
      %v451 = vrsqrt.pop %v447
      %v452 = vrsqrt.pop %v448
      %v453 = vmul.f32 %v421, %v449
      %v454 = vmul.f32 %v422, %v450
      %v455 = vmul.f32 %v423, %v451
      %v456 = vmul.f32 %v424, %v452
      %v457 = vunpack.c.l.bf16 %v401
      %v458 = vlaneseq
      %v459 = vshrl.u32 %v458, 7
      %v460 = vsub.s32 0, %v459
      %v461 = vrot.slane %v457, %v460
      %v462 = vmul.f32 %v453, %v461
      %v463 = vmul.f32 %v454, %v461
      %v464 = vmul.f32 %v455, %v461
      %v465 = vmul.f32 %v456, %v461
      %v466 = vunpack.c.l.bf16 %v402
      %v467 = vlaneseq
      %v468 = vshrl.u32 %v467, 7
      %v469 = vsub.s32 0, %v468
      %v470 = vrot.slane %v466, %v469
      %v471 = vadd.f32 %v462, %v470
      %v472 = vadd.f32 %v463, %v470
      %v473 = vadd.f32 %v464, %v470
      %v474 = vadd.f32 %v465, %v470
      %v475 = vpack.c.bf16 %v472, %v471
      %v476 = vpack.c.bf16 %v474, %v473
      %v477 = vld [vmem:[%s3] sm:$0xf]
      %v478 = vld [vmem:[%s3 + $0x4] sm:$0xf]
      %v479 = vld [vmem:[%s3 + $0x8] sm:$0xf]
      %v480 = vld [vmem:[%s3 + $0xc] sm:$0xf]
      %v481 = vld [vmem:[%s3 + $0x10] sm:$0xf]
      %v482 = vld [vmem:[%s3 + $0x14] sm:$0xf]
      %v483 = vld [vmem:[%s3 + $0x18] sm:$0xf]
      %v484 = vld [vmem:[%s3 + $0x1c] sm:$0xf]
      %v493 = vunpack.c.l.b16 %v477
      %v494 = vunpack.c.l.b16 %v478
      %v495 = vunpack.c.l.b16 %v479
      %v496 = vunpack.c.l.b16 %v480
      %v497 = vunpack.c.l.b16 %v481
      %v498 = vunpack.c.l.b16 %v482
      %v499 = vunpack.c.l.b16 %v483
      %v500 = vunpack.c.l.b16 %v484
      %v501 = vpack.c.b16 %v494, %v493
      %v502 = vpack.c.b16 %v496, %v495
      %v503 = vpack.c.b16 %v498, %v497
      %v504 = vpack.c.b16 %v500, %v499
      %v510 = vsel %vm403, %v475, 0
      %v513 = vsel %vm403, %v476, 0
      %515 = vmatprep.subr.bf16.mxu0 0
      %516 = vmatpush1.bf16.msra.mxu0 0
      %517 = vmatprep.subr.bf16.mxu0 0
      %518 = vmatpush1.bf16.msra.mxu0 0
      %519 = vmatprep.subr.bf16.mxu0 0
      %520 = vmatpush1.bf16.msra.mxu0 0
      %521 = vmatprep.subr.bf16.mxu0 0
      %522 = vmatpush1.bf16.msra.mxu0 0
      %523 = vmatprep.subr.bf16.mxu0 0
      %524 = vmatpush1.bf16.msra.mxu0 %v504
      %525 = vmatprep.subr.bf16.mxu0 0
      %526 = vmatpush1.bf16.msra.mxu0 %v503
      %527 = vmatprep.subr.bf16.mxu0 0
      %528 = vmatpush1.bf16.msra.mxu0 %v502
      %529 = vmatprep.subr.bf16.mxu0 0
      %530 = vmatpush1.bf16.msra.mxu0 %v501
      %531 = vmatprep.subr.bf16.mxu0 0
      %532 = vmatpush2.bf16.msra.mxu0 0
      %533 = vmatprep.subr.bf16.mxu0 0
      %534 = vmatpush2.bf16.msra.mxu0 0
      %535 = vmatprep.subr.bf16.mxu0 0
      %536 = vmatpush2.bf16.msra.mxu0 0
      %537 = vmatprep.subr.bf16.mxu0 0
      %538 = vmatpush2.bf16.msra.mxu0 0
      %539 = vmatprep.subr.bf16.mxu0 0
      %540 = vmatpush2.bf16.msra.mxu0 0
      %541 = vmatprep.subr.bf16.mxu0 0
      %542 = vmatpush2.bf16.msra.mxu0 0
      %543 = vmatprep.subr.bf16.mxu0 0
      %544 = vmatpush2.bf16.msra.mxu0 0
      %545 = vmatprep.subr.bf16.mxu0 0
      %546 = vmatpush2.bf16.msra.mxu0 0
      %547 = vmatprep.mubr.bf16.mxu0 0
      %548 = vmatmul.mubr.bf16.gmra.mxu0 %v510
      %v549 = vpop.f32.mrf.mxu0
      %v550 = vadd.f32 0.0, %v549
      %v551 = vpop.f32.mrf.mxu0
      %v552 = vpop.f32.mrf.mxu0
      %v553 = vadd.f32 0.0, %v552
      %v554 = vpop.f32.mrf.mxu0
      %555 = vmatprep.mubr.bf16.mxu0 0
      %556 = vmatmul.mubr.bf16.gmra.mxu0 %v513
      %v557 = vpop.f32.mrf.mxu0
      %v558 = vadd.f32 0.0, %v557
      %v559 = vpop.f32.mrf.mxu0
      %v560 = vpop.f32.mrf.mxu0
      %v561 = vadd.f32 0.0, %v560
      %v562 = vpop.f32.mrf.mxu0
      %563 = vdwg.mxu0
      %v564 = vmul.f32 %v550, 0.25
      %v565 = vmul.f32 %v553, 0.25
      %v566 = vmul.f32 %v558, 0.25
      %v567 = vmul.f32 %v561, 0.25
      %v568 = vpack.c.bf16 %v565, %v564
      %v569 = vpack.c.bf16 %v567, %v566
      %v572 = vunpack.c.l.b16 %v568
      %v573 = vunpack.c.h.b16 %v568
      %v574 = vunpack.c.l.b16 %v569
      %v575 = vunpack.c.h.b16 %v569
      %v576 = vpack.c.b16 %v572, %v572
      %v577 = vpack.c.b16 %v573, %v573
      %v578 = vpack.c.b16 %v574, %v574
      %v579 = vpack.c.b16 %v575, %v575
      %vm584 = vcmask 519168
      %585 = vst.msk [vmem:[%s370] sm:$0xf] %vm584, %v576
      %586 = vst.msk [vmem:[%s370 + $0x4] sm:$0xf] %vm584, %v577
      %587 = vst.msk [vmem:[%s370 + $0x8] sm:$0xf] %vm584, %v578
      %588 = vst.msk [vmem:[%s370 + $0xc] sm:$0xf] %vm584, %v579
      %v589 = vld [vmem:[%s4] sm:$0xf]
      %v590 = vld [vmem:[%s4 + $0x4] sm:$0xf]
      %v591 = vld [vmem:[%s4 + $0x8] sm:$0xf]
      %v592 = vld [vmem:[%s4 + $0xc] sm:$0xf]
      %v593 = vld [vmem:[%s4 + $0x10] sm:$0xf]
      %v594 = vld [vmem:[%s4 + $0x14] sm:$0xf]
      %v595 = vld [vmem:[%s4 + $0x18] sm:$0xf]
      %v596 = vld [vmem:[%s4 + $0x1c] sm:$0xf]
      %v605 = vunpack.c.l.b16 %v589
      %v606 = vunpack.c.l.b16 %v590
      %v607 = vunpack.c.l.b16 %v591
      %v608 = vunpack.c.l.b16 %v592
      %v609 = vunpack.c.l.b16 %v593
      %v610 = vunpack.c.l.b16 %v594
      %v611 = vunpack.c.l.b16 %v595
      %v612 = vunpack.c.l.b16 %v596
      %v613 = vpack.c.b16 %v606, %v605
      %v614 = vpack.c.b16 %v608, %v607
      %v615 = vpack.c.b16 %v610, %v609
      %v616 = vpack.c.b16 %v612, %v611
      %621 = vmatprep.subr.bf16.mxu0 0
      %622 = vmatpush1.bf16.msra.mxu0 0
      %623 = vmatprep.subr.bf16.mxu0 0
      %624 = vmatpush1.bf16.msra.mxu0 0
      %625 = vmatprep.subr.bf16.mxu0 0
      %626 = vmatpush1.bf16.msra.mxu0 0
      %627 = vmatprep.subr.bf16.mxu0 0
      %628 = vmatpush1.bf16.msra.mxu0 0
      %629 = vmatprep.subr.bf16.mxu0 0
      %630 = vmatpush1.bf16.msra.mxu0 %v616
      %631 = vmatprep.subr.bf16.mxu0 0
      %632 = vmatpush1.bf16.msra.mxu0 %v615
      %633 = vmatprep.subr.bf16.mxu0 0
      %634 = vmatpush1.bf16.msra.mxu0 %v614
      %635 = vmatprep.subr.bf16.mxu0 0
      %636 = vmatpush1.bf16.msra.mxu0 %v613
      %637 = vmatprep.subr.bf16.mxu0 0
      %638 = vmatpush2.bf16.msra.mxu0 0
      %639 = vmatprep.subr.bf16.mxu0 0
      %640 = vmatpush2.bf16.msra.mxu0 0
      %641 = vmatprep.subr.bf16.mxu0 0
      %642 = vmatpush2.bf16.msra.mxu0 0
      %643 = vmatprep.subr.bf16.mxu0 0
      %644 = vmatpush2.bf16.msra.mxu0 0
      %645 = vmatprep.subr.bf16.mxu0 0
      %646 = vmatpush2.bf16.msra.mxu0 0
      %647 = vmatprep.subr.bf16.mxu0 0
      %648 = vmatpush2.bf16.msra.mxu0 0
      %649 = vmatprep.subr.bf16.mxu0 0
      %650 = vmatpush2.bf16.msra.mxu0 0
      %651 = vmatprep.subr.bf16.mxu0 0
      %652 = vmatpush2.bf16.msra.mxu0 0
      %653 = vmatprep.mubr.bf16.mxu0 0
      %654 = vmatmul.mubr.bf16.gmra.mxu0 %v510
      %v655 = vpop.f32.mrf.mxu0
      %v656 = vadd.f32 0.0, %v655
      %v657 = vpop.f32.mrf.mxu0
      %v658 = vpop.f32.mrf.mxu0
      %v659 = vadd.f32 0.0, %v658
      %v660 = vpop.f32.mrf.mxu0
      %661 = vmatprep.mubr.bf16.mxu0 0
      %662 = vmatmul.mubr.bf16.gmra.mxu0 %v513
      %v663 = vpop.f32.mrf.mxu0
      %v664 = vadd.f32 0.0, %v663
      %v665 = vpop.f32.mrf.mxu0
      %v666 = vpop.f32.mrf.mxu0
      %v667 = vadd.f32 0.0, %v666
      %v668 = vpop.f32.mrf.mxu0
      %669 = vdwg.mxu0
      %v670 = vpack.c.bf16 %v659, %v656
      %v671 = vpack.c.bf16 %v667, %v664
      %v674 = vunpack.c.l.b16 %v670
      %v675 = vunpack.c.h.b16 %v670
      %v676 = vunpack.c.l.b16 %v671
      %v677 = vunpack.c.h.b16 %v671
      %v678 = vpack.c.b16 %v674, %v674
      %v679 = vpack.c.b16 %v675, %v675
      %v680 = vpack.c.b16 %v676, %v676
      %v681 = vpack.c.b16 %v677, %v677
      %686 = vst.msk [vmem:[%s380] sm:$0xf] %vm584, %v678
      %687 = vst.msk [vmem:[%s380 + $0x4] sm:$0xf] %vm584, %v679
      %688 = vst.msk [vmem:[%s380 + $0x8] sm:$0xf] %vm584, %v680
      %689 = vst.msk [vmem:[%s380 + $0xc] sm:$0xf] %vm584, %v681
      %v690 = vld [vmem:[%s5] sm:$0xf]
      %v691 = vld [vmem:[%s5 + $0x4] sm:$0xf]
      %v692 = vld [vmem:[%s5 + $0x8] sm:$0xf]
      %v693 = vld [vmem:[%s5 + $0xc] sm:$0xf]
      %v694 = vld [vmem:[%s5 + $0x10] sm:$0xf]
      %v695 = vld [vmem:[%s5 + $0x14] sm:$0xf]
      %v696 = vld [vmem:[%s5 + $0x18] sm:$0xf]
      %v697 = vld [vmem:[%s5 + $0x1c] sm:$0xf]
      %v706 = vunpack.c.l.b16 %v690
      %v707 = vunpack.c.l.b16 %v691
      %v708 = vunpack.c.l.b16 %v692
      %v709 = vunpack.c.l.b16 %v693
      %v710 = vunpack.c.l.b16 %v694
      %v711 = vunpack.c.l.b16 %v695
      %v712 = vunpack.c.l.b16 %v696
      %v713 = vunpack.c.l.b16 %v697
      %v714 = vpack.c.b16 %v707, %v706
      %v715 = vpack.c.b16 %v709, %v708
      %v716 = vpack.c.b16 %v711, %v710
      %v717 = vpack.c.b16 %v713, %v712
      %722 = vmatprep.subr.bf16.mxu0 0
      %723 = vmatpush1.bf16.msra.mxu0 0
      %724 = vmatprep.subr.bf16.mxu0 0
      %725 = vmatpush1.bf16.msra.mxu0 0
      %726 = vmatprep.subr.bf16.mxu0 0
      %727 = vmatpush1.bf16.msra.mxu0 0
      %728 = vmatprep.subr.bf16.mxu0 0
      %729 = vmatpush1.bf16.msra.mxu0 0
      %730 = vmatprep.subr.bf16.mxu0 0
      %731 = vmatpush1.bf16.msra.mxu0 %v717
      %732 = vmatprep.subr.bf16.mxu0 0
      %733 = vmatpush1.bf16.msra.mxu0 %v716
      %734 = vmatprep.subr.bf16.mxu0 0
      %735 = vmatpush1.bf16.msra.mxu0 %v715
      %736 = vmatprep.subr.bf16.mxu0 0
      %737 = vmatpush1.bf16.msra.mxu0 %v714
      %738 = vmatprep.subr.bf16.mxu0 0
      %739 = vmatpush2.bf16.msra.mxu0 0
      %740 = vmatprep.subr.bf16.mxu0 0
      %741 = vmatpush2.bf16.msra.mxu0 0
      %742 = vmatprep.subr.bf16.mxu0 0
      %743 = vmatpush2.bf16.msra.mxu0 0
      %744 = vmatprep.subr.bf16.mxu0 0
      %745 = vmatpush2.bf16.msra.mxu0 0
      %746 = vmatprep.subr.bf16.mxu0 0
      %747 = vmatpush2.bf16.msra.mxu0 0
      %748 = vmatprep.subr.bf16.mxu0 0
      %749 = vmatpush2.bf16.msra.mxu0 0
      %750 = vmatprep.subr.bf16.mxu0 0
      %751 = vmatpush2.bf16.msra.mxu0 0
      %752 = vmatprep.subr.bf16.mxu0 0
      %753 = vmatpush2.bf16.msra.mxu0 0
      %754 = vmatprep.mubr.bf16.mxu0 0
      %755 = vmatmul.mubr.bf16.gmra.mxu0 %v510
      %v756 = vpop.f32.mrf.mxu0
      %v757 = vadd.f32 0.0, %v756
      %v758 = vpop.f32.mrf.mxu0
      %v759 = vpop.f32.mrf.mxu0
      %v760 = vadd.f32 0.0, %v759
      %v761 = vpop.f32.mrf.mxu0
      %762 = vmatprep.mubr.bf16.mxu0 0
      %763 = vmatmul.mubr.bf16.gmra.mxu0 %v513
      %v764 = vpop.f32.mrf.mxu0
      %v765 = vadd.f32 0.0, %v764
      %v766 = vpop.f32.mrf.mxu0
      %v767 = vpop.f32.mrf.mxu0
      %v768 = vadd.f32 0.0, %v767
      %v769 = vpop.f32.mrf.mxu0
      %770 = vdwg.mxu0
      %v771 = vpack.c.bf16 %v760, %v757
      %v772 = vpack.c.bf16 %v768, %v765
      %v775 = vunpack.c.l.b16 %v771
      %v776 = vunpack.c.h.b16 %v771
      %v777 = vunpack.c.l.b16 %v772
      %v778 = vunpack.c.h.b16 %v772
      %v779 = vpack.c.b16 %v775, %v775
      %v780 = vpack.c.b16 %v776, %v776
      %v781 = vpack.c.b16 %v777, %v777
      %v782 = vpack.c.b16 %v778, %v778
      %787 = vst.msk [vmem:[%s390] sm:$0xf] %vm584, %v779
      %788 = vst.msk [vmem:[%s390 + $0x4] sm:$0xf] %vm584, %v780
      %789 = vst.msk [vmem:[%s390 + $0x8] sm:$0xf] %vm584, %v781
      %790 = vst.msk [vmem:[%s390 + $0xc] sm:$0xf] %vm584, %v782
      %s791 = smul.u32 4, %s25
      %p792 = scmp.lt.s32.totalorder %s24, 1
      %s793 = scalar_select %p792, %s24, 1
      %p794 = scmp.lt.s32.totalorder %s791, 7
      %s795 = scalar_select %p794, %s791, 7
      %s796 = smul.addr %s793, 8
      %s797 = sadd.s32 %s795, %s796
      %s798 = smul.addr %s797, 4
      %s799 = scalar_lea.vmem %s6, %s798
      %s800 = smul.u32 4, %s25
      %p801 = scmp.lt.s32.totalorder %s24, 1
      %s802 = scalar_select %p801, %s24, 1
      %p803 = scmp.lt.s32.totalorder %s800, 7
      %s804 = scalar_select %p803, %s800, 7
      %s805 = smul.addr %s802, 8
      %s806 = sadd.s32 %s804, %s805
      %s807 = smul.addr %s806, 4
      %s808 = scalar_lea.vmem %s7, %s807
      %s809 = smul.u32 4, %s25
      %p810 = scmp.lt.s32.totalorder %s24, 1
      %s811 = scalar_select %p810, %s24, 1
      %p812 = scmp.lt.s32.totalorder %s809, 7
      %s813 = scalar_select %p812, %s809, 7
      %s814 = smul.addr %s811, 8
      %s815 = sadd.s32 %s813, %s814
      %s816 = smul.addr %s815, 4
      %s817 = scalar_lea.vmem %s8, %s816
      // Predicated region
      $region45: #{gpt_forward.7} parent=43 // pred_check
        %p818 = pneg %p185
      $region46: #{gpt_forward.7} parent=43 // pred_check_branch
        %820 = sbr.rel (%p818) target = $region48
      $region47: #{gpt_forward.7} parent=43 // pred_region
        %s821 = smul.u32 4, %s25
      $region48: #{gpt_forward.7} parent=43 // pred_fallthru
        _
      // Predicated region
      $region49: #{gpt_forward.7} parent=43 // pred_check
        %p822 = pneg %p213
      $region50: #{gpt_forward.7} parent=43 // pred_check_branch
        %824 = sbr.rel (%p822) target = $region52
      $region51: #{gpt_forward.7} parent=43 // pred_region
        %s825 = smul.u32 4, %s25
      $region52: #{gpt_forward.7} parent=43 // pred_fallthru
        _
      // Predicated region
      $region53: #{gpt_forward.7} parent=43 // pred_check
        %p826 = pneg %p241
      $region54: #{gpt_forward.7} parent=43 // pred_check_branch
        %828 = sbr.rel (%p826) target = $region56
      $region55: #{gpt_forward.7} parent=43 // pred_region
        %s829 = smul.u32 4, %s25
      $region56: #{gpt_forward.7} parent=43 // pred_fallthru
        _
    $region44: #{gpt_forward.7} parent=5 // pred_fallthru
      _
    %p830 = scmp.le.s32.totalorder 2, %s15
    // Predicated region
    $region57: #{gpt_forward.7} parent=5 // pred_check
      %p831 = pneg %p830
    $region58: #{gpt_forward.7} parent=5 // pred_check_branch
      %833 = sbr.rel (%p831) target = $region60
    $region59: #{gpt_forward.7} parent=5 // pred_region
      %s834 = ssub.s32 %s15, 2
      // Predicated region
      $region61: #{gpt_forward.7} parent=59 // pred_check
        %p835 = pneg %p191
      $region62: #{gpt_forward.7} parent=59 // pred_check_branch
        %837 = sbr.rel (%p835) target = $region64
      $region63: #{gpt_forward.7} parent=59 // pred_region
        %s838 = smul.u32 4, %s27
        %p839 = scmp.lt.s32.totalorder %s26, 1
        %s840 = scalar_select %p839, %s26, 1
        %p841 = scmp.lt.s32.totalorder %s838, 7
        %s842 = scalar_select %p841, %s838, 7
        %s843 = smul.addr %s840, 8
        %s844 = sadd.s32 %s842, %s843
        %s845 = smul.addr %s844, 4
        %s846 = scalar_lea.vmem %s6, %s845
      $region64: #{gpt_forward.7} parent=59 // pred_fallthru
        _
      // Predicated region
      $region65: #{gpt_forward.7} parent=59 // pred_check
        %p847 = pneg %p219
      $region66: #{gpt_forward.7} parent=59 // pred_check_branch
        %849 = sbr.rel (%p847) target = $region68
      $region67: #{gpt_forward.7} parent=59 // pred_region
        %s850 = smul.u32 4, %s27
        %p851 = scmp.lt.s32.totalorder %s26, 1
        %s852 = scalar_select %p851, %s26, 1
        %p853 = scmp.lt.s32.totalorder %s850, 7
        %s854 = scalar_select %p853, %s850, 7
        %s855 = smul.addr %s852, 8
        %s856 = sadd.s32 %s854, %s855
        %s857 = smul.addr %s856, 4
        %s858 = scalar_lea.vmem %s7, %s857
      $region68: #{gpt_forward.7} parent=59 // pred_fallthru
        _
      // Predicated region
      $region69: #{gpt_forward.7} parent=59 // pred_check
        %p859 = pneg %p247
      $region70: #{gpt_forward.7} parent=59 // pred_check_branch
        %861 = sbr.rel (%p859) target = $region72
      $region71: #{gpt_forward.7} parent=59 // pred_region
        %s862 = smul.u32 4, %s27
        %p863 = scmp.lt.s32.totalorder %s26, 1
        %s864 = scalar_select %p863, %s26, 1
        %p865 = scmp.lt.s32.totalorder %s862, 7
        %s866 = scalar_select %p865, %s862, 7
        %s867 = smul.addr %s864, 8
        %s868 = sadd.s32 %s866, %s867
        %s869 = smul.addr %s868, 4
        %s870 = scalar_lea.vmem %s8, %s869
      $region72: #{gpt_forward.7} parent=59 // pred_fallthru
        _
    $region60: #{gpt_forward.7} parent=5 // pred_fallthru
      _
  $region6: #{gpt_forward.7} parent=0 // loop_footer
    %s19 = sadd.s32 1, %s15
  $region7: #{gpt_forward.7} parent=0 // loop_footer_branch
    %14 = sbr.rel target = $region3
  $region8: #{gpt_forward.7} parent=0 // loop_exit
    _

// kernel: gpt_forward.13
$region0: #{gpt_forward.13}
  #allocation0 [shape = 'u32[]', space=smem, size = 0x4, offset = 0x4, fixed_abs, tag = 'smem constant byte address 0x4 - core index']
  #allocation1 [shape = 'u32[144,128]{1,0:T(1,128)}', space=vmem, size = 0x12000, scoped, tag = 'internal scratch']
  %s0 = inlined_call_operand.vmem [shape: bf16[2,64,64], index: 0, kind: input, shape index: {}]
  %s1 = inlined_call_operand.vmem [shape: bf16[1,64], index: 1, kind: input, shape index: {}]
  %s2 = inlined_call_operand.vmem [shape: bf16[1,64], index: 2, kind: input, shape index: {}]
  %s3 = inlined_call_operand.vmem [shape: bf16[64,512], index: 3, kind: input, shape index: {}]
  %s4 = inlined_call_operand.hbm [shape: f32[2,64,512], index: 4, kind: output, shape index: {}]
  %s5 = sld [smem:[#allocation0]]
  $region90: #{gpt_forward.13} parent=0
    _
  %s7 = ssub.s32 1, %s5
  %s8 = scalar_select 0, %s7, %s5
  $region1: #{gpt_forward.13} parent=0
    #allocation2 [shape = 'u8[32768]{0}', space=vmem, size = 0x8000, scoped, tag = 'input window, operand 3']
    #allocation3 [shape = 'u8[32768]{0}', space=vmem, size = 0x8000, scoped, tag = 'output window, operand 0']
    #allocation4 [shape = 's32[2]{0}', space=sflag, size = 0x8, scoped, tag = 'scoped memory for gpt_forward.13']
    %9 = vsyncpa [#allocation4], 0
    %s10 = scalar_lea.sflag [#allocation4], 1
    %11 = vsyncpa %s10, 0
    loop: start=0, step=1, limit=18
    $region2: #{gpt_forward.13} parent=1 // loop_pre_header
      _
    $region3: #{gpt_forward.13} parent=1 // loop_header
      %s13 = sphi 0, %s17
      %p14 = scmp.ge.s32.totalorder %s13, 18
      %s20 = sphi 0, %s39
      %s21 = sphi 0, %s35
      %s22 = sphi 0, %s31
      %s23 = sphi 0, %s20
      %s24 = sphi 0, %s21
      %s25 = sphi 0, %s22
      %s26 = sphi 0, %s23
      %s27 = sphi 0, %s24
      %s28 = sphi 0, %s25
      %s44 = sphi 0, %s46
      %s47 = sphi 0, %s44
      %s48 = sphi 0, %s47
      %s64 = sphi 0, %s48
      %s68 = sphi 0, %s68
      %s70 = sphi 0, %s68
      %s71 = sphi 0, %s70
      %s85 = sphi 0, %s71
      %s89 = sphi 0, %s89
      %s91 = sphi 0, %s89
      %s92 = sphi 0, %s91
      %s106 = sphi 0, %s92
      %s112 = sphi 0, %s114
      %s115 = sphi 0, %s112
      %s116 = sphi 0, %s115
      %s132 = sphi 0, %s116
      %s142 = sphi 0, %s144
      %s145 = sphi 0, %s142
      %s146 = sphi 0, %s145
      %s162 = sphi 0, %s146
    $region4: #{gpt_forward.13} parent=1 // loop_header_branch
      %16 = sbr.rel (%p14) target = $region8
    $region5: #{gpt_forward.13} parent=1 // loop_body
      %s18 = ssub.s32 %s13, 1
      %s19 = ssub.s32 %s13, 2
      %s29 = sadd.s32 1, %s22
      %p30 = scmp.ge.s32.totalorder %s29, 4
      %s31 = scalar_select %p30, 0, %s29
      %s32 = sadd.s32 1, %s21
      %s33 = scalar_select %p30, %s32, %s21
      %p34 = scmp.ge.s32.totalorder %s33, 2
      %s35 = scalar_select %p34, 0, %s33
      %s36 = sadd.s32 1, %s20
      %s37 = scalar_select %p34, %s36, %s20
      %p38 = scmp.ge.s32.totalorder %s37, 2
      %s39 = scalar_select %p38, 0, %s37
      %s40 = ssub.s32 %s20, %s39
      %s41 = ssub.s32 %s21, %s35
      %s42 = sor.u32 %s40, %s41
      %p43 = scmp.eq.s32.totalorder %s42, 0
      %s45 = sadd.s32 %s44, 1
      %s46 = scalar_select %p43, %s44, %s45
      %p49 = pneg %p43
      %p50 = scmp.eq.s32.totalorder %s13, 15
      %p51 = por %p49, %p50
      %p52 = scmp.ne.s32.totalorder %s44, %s47
      %p53 = scmp.eq.s32.totalorder %s13, 0
      %p54 = por %p52, %p53
      %p55 = scmp.ne.s32.totalorder %s44, %s47
      %p56 = scmp.eq.s32.totalorder %s18, 15
      %p57 = por %p55, %p56
      %p58 = scmp.ne.s32.totalorder %s47, %s48
      %p59 = scmp.eq.s32.totalorder %s18, 0
      %p60 = por %p58, %p59
      %p61 = scmp.ne.s32.totalorder %s47, %s48
      %p62 = scmp.eq.s32.totalorder %s19, 15
      %p63 = por %p61, %p62
      %p65 = scmp.ne.s32.totalorder %s48, %s64
      %p66 = scmp.eq.s32.totalorder %s19, 0
      %p67 = por %p65, %p66
      %s69 = sadd.s32 %s68, 1
      %p72 = scmp.eq.s32.totalorder %s13, 15
      %p73 = scmp.ne.s32.totalorder %s68, %s70
      %p74 = scmp.eq.s32.totalorder %s13, 0
      %p75 = por %p73, %p74
      %p76 = scmp.ne.s32.totalorder %s68, %s70
      %p77 = scmp.eq.s32.totalorder %s18, 15
      %p78 = por %p76, %p77
      %p79 = scmp.ne.s32.totalorder %s70, %s71
      %p80 = scmp.eq.s32.totalorder %s18, 0
      %p81 = por %p79, %p80
      %p82 = scmp.ne.s32.totalorder %s70, %s71
      %p83 = scmp.eq.s32.totalorder %s19, 15
      %p84 = por %p82, %p83
      %p86 = scmp.ne.s32.totalorder %s71, %s85
      %p87 = scmp.eq.s32.totalorder %s19, 0
      %p88 = por %p86, %p87
      %s90 = sadd.s32 %s89, 1
      %p93 = scmp.eq.s32.totalorder %s13, 15
      %p94 = scmp.ne.s32.totalorder %s89, %s91
      %p95 = scmp.eq.s32.totalorder %s13, 0
      %p96 = por %p94, %p95
      %p97 = scmp.ne.s32.totalorder %s89, %s91
      %p98 = scmp.eq.s32.totalorder %s18, 15
      %p99 = por %p97, %p98
      %p100 = scmp.ne.s32.totalorder %s91, %s92
      %p101 = scmp.eq.s32.totalorder %s18, 0
      %p102 = por %p100, %p101
      %p103 = scmp.ne.s32.totalorder %s91, %s92
      %p104 = scmp.eq.s32.totalorder %s19, 15
      %p105 = por %p103, %p104
      %p107 = scmp.ne.s32.totalorder %s92, %s106
      %p108 = scmp.eq.s32.totalorder %s19, 0
      %p109 = por %p107, %p108
      %s110 = ssub.s32 %s22, %s31
      %p111 = scmp.eq.s32.totalorder %s110, 0
      %s113 = sadd.s32 %s112, 1
      %s114 = scalar_select %p111, %s112, %s113
      %p117 = pneg %p111
      %p118 = scmp.eq.s32.totalorder %s13, 15
      %p119 = por %p117, %p118
      %p120 = scmp.ne.s32.totalorder %s112, %s115
      %p121 = scmp.eq.s32.totalorder %s13, 0
      %p122 = por %p120, %p121
      %p123 = scmp.ne.s32.totalorder %s112, %s115
      %p124 = scmp.eq.s32.totalorder %s18, 15
      %p125 = por %p123, %p124
      %p126 = scmp.ne.s32.totalorder %s115, %s116
      %p127 = scmp.eq.s32.totalorder %s18, 0
      %p128 = por %p126, %p127
      %p129 = scmp.ne.s32.totalorder %s115, %s116
      %p130 = scmp.eq.s32.totalorder %s19, 15
      %p131 = por %p129, %p130
      %p133 = scmp.ne.s32.totalorder %s116, %s132
      %p134 = scmp.eq.s32.totalorder %s19, 0
      %p135 = por %p133, %p134
      %s136 = ssub.s32 %s20, %s39
      %s137 = ssub.s32 %s21, %s35
      %s138 = sor.u32 %s136, %s137
      %s139 = ssub.s32 %s22, %s31
      %s140 = sor.u32 %s138, %s139
      %p141 = scmp.eq.s32.totalorder %s140, 0
      %s143 = sadd.s32 %s142, 1
      %s144 = scalar_select %p141, %s142, %s143
      %p147 = pneg %p141
      %p148 = scmp.eq.s32.totalorder %s13, 15
      %p149 = por %p147, %p148
      %p150 = scmp.ne.s32.totalorder %s142, %s145
      %p151 = scmp.eq.s32.totalorder %s13, 0
      %p152 = por %p150, %p151
      %p153 = scmp.ne.s32.totalorder %s142, %s145
      %p154 = scmp.eq.s32.totalorder %s18, 15
      %p155 = por %p153, %p154
      %p156 = scmp.ne.s32.totalorder %s145, %s146
      %p157 = scmp.eq.s32.totalorder %s18, 0
      %p158 = por %p156, %p157
      %p159 = scmp.ne.s32.totalorder %s145, %s146
      %p160 = scmp.eq.s32.totalorder %s19, 15
      %p161 = por %p159, %p160
      %p163 = scmp.ne.s32.totalorder %s146, %s162
      %p164 = scmp.eq.s32.totalorder %s19, 0
      %p165 = por %p163, %p164
      %p166 = scmp.le.s32.totalorder 1, %s13
      %p167 = scmp.lt.s32.totalorder %s13, 17
      %p168 = pnand %p166, %p167
      %p169 = pneg %p168
      // Predicated region
      $region9: #{gpt_forward.13} parent=5 // pred_check
        _
      $region10: #{gpt_forward.13} parent=5 // pred_check_branch
        %171 = sbr.rel (%p168) target = $region12
      $region11: #{gpt_forward.13} parent=5 // pred_region
        %s172 = ssub.s32 %s13, 1
        // Predicated region
        $region13: #{gpt_forward.13} parent=11 // pred_check
          %p173 = pneg %p81
        $region14: #{gpt_forward.13} parent=11 // pred_check_branch
          %175 = sbr.rel (%p173) target = $region16
        $region15: #{gpt_forward.13} parent=11 // pred_region
          _
        $region16: #{gpt_forward.13} parent=11 // pred_fallthru
          _
        // Predicated region
        $region17: #{gpt_forward.13} parent=11 // pred_check
          %p176 = pneg %p102
        $region18: #{gpt_forward.13} parent=11 // pred_check_branch
          %178 = sbr.rel (%p176) target = $region20
        $region19: #{gpt_forward.13} parent=11 // pred_region
          _
        $region20: #{gpt_forward.13} parent=11 // pred_fallthru
          _
      $region12: #{gpt_forward.13} parent=5 // pred_fallthru
        _
      %p179 = scmp.lt.s32.totalorder %s13, 16
      // Predicated region
      $region21: #{gpt_forward.13} parent=5 // pred_check
        %p180 = pneg %p179
      $region22: #{gpt_forward.13} parent=5 // pred_check_branch
        %182 = sbr.rel (%p180) target = $region24
      $region23: #{gpt_forward.13} parent=5 // pred_region
        // Predicated region
        $region25: #{gpt_forward.13} parent=23 // pred_check
          %p183 = pneg %p54
        $region26: #{gpt_forward.13} parent=23 // pred_check_branch
          %185 = sbr.rel (%p183) target = $region28
        $region27: #{gpt_forward.13} parent=23 // pred_region
          %s186 = smul.u32 4, %s21
          %p187 = scmp.lt.s32.totalorder %s20, 1
          %s188 = scalar_select %p187, %s20, 1
          %p189 = scmp.lt.s32.totalorder %s186, 7
          %s190 = scalar_select %p189, %s186, 7
          %s191 = smul.addr %s188, 8
          %s192 = sadd.s32 %s190, %s191
          %s193 = smul.addr %s192, 4
          %s194 = scalar_lea.vmem %s0, %s193
          %s195 = smul.u32 4, %s21
        $region28: #{gpt_forward.13} parent=23 // pred_fallthru
          _
        // Predicated region
        $region29: #{gpt_forward.13} parent=23 // pred_check
          %p196 = pneg %p122
        $region30: #{gpt_forward.13} parent=23 // pred_check_branch
          %198 = sbr.rel (%p196) target = $region32
        $region31: #{gpt_forward.13} parent=23 // pred_region
          %s199 = sand.u32 %s112, 1
          %s200 = sand.u32 %s112, 1
          %s201 = smul.addr %s200, 32
          %s202 = scalar_lea.vmem [#allocation2], %s201
          %s203 = smul.addr %s22, 4
          %s204 = scalar_lea.vmem %s3, %s203
          // Predicated region
          $region33: #{gpt_forward.13} parent=31 // pred_check
            _
          $region34: #{gpt_forward.13} parent=31 // pred_check_branch
            %206 = sbr.rel (0) target = $region36
          $region35: #{gpt_forward.13} parent=31 // pred_region
            // Predicated region
            $region37: #{gpt_forward.13} parent=35 // pred_check
              _
            $region38: #{gpt_forward.13} parent=35 // pred_check_branch
              %208 = sbr.rel target = $region40
            $region39: #{gpt_forward.13} parent=35 // pred_region
              // Predicated region
              $region52: #{gpt_forward.13} parent=39 // pred_check
                _
              $region53: #{gpt_forward.13} parent=39 // pred_check_branch
                %238 = sbr.rel (0) target = $region55
              $region54: #{gpt_forward.13} parent=39 // pred_region
                loop: start=0, step=1, limit=1
                $region56: #{gpt_forward.13} parent=54 // loop_pre_header
                  _
                $region57: #{gpt_forward.13} parent=54 // loop_header
                  %s240 = sphi 0, %s244
                  %p241 = scmp.ge.s32.totalorder %s240, 1
                  %s245 = sphi %s204, %s204
                  %s246 = sphi %s202, %s202
                $region58: #{gpt_forward.13} parent=54 // loop_header_branch
                  %243 = sbr.rel (%p241) target = $region62
                $region59: #{gpt_forward.13} parent=54 // loop_body
                  _
                $region60: #{gpt_forward.13} parent=54 // loop_footer
                  %s244 = sadd.s32 1, %s240
                $region61: #{gpt_forward.13} parent=54 // loop_footer_branch
                  %239 = sbr.rel target = $region57
                $region62: #{gpt_forward.13} parent=54 // loop_exit
                  _
                %s248 = ssub.s32 16, 1
                loop: start=0, step=1, limit=1
                $region63: #{gpt_forward.13} parent=54 // loop_pre_header
                  _
                $region64: #{gpt_forward.13} parent=54 // loop_header
                  %s250 = sphi 0, %s254
                  %p251 = scmp.ge.s32.totalorder %s250, 1
                  %s255 = sphi %s204, %s204
                  %s256 = sphi %s202, %s202
                $region65: #{gpt_forward.13} parent=54 // loop_header_branch
                  %253 = sbr.rel (%p251) target = $region69
                $region66: #{gpt_forward.13} parent=54 // loop_body
                  %v257 = vld [vmem:[%s255] sm:%s248]
                  %258 = vst [vmem:[%s256] sm:%s248] %v257
                  %v259 = vld [vmem:[%s255 + $0x10] sm:%s248]
                  %260 = vst [vmem:[%s256 + $0x4] sm:%s248] %v259
                  %v261 = vld [vmem:[%s255 + $0x20] sm:%s248]
                  %262 = vst [vmem:[%s256 + $0x8] sm:%s248] %v261
                  %v263 = vld [vmem:[%s255 + $0x30] sm:%s248]
                  %264 = vst [vmem:[%s256 + $0xc] sm:%s248] %v263
                  %v265 = vld [vmem:[%s255 + $0x40] sm:%s248]
                  %266 = vst [vmem:[%s256 + $0x10] sm:%s248] %v265
                  %v267 = vld [vmem:[%s255 + $0x50] sm:%s248]
                  %268 = vst [vmem:[%s256 + $0x14] sm:%s248] %v267
                  %v269 = vld [vmem:[%s255 + $0x60] sm:%s248]
                  %270 = vst [vmem:[%s256 + $0x18] sm:%s248] %v269
                  %v271 = vld [vmem:[%s255 + $0x70] sm:%s248]
                  %272 = vst [vmem:[%s256 + $0x1c] sm:%s248] %v271
                $region67: #{gpt_forward.13} parent=54 // loop_footer
                  %s254 = sadd.s32 1, %s250
                $region68: #{gpt_forward.13} parent=54 // loop_footer_branch
                  %249 = sbr.rel target = $region64
                $region69: #{gpt_forward.13} parent=54 // loop_exit
                  _
              $region55: #{gpt_forward.13} parent=39 // pred_fallthru
                _
            $region40: #{gpt_forward.13} parent=35 // pred_fallthru
              _
            // Predicated region
            $region41: #{gpt_forward.13} parent=35 // pred_check
              _
            $region42: #{gpt_forward.13} parent=35 // pred_check_branch
              %210 = sbr.rel (0) target = $region44
            $region43: #{gpt_forward.13} parent=35 // pred_region
              %s212 = ssub.s32 16, 1
              loop: start=0, step=1, limit=1
              $region45: #{gpt_forward.13} parent=43 // loop_pre_header
                _
              $region46: #{gpt_forward.13} parent=43 // loop_header
                %s214 = sphi 0, %s218
                %p215 = scmp.ge.s32.totalorder %s214, 1
                %s219 = sphi %s204, %s204
                %s220 = sphi %s202, %s202
              $region47: #{gpt_forward.13} parent=43 // loop_header_branch
                %217 = sbr.rel (%p215) target = $region51
              $region48: #{gpt_forward.13} parent=43 // loop_body
                %v221 = vld [vmem:[%s219] sm:%s212]
                %222 = vst [vmem:[%s220] sm:%s212] %v221
                %v223 = vld [vmem:[%s219 + $0x10] sm:%s212]
                %224 = vst [vmem:[%s220 + $0x4] sm:%s212] %v223
                %v225 = vld [vmem:[%s219 + $0x20] sm:%s212]
                %226 = vst [vmem:[%s220 + $0x8] sm:%s212] %v225
                %v227 = vld [vmem:[%s219 + $0x30] sm:%s212]
                %228 = vst [vmem:[%s220 + $0xc] sm:%s212] %v227
                %v229 = vld [vmem:[%s219 + $0x40] sm:%s212]
                %230 = vst [vmem:[%s220 + $0x10] sm:%s212] %v229
                %v231 = vld [vmem:[%s219 + $0x50] sm:%s212]
                %232 = vst [vmem:[%s220 + $0x14] sm:%s212] %v231
                %v233 = vld [vmem:[%s219 + $0x60] sm:%s212]
                %234 = vst [vmem:[%s220 + $0x18] sm:%s212] %v233
                %v235 = vld [vmem:[%s219 + $0x70] sm:%s212]
                %236 = vst [vmem:[%s220 + $0x1c] sm:%s212] %v235
              $region49: #{gpt_forward.13} parent=43 // loop_footer
                %s218 = sadd.s32 1, %s214
              $region50: #{gpt_forward.13} parent=43 // loop_footer_branch
                %213 = sbr.rel target = $region46
              $region51: #{gpt_forward.13} parent=43 // loop_exit
                _
            $region44: #{gpt_forward.13} parent=35 // pred_fallthru
              _
          $region36: #{gpt_forward.13} parent=31 // pred_fallthru
            _
          %273 = vnop
        $region32: #{gpt_forward.13} parent=23 // pred_fallthru
          _
      $region24: #{gpt_forward.13} parent=5 // pred_fallthru
        _
      %p274 = scmp.le.s32.totalorder 1, %s13
      %p275 = scmp.lt.s32.totalorder %s13, 17
      %p276 = pnand %p274, %p275
      %p277 = pneg %p276
      // Predicated region
      $region70: #{gpt_forward.13} parent=5 // pred_check
        _
      $region71: #{gpt_forward.13} parent=5 // pred_check_branch
        %279 = sbr.rel (%p276) target = $region73
      $region72: #{gpt_forward.13} parent=5 // pred_region
        %s280 = ssub.s32 %s13, 1
        %s281 = sand.u32 %s115, 1
        %s282 = sand.u32 %s115, 1
        %s283 = smul.addr %s282, 32
        %s284 = scalar_lea.vmem [#allocation2], %s283
        // Predicated region
        $region74: #{gpt_forward.13} parent=72 // pred_check
          %p285 = pneg %p128
        $region75: #{gpt_forward.13} parent=72 // pred_check_branch
          %287 = sbr.rel (%p285) target = $region77
        $region76: #{gpt_forward.13} parent=72 // pred_region
          _
        $region77: #{gpt_forward.13} parent=72 // pred_fallthru
          _
        %s288 = smul.u32 4, %s24
        %p289 = scmp.lt.s32.totalorder %s23, 1
        %s290 = scalar_select %p289, %s23, 1
        %p291 = scmp.lt.s32.totalorder %s288, 7
        %s292 = scalar_select %p291, %s288, 7
        %s293 = smul.addr %s290, 8
        %s294 = sadd.s32 %s292, %s293
        %s295 = smul.addr %s294, 4
        %s296 = scalar_lea.vmem %s0, %s295
        %p297 = pneg %p60
        %p298 = pneg %p57
        %p299 = pneg %p81
        %p300 = pneg %p78
        %p301 = pneg %p102
        %p302 = pneg %p99
        %s303 = sand.u32 %s115, 1
        %s304 = sand.u32 %s115, 1
        %s305 = smul.addr %s304, 32
        %s306 = scalar_lea.vmem [#allocation2], %s305
        %p307 = pneg %p128
        %p308 = pneg %p125
        %p309 = pneg %p158
        %p310 = pneg %p155
        %s311 = sand.u32 %s145, 1
        %s312 = scalar_lea.sflag [#allocation4], %s311
        %s313 = sand.u32 %s145, 1
        %s314 = smul.addr %s313, 32
        %s315 = scalar_lea.vmem [#allocation3], %s314
        %s316 = smul.u32 4, %s24
        %p317 = scmp.lt.s32.totalorder %s23, 1
        %s318 = scalar_select %p317, %s23, 1
        %p319 = scmp.lt.s32.totalorder %s316, 7
        %s320 = scalar_select %p319, %s316, 7
        %s321 = smul.addr %s318, 8
        %s322 = sadd.s32 %s320, %s321
        %s323 = smul.addr %s322, 4
        %s324 = scalar_lea.vmem %s0, %s323
        %s325 = smul.u32 4, %s24
        %s326 = smul.u32 4, %s24
        %v328 = vld [vmem:[%s324] sm:$0xf]
        %v329 = vld [vmem:[%s324 + $0x4] sm:$0xf]
        %v330 = vld [vmem:[%s324 + $0x8] sm:$0xf]
        %v331 = vld [vmem:[%s324 + $0xc] sm:$0xf]
        %v332 = vunpack.c.l.bf16 %v328
        %v333 = vunpack.c.l.bf16 %v329
        %v334 = vunpack.c.l.bf16 %v330
        %v335 = vunpack.c.l.bf16 %v331
        %v336 = vld [vmem:[%s1] sm:$0x1]
        %v337 = vld [vmem:[%s2] sm:$0x1]
        %vm338 = vcmask 523264
        %v339 = vsel %vm338, %v332, 0.0
        %340 = vadd.xlane.f32.xlu0 %v339
        %v341 = vpop.xlane.xlu0 %340
        %v342 = vsel %vm338, %v333, 0.0
        %343 = vadd.xlane.f32.xlu0 %v342
        %v344 = vpop.xlane.xlu0 %343
        %v345 = vsel %vm338, %v334, 0.0
        %346 = vadd.xlane.f32.xlu0 %v345
        %v347 = vpop.xlane.xlu0 %346
        %v348 = vsel %vm338, %v335, 0.0
        %349 = vadd.xlane.f32.xlu0 %v348
        %v350 = vpop.xlane.xlu0 %349
        %v351 = vrcp.pop 64.0
        %v352 = vmul.f32 %v341, %v351
        %v353 = vmul.f32 %v344, %v351
        %v354 = vmul.f32 %v347, %v351
        %v355 = vmul.f32 %v350, %v351
        %v356 = vsub.f32 %v332, %v352
        %v357 = vsub.f32 %v333, %v353
        %v358 = vsub.f32 %v334, %v354
        %v359 = vsub.f32 %v335, %v355
        %v360 = vmul.f32 %v356, %v356
        %v361 = vmul.f32 %v357, %v357
        %v362 = vmul.f32 %v358, %v358
        %v363 = vmul.f32 %v359, %v359
        %v364 = vsel %vm338, %v360, 0.0
        %365 = vadd.xlane.f32.xlu0 %v364
        %v366 = vpop.xlane.xlu0 %365
        %v367 = vsel %vm338, %v361, 0.0
        %368 = vadd.xlane.f32.xlu0 %v367
        %v369 = vpop.xlane.xlu0 %368
        %v370 = vsel %vm338, %v362, 0.0
        %371 = vadd.xlane.f32.xlu0 %v370
        %v372 = vpop.xlane.xlu0 %371
        %v373 = vsel %vm338, %v363, 0.0
        %374 = vadd.xlane.f32.xlu0 %v373
        %v375 = vpop.xlane.xlu0 %374
        %v376 = vmul.f32 %v366, %v351
        %v377 = vmul.f32 %v369, %v351
        %v378 = vmul.f32 %v372, %v351
        %v379 = vmul.f32 %v375, %v351
        %v380 = vadd.f32 %v376, 1e-05
        %v381 = vadd.f32 %v377, 1e-05
        %v382 = vadd.f32 %v378, 1e-05
        %v383 = vadd.f32 %v379, 1e-05
        %v384 = vrsqrt.pop %v380
        %v385 = vrsqrt.pop %v381
        %v386 = vrsqrt.pop %v382
        %v387 = vrsqrt.pop %v383
        %v388 = vmul.f32 %v356, %v384
        %v389 = vmul.f32 %v357, %v385
        %v390 = vmul.f32 %v358, %v386
        %v391 = vmul.f32 %v359, %v387
        %v392 = vunpack.c.l.bf16 %v336
        %v393 = vlaneseq
        %v394 = vshrl.u32 %v393, 7
        %v395 = vsub.s32 0, %v394
        %v396 = vrot.slane %v392, %v395
        %v397 = vmul.f32 %v388, %v396
        %v398 = vmul.f32 %v389, %v396
        %v399 = vmul.f32 %v390, %v396
        %v400 = vmul.f32 %v391, %v396
        %v401 = vunpack.c.l.bf16 %v337
        %v402 = vlaneseq
        %v403 = vshrl.u32 %v402, 7
        %v404 = vsub.s32 0, %v403
        %v405 = vrot.slane %v401, %v404
        %v406 = vadd.f32 %v397, %v405
        %v407 = vadd.f32 %v398, %v405
        %v408 = vadd.f32 %v399, %v405
        %v409 = vadd.f32 %v400, %v405
        %v410 = vpack.c.bf16 %v407, %v406
        %v411 = vpack.c.bf16 %v409, %v408
        %v412 = vld [vmem:[%s284] sm:$0xf]
        %v413 = vld [vmem:[%s284 + $0x4] sm:$0xf]
        %v414 = vld [vmem:[%s284 + $0x8] sm:$0xf]
        %v415 = vld [vmem:[%s284 + $0xc] sm:$0xf]
        %v416 = vld [vmem:[%s284 + $0x10] sm:$0xf]
        %v417 = vld [vmem:[%s284 + $0x14] sm:$0xf]
        %v418 = vld [vmem:[%s284 + $0x18] sm:$0xf]
        %v419 = vld [vmem:[%s284 + $0x1c] sm:$0xf]
        %v428 = vunpack.c.l.b16 %v412
        %v429 = vunpack.c.l.b16 %v413
        %v430 = vunpack.c.l.b16 %v414
        %v431 = vunpack.c.l.b16 %v415
        %v432 = vunpack.c.l.b16 %v416
        %v433 = vunpack.c.l.b16 %v417
        %v434 = vunpack.c.l.b16 %v418
        %v435 = vunpack.c.l.b16 %v419
        %v436 = vpack.c.b16 %v429, %v428
        %v437 = vpack.c.b16 %v431, %v430
        %v438 = vpack.c.b16 %v433, %v432
        %v439 = vpack.c.b16 %v435, %v434
        %v445 = vsel %vm338, %v410, 0
        %v448 = vsel %vm338, %v411, 0
        %450 = vmatprep.subr.bf16.mxu0 0
        %451 = vmatpush1.bf16.msra.mxu0 0
        %452 = vmatprep.subr.bf16.mxu0 0
        %453 = vmatpush1.bf16.msra.mxu0 0
        %454 = vmatprep.subr.bf16.mxu0 0
        %455 = vmatpush1.bf16.msra.mxu0 0
        %456 = vmatprep.subr.bf16.mxu0 0
        %457 = vmatpush1.bf16.msra.mxu0 0
        %458 = vmatprep.subr.bf16.mxu0 0
        %459 = vmatpush1.bf16.msra.mxu0 %v439
        %460 = vmatprep.subr.bf16.mxu0 0
        %461 = vmatpush1.bf16.msra.mxu0 %v438
        %462 = vmatprep.subr.bf16.mxu0 0
        %463 = vmatpush1.bf16.msra.mxu0 %v437
        %464 = vmatprep.subr.bf16.mxu0 0
        %465 = vmatpush1.bf16.msra.mxu0 %v436
        %466 = vmatprep.subr.bf16.mxu0 0
        %467 = vmatpush2.bf16.msra.mxu0 0
        %468 = vmatprep.subr.bf16.mxu0 0
        %469 = vmatpush2.bf16.msra.mxu0 0
        %470 = vmatprep.subr.bf16.mxu0 0
        %471 = vmatpush2.bf16.msra.mxu0 0
        %472 = vmatprep.subr.bf16.mxu0 0
        %473 = vmatpush2.bf16.msra.mxu0 0
        %474 = vmatprep.subr.bf16.mxu0 0
        %475 = vmatpush2.bf16.msra.mxu0 0
        %476 = vmatprep.subr.bf16.mxu0 0
        %477 = vmatpush2.bf16.msra.mxu0 0
        %478 = vmatprep.subr.bf16.mxu0 0
        %479 = vmatpush2.bf16.msra.mxu0 0
        %480 = vmatprep.subr.bf16.mxu0 0
        %481 = vmatpush2.bf16.msra.mxu0 0
        %482 = vmatprep.mubr.bf16.mxu0 0
        %483 = vmatmul.mubr.bf16.gmra.mxu0 %v445
        %v484 = vpop.f32.mrf.mxu0
        %v485 = vadd.f32 0.0, %v484
        %v486 = vpop.f32.mrf.mxu0
        %v487 = vpop.f32.mrf.mxu0
        %v488 = vadd.f32 0.0, %v487
        %v489 = vpop.f32.mrf.mxu0
        %490 = vmatprep.mubr.bf16.mxu0 0
        %491 = vmatmul.mubr.bf16.gmra.mxu0 %v448
        %v492 = vpop.f32.mrf.mxu0
        %v493 = vadd.f32 0.0, %v492
        %v494 = vpop.f32.mrf.mxu0
        %v495 = vpop.f32.mrf.mxu0
        %v496 = vadd.f32 0.0, %v495
        %v497 = vpop.f32.mrf.mxu0
        %498 = vdwg.mxu0
        %499 = vst [vmem:[%s315] sm:$0xff] %v485
        %500 = vst [vmem:[%s315 + $0x8] sm:$0xff] %v488
        %501 = vst [vmem:[%s315 + $0x10] sm:$0xff] %v493
        %502 = vst [vmem:[%s315 + $0x18] sm:$0xff] %v496
        %s503 = sand.u32 %s145, 1
        %s504 = scalar_lea.sflag [#allocation4], %s503
        %s505 = sand.u32 %s145, 1
        %s506 = smul.addr %s505, 32
        %s507 = scalar_lea.vmem [#allocation3], %s506
        // Predicated region
        $region78: #{gpt_forward.13} parent=72 // pred_check
          %p508 = pneg %p155
        $region79: #{gpt_forward.13} parent=72 // pred_check_branch
          %510 = sbr.rel (%p508) target = $region81
        $region80: #{gpt_forward.13} parent=72 // pred_region
          %s511 = smul.u32 4, %s24
          %s513 = ssub.s32 512, 512
          %514 = vsyncadd %s504, %s513
          %s515 = smul.addr %s511, 4
          %s516 = sadd.s32 %s25, %s515
          %s517 = smul.addr %s23, 32
          %s518 = sadd.s32 %s516, %s517
          %s519 = smul.addr %s518, 128
          %s520 = scalar_lea.hbm %s4, %s519
          %s521 = sshll.u32 %s507, 4
          %s522 = int_to_ptr.vmem [resolvable:$true] %s521
          %527 = dma.vmem_to_hbm [thread:$0]  %s522, 512, %s520, %s504, 128, 512, 8
        $region81: #{gpt_forward.13} parent=72 // pred_fallthru
          _
      $region73: #{gpt_forward.13} parent=5 // pred_fallthru
        _
      %p528 = scmp.le.s32.totalorder 2, %s13
      // Predicated region
      $region82: #{gpt_forward.13} parent=5 // pred_check
        %p529 = pneg %p528
      $region83: #{gpt_forward.13} parent=5 // pred_check_branch
        %531 = sbr.rel (%p529) target = $region85
      $region84: #{gpt_forward.13} parent=5 // pred_region
        %s532 = ssub.s32 %s13, 2
        // Predicated region
        $region86: #{gpt_forward.13} parent=84 // pred_check
          %p533 = pneg %p161
        $region87: #{gpt_forward.13} parent=84 // pred_check_branch
          %535 = sbr.rel (%p533) target = $region89
        $region88: #{gpt_forward.13} parent=84 // pred_region
          %s536 = sand.u32 %s146, 1
          %s537 = scalar_lea.sflag [#allocation4], %s536
          %s538 = sand.u32 %s146, 1
          %s539 = smul.addr %s538, 32
          %s540 = scalar_lea.vmem [#allocation3], %s539
          %541 = dma.done %s537, 512
        $region89: #{gpt_forward.13} parent=84 // pred_fallthru
          _
      $region85: #{gpt_forward.13} parent=5 // pred_fallthru
        _
    $region6: #{gpt_forward.13} parent=1 // loop_footer
      %s17 = sadd.s32 1, %s13
    $region7: #{gpt_forward.13} parent=1 // loop_footer_branch
      %12 = sbr.rel target = $region3
    $region8: #{gpt_forward.13} parent=1 // loop_exit
      _
    %542 = vsyncpa [#allocation4], 1
    %s543 = scalar_lea.sflag [#allocation4], 1
    %544 = vsyncpa %s543, 1

// kernel: gpt_forward.9
$region0: #{gpt_forward.9}
  #allocation0 [shape = 'u32[]', space=smem, size = 0x4, offset = 0x4, fixed_abs, tag = 'smem constant byte address 0x4 - core index']
  #allocation1 [shape = 'u32[144,128]{1,0:T(1,128)}', space=vmem, size = 0x12000, scoped, tag = 'internal scratch']
  #allocation2 [shape = 'bf16[32,64]{1,0:T(8,128)(2,1)}', space=vmem, size = 0x2000, scoped, tag = 'scratch operand']
  #allocation3 [shape = 'f32[32,64]{1,0:T(8,128)}', space=vmem, size = 0x4000, scoped, tag = 'scratch operand']
  %s0 = inlined_call_operand.vmem [shape: bf16[2,64,64], index: 0, kind: input, shape index: {}]
  %s1 = inlined_call_operand.vmem [shape: bf16[2,64,64], index: 1, kind: input, shape index: {}]
  %s2 = inlined_call_operand.vmem [shape: bf16[64,64], index: 2, kind: input, shape index: {}]
  %s3 = inlined_call_operand.vmem [shape: bf16[1,64], index: 3, kind: input, shape index: {}]
  %s4 = inlined_call_operand.vmem [shape: bf16[1,64], index: 4, kind: input, shape index: {}]
  %s5 = inlined_call_operand.vmem [shape: bf16[1,64], index: 5, kind: input, shape index: {}]
  %s6 = inlined_call_operand.vmem [shape: bf16[64,256], index: 6, kind: input, shape index: {}]
  %s7 = inlined_call_operand.vmem [shape: bf16[1,256], index: 7, kind: input, shape index: {}]
  %s8 = inlined_call_operand.vmem [shape: bf16[256,64], index: 8, kind: input, shape index: {}]
  %s9 = inlined_call_operand.vmem [shape: bf16[1,64], index: 9, kind: input, shape index: {}]
  %s10 = inlined_call_operand.vmem [shape: bf16[2,64,64], index: 10, kind: output, shape index: {}]
  %s11 = sld [smem:[#allocation0]]
  $region122: #{gpt_forward.9} parent=0
    _
  %s13 = ssub.s32 1, %s11
  %s14 = scalar_select 0, %s13, %s11
  $region1: #{gpt_forward.9} parent=0
    #allocation4 [shape = 'u8[32768]{0}', space=vmem, size = 0x8000, scoped, tag = 'input window, operand 6']
    loop: start=0, step=1, limit=10
    $region2: #{gpt_forward.9} parent=1 // loop_pre_header
      _
    $region3: #{gpt_forward.9} parent=1 // loop_header
      %s16 = sphi 0, %s20
      %p17 = scmp.ge.s32.totalorder %s16, 10
      %s23 = sphi 0, %s42
      %s24 = sphi 0, %s38
      %s25 = sphi 0, %s34
      %s26 = sphi 0, %s23
      %s27 = sphi 0, %s24
      %s28 = sphi 0, %s25
      %s29 = sphi 0, %s26
      %s30 = sphi 0, %s27
      %s31 = sphi 0, %s28
      %s47 = sphi 0, %s49
      %s50 = sphi 0, %s47
      %s51 = sphi 0, %s50
      %s67 = sphi 0, %s51
      %s75 = sphi 0, %s77
      %s78 = sphi 0, %s75
      %s79 = sphi 0, %s78
      %s95 = sphi 0, %s79
      %s99 = sphi 0, %s99
      %s101 = sphi 0, %s99
      %s102 = sphi 0, %s101
      %s116 = sphi 0, %s102
      %s120 = sphi 0, %s120
      %s122 = sphi 0, %s120
      %s123 = sphi 0, %s122
      %s137 = sphi 0, %s123
      %s141 = sphi 0, %s141
      %s143 = sphi 0, %s141
      %s144 = sphi 0, %s143
      %s158 = sphi 0, %s144
      %s162 = sphi 0, %s162
      %s164 = sphi 0, %s162
      %s165 = sphi 0, %s164
      %s179 = sphi 0, %s165
      %s185 = sphi 0, %s187
      %s188 = sphi 0, %s185
      %s189 = sphi 0, %s188
      %s205 = sphi 0, %s189
      %s211 = sphi 0, %s213
      %s214 = sphi 0, %s211
      %s215 = sphi 0, %s214
      %s231 = sphi 0, %s215
      %s237 = sphi 0, %s239
      %s240 = sphi 0, %s237
      %s241 = sphi 0, %s240
      %s257 = sphi 0, %s241
      %s261 = sphi 0, %s261
      %s263 = sphi 0, %s261
      %s264 = sphi 0, %s263
      %s278 = sphi 0, %s264
      %s286 = sphi 0, %s288
      %s289 = sphi 0, %s286
      %s290 = sphi 0, %s289
      %s306 = sphi 0, %s290
    $region4: #{gpt_forward.9} parent=1 // loop_header_branch
      %19 = sbr.rel (%p17) target = $region8
    $region5: #{gpt_forward.9} parent=1 // loop_body
      %s21 = ssub.s32 %s16, 1
      %s22 = ssub.s32 %s16, 2
      %s32 = sadd.s32 1, %s25
      %p33 = scmp.ge.s32.totalorder %s32, 2
      %s34 = scalar_select %p33, 0, %s32
      %s35 = sadd.s32 1, %s24
      %s36 = scalar_select %p33, %s35, %s24
      %p37 = scmp.ge.s32.totalorder %s36, 2
      %s38 = scalar_select %p37, 0, %s36
      %s39 = sadd.s32 1, %s23
      %s40 = scalar_select %p37, %s39, %s23
      %p41 = scmp.ge.s32.totalorder %s40, 2
      %s42 = scalar_select %p41, 0, %s40
      %s43 = ssub.s32 %s23, %s42
      %s44 = ssub.s32 %s24, %s38
      %s45 = sor.u32 %s43, %s44
      %p46 = scmp.eq.s32.totalorder %s45, 0
      %s48 = sadd.s32 %s47, 1
      %s49 = scalar_select %p46, %s47, %s48
      %p52 = pneg %p46
      %p53 = scmp.eq.s32.totalorder %s16, 7
      %p54 = por %p52, %p53
      %p55 = scmp.ne.s32.totalorder %s47, %s50
      %p56 = scmp.eq.s32.totalorder %s16, 0
      %p57 = por %p55, %p56
      %p58 = scmp.ne.s32.totalorder %s47, %s50
      %p59 = scmp.eq.s32.totalorder %s21, 7
      %p60 = por %p58, %p59
      %p61 = scmp.ne.s32.totalorder %s50, %s51
      %p62 = scmp.eq.s32.totalorder %s21, 0
      %p63 = por %p61, %p62
      %p64 = scmp.ne.s32.totalorder %s50, %s51
      %p65 = scmp.eq.s32.totalorder %s22, 7
      %p66 = por %p64, %p65
      %p68 = scmp.ne.s32.totalorder %s51, %s67
      %p69 = scmp.eq.s32.totalorder %s22, 0
      %p70 = por %p68, %p69
      %s71 = ssub.s32 %s23, %s42
      %s72 = ssub.s32 %s24, %s38
      %s73 = sor.u32 %s71, %s72
      %p74 = scmp.eq.s32.totalorder %s73, 0
      %s76 = sadd.s32 %s75, 1
      %s77 = scalar_select %p74, %s75, %s76
      %p80 = pneg %p74
      %p81 = scmp.eq.s32.totalorder %s16, 7
      %p82 = por %p80, %p81
      %p83 = scmp.ne.s32.totalorder %s75, %s78
      %p84 = scmp.eq.s32.totalorder %s16, 0
      %p85 = por %p83, %p84
      %p86 = scmp.ne.s32.totalorder %s75, %s78
      %p87 = scmp.eq.s32.totalorder %s21, 7
      %p88 = por %p86, %p87
      %p89 = scmp.ne.s32.totalorder %s78, %s79
      %p90 = scmp.eq.s32.totalorder %s21, 0
      %p91 = por %p89, %p90
      %p92 = scmp.ne.s32.totalorder %s78, %s79
      %p93 = scmp.eq.s32.totalorder %s22, 7
      %p94 = por %p92, %p93
      %p96 = scmp.ne.s32.totalorder %s79, %s95
      %p97 = scmp.eq.s32.totalorder %s22, 0
      %p98 = por %p96, %p97
      %s100 = sadd.s32 %s99, 1
      %p103 = scmp.eq.s32.totalorder %s16, 7
      %p104 = scmp.ne.s32.totalorder %s99, %s101
      %p105 = scmp.eq.s32.totalorder %s16, 0
      %p106 = por %p104, %p105
      %p107 = scmp.ne.s32.totalorder %s99, %s101
      %p108 = scmp.eq.s32.totalorder %s21, 7
      %p109 = por %p107, %p108
      %p110 = scmp.ne.s32.totalorder %s101, %s102
      %p111 = scmp.eq.s32.totalorder %s21, 0
      %p112 = por %p110, %p111
      %p113 = scmp.ne.s32.totalorder %s101, %s102
      %p114 = scmp.eq.s32.totalorder %s22, 7
      %p115 = por %p113, %p114
      %p117 = scmp.ne.s32.totalorder %s102, %s116
      %p118 = scmp.eq.s32.totalorder %s22, 0
      %p119 = por %p117, %p118
      %s121 = sadd.s32 %s120, 1
      %p124 = scmp.eq.s32.totalorder %s16, 7
      %p125 = scmp.ne.s32.totalorder %s120, %s122
      %p126 = scmp.eq.s32.totalorder %s16, 0
      %p127 = por %p125, %p126
      %p128 = scmp.ne.s32.totalorder %s120, %s122
      %p129 = scmp.eq.s32.totalorder %s21, 7
      %p130 = por %p128, %p129
      %p131 = scmp.ne.s32.totalorder %s122, %s123
      %p132 = scmp.eq.s32.totalorder %s21, 0
      %p133 = por %p131, %p132
      %p134 = scmp.ne.s32.totalorder %s122, %s123
      %p135 = scmp.eq.s32.totalorder %s22, 7
      %p136 = por %p134, %p135
      %p138 = scmp.ne.s32.totalorder %s123, %s137
      %p139 = scmp.eq.s32.totalorder %s22, 0
      %p140 = por %p138, %p139
      %s142 = sadd.s32 %s141, 1
      %p145 = scmp.eq.s32.totalorder %s16, 7
      %p146 = scmp.ne.s32.totalorder %s141, %s143
      %p147 = scmp.eq.s32.totalorder %s16, 0
      %p148 = por %p146, %p147
      %p149 = scmp.ne.s32.totalorder %s141, %s143
      %p150 = scmp.eq.s32.totalorder %s21, 7
      %p151 = por %p149, %p150
      %p152 = scmp.ne.s32.totalorder %s143, %s144
      %p153 = scmp.eq.s32.totalorder %s21, 0
      %p154 = por %p152, %p153
      %p155 = scmp.ne.s32.totalorder %s143, %s144
      %p156 = scmp.eq.s32.totalorder %s22, 7
      %p157 = por %p155, %p156
      %p159 = scmp.ne.s32.totalorder %s144, %s158
      %p160 = scmp.eq.s32.totalorder %s22, 0
      %p161 = por %p159, %p160
      %s163 = sadd.s32 %s162, 1
      %p166 = scmp.eq.s32.totalorder %s16, 7
      %p167 = scmp.ne.s32.totalorder %s162, %s164
      %p168 = scmp.eq.s32.totalorder %s16, 0
      %p169 = por %p167, %p168
      %p170 = scmp.ne.s32.totalorder %s162, %s164
      %p171 = scmp.eq.s32.totalorder %s21, 7
      %p172 = por %p170, %p171
      %p173 = scmp.ne.s32.totalorder %s164, %s165
      %p174 = scmp.eq.s32.totalorder %s21, 0
      %p175 = por %p173, %p174
      %p176 = scmp.ne.s32.totalorder %s164, %s165
      %p177 = scmp.eq.s32.totalorder %s22, 7
      %p178 = por %p176, %p177
      %p180 = scmp.ne.s32.totalorder %s165, %s179
      %p181 = scmp.eq.s32.totalorder %s22, 0
      %p182 = por %p180, %p181
      %s183 = ssub.s32 %s25, %s34
      %p184 = scmp.eq.s32.totalorder %s183, 0
      %s186 = sadd.s32 %s185, 1
      %s187 = scalar_select %p184, %s185, %s186
      %p190 = pneg %p184
      %p191 = scmp.eq.s32.totalorder %s16, 7
      %p192 = por %p190, %p191
      %p193 = scmp.ne.s32.totalorder %s185, %s188
      %p194 = scmp.eq.s32.totalorder %s16, 0
      %p195 = por %p193, %p194
      %p196 = scmp.ne.s32.totalorder %s185, %s188
      %p197 = scmp.eq.s32.totalorder %s21, 7
      %p198 = por %p196, %p197
      %p199 = scmp.ne.s32.totalorder %s188, %s189
      %p200 = scmp.eq.s32.totalorder %s21, 0
      %p201 = por %p199, %p200
      %p202 = scmp.ne.s32.totalorder %s188, %s189
      %p203 = scmp.eq.s32.totalorder %s22, 7
      %p204 = por %p202, %p203
      %p206 = scmp.ne.s32.totalorder %s189, %s205
      %p207 = scmp.eq.s32.totalorder %s22, 0
      %p208 = por %p206, %p207
      %s209 = ssub.s32 %s25, %s34
      %p210 = scmp.eq.s32.totalorder %s209, 0
      %s212 = sadd.s32 %s211, 1
      %s213 = scalar_select %p210, %s211, %s212
      %p216 = pneg %p210
      %p217 = scmp.eq.s32.totalorder %s16, 7
      %p218 = por %p216, %p217
      %p219 = scmp.ne.s32.totalorder %s211, %s214
      %p220 = scmp.eq.s32.totalorder %s16, 0
      %p221 = por %p219, %p220
      %p222 = scmp.ne.s32.totalorder %s211, %s214
      %p223 = scmp.eq.s32.totalorder %s21, 7
      %p224 = por %p222, %p223
      %p225 = scmp.ne.s32.totalorder %s214, %s215
      %p226 = scmp.eq.s32.totalorder %s21, 0
      %p227 = por %p225, %p226
      %p228 = scmp.ne.s32.totalorder %s214, %s215
      %p229 = scmp.eq.s32.totalorder %s22, 7
      %p230 = por %p228, %p229
      %p232 = scmp.ne.s32.totalorder %s215, %s231
      %p233 = scmp.eq.s32.totalorder %s22, 0
      %p234 = por %p232, %p233
      %s235 = ssub.s32 %s25, %s34
      %p236 = scmp.eq.s32.totalorder %s235, 0
      %s238 = sadd.s32 %s237, 1
      %s239 = scalar_select %p236, %s237, %s238
      %p242 = pneg %p236
      %p243 = scmp.eq.s32.totalorder %s16, 7
      %p244 = por %p242, %p243
      %p245 = scmp.ne.s32.totalorder %s237, %s240
      %p246 = scmp.eq.s32.totalorder %s16, 0
      %p247 = por %p245, %p246
      %p248 = scmp.ne.s32.totalorder %s237, %s240
      %p249 = scmp.eq.s32.totalorder %s21, 7
      %p250 = por %p248, %p249
      %p251 = scmp.ne.s32.totalorder %s240, %s241
      %p252 = scmp.eq.s32.totalorder %s21, 0
      %p253 = por %p251, %p252
      %p254 = scmp.ne.s32.totalorder %s240, %s241
      %p255 = scmp.eq.s32.totalorder %s22, 7
      %p256 = por %p254, %p255
      %p258 = scmp.ne.s32.totalorder %s241, %s257
      %p259 = scmp.eq.s32.totalorder %s22, 0
      %p260 = por %p258, %p259
      %s262 = sadd.s32 %s261, 1
      %p265 = scmp.eq.s32.totalorder %s16, 7
      %p266 = scmp.ne.s32.totalorder %s261, %s263
      %p267 = scmp.eq.s32.totalorder %s16, 0
      %p268 = por %p266, %p267
      %p269 = scmp.ne.s32.totalorder %s261, %s263
      %p270 = scmp.eq.s32.totalorder %s21, 7
      %p271 = por %p269, %p270
      %p272 = scmp.ne.s32.totalorder %s263, %s264
      %p273 = scmp.eq.s32.totalorder %s21, 0
      %p274 = por %p272, %p273
      %p275 = scmp.ne.s32.totalorder %s263, %s264
      %p276 = scmp.eq.s32.totalorder %s22, 7
      %p277 = por %p275, %p276
      %p279 = scmp.ne.s32.totalorder %s264, %s278
      %p280 = scmp.eq.s32.totalorder %s22, 0
      %p281 = por %p279, %p280
      %s282 = ssub.s32 %s23, %s42
      %s283 = ssub.s32 %s24, %s38
      %s284 = sor.u32 %s282, %s283
      %p285 = scmp.eq.s32.totalorder %s284, 0
      %s287 = sadd.s32 %s286, 1
      %s288 = scalar_select %p285, %s286, %s287
      %p291 = pneg %p285
      %p292 = scmp.eq.s32.totalorder %s16, 7
      %p293 = por %p291, %p292
      %p294 = scmp.ne.s32.totalorder %s286, %s289
      %p295 = scmp.eq.s32.totalorder %s16, 0
      %p296 = por %p294, %p295
      %p297 = scmp.ne.s32.totalorder %s286, %s289
      %p298 = scmp.eq.s32.totalorder %s21, 7
      %p299 = por %p297, %p298
      %p300 = scmp.ne.s32.totalorder %s289, %s290
      %p301 = scmp.eq.s32.totalorder %s21, 0
      %p302 = por %p300, %p301
      %p303 = scmp.ne.s32.totalorder %s289, %s290
      %p304 = scmp.eq.s32.totalorder %s22, 7
      %p305 = por %p303, %p304
      %p307 = scmp.ne.s32.totalorder %s290, %s306
      %p308 = scmp.eq.s32.totalorder %s22, 0
      %p309 = por %p307, %p308
      %p310 = scmp.le.s32.totalorder 1, %s16
      %p311 = scmp.lt.s32.totalorder %s16, 9
      %p312 = pnand %p310, %p311
      %p313 = pneg %p312
      // Predicated region
      $region9: #{gpt_forward.9} parent=5 // pred_check
        _
      $region10: #{gpt_forward.9} parent=5 // pred_check_branch
        %315 = sbr.rel (%p312) target = $region12
      $region11: #{gpt_forward.9} parent=5 // pred_region
        %s316 = ssub.s32 %s16, 1
        // Predicated region
        $region13: #{gpt_forward.9} parent=11 // pred_check
          %p317 = pneg %p112
        $region14: #{gpt_forward.9} parent=11 // pred_check_branch
          %319 = sbr.rel (%p317) target = $region16
        $region15: #{gpt_forward.9} parent=11 // pred_region
          _
        $region16: #{gpt_forward.9} parent=11 // pred_fallthru
          _
        // Predicated region
        $region17: #{gpt_forward.9} parent=11 // pred_check
          %p320 = pneg %p133
        $region18: #{gpt_forward.9} parent=11 // pred_check_branch
          %322 = sbr.rel (%p320) target = $region20
        $region19: #{gpt_forward.9} parent=11 // pred_region
          _
        $region20: #{gpt_forward.9} parent=11 // pred_fallthru
          _
        // Predicated region
        $region21: #{gpt_forward.9} parent=11 // pred_check
          %p323 = pneg %p154
        $region22: #{gpt_forward.9} parent=11 // pred_check_branch
          %325 = sbr.rel (%p323) target = $region24
        $region23: #{gpt_forward.9} parent=11 // pred_region
          _
        $region24: #{gpt_forward.9} parent=11 // pred_fallthru
          _
        // Predicated region
        $region25: #{gpt_forward.9} parent=11 // pred_check
          %p326 = pneg %p175
        $region26: #{gpt_forward.9} parent=11 // pred_check_branch
          %328 = sbr.rel (%p326) target = $region28
        $region27: #{gpt_forward.9} parent=11 // pred_region
          _
        $region28: #{gpt_forward.9} parent=11 // pred_fallthru
          _
        // Predicated region
        $region29: #{gpt_forward.9} parent=11 // pred_check
          %p329 = pneg %p274
        $region30: #{gpt_forward.9} parent=11 // pred_check_branch
          %331 = sbr.rel (%p329) target = $region32
        $region31: #{gpt_forward.9} parent=11 // pred_region
          _
        $region32: #{gpt_forward.9} parent=11 // pred_fallthru
          _
      $region12: #{gpt_forward.9} parent=5 // pred_fallthru
        _
      %p332 = scmp.lt.s32.totalorder %s16, 8
      // Predicated region
      $region33: #{gpt_forward.9} parent=5 // pred_check
        %p333 = pneg %p332
      $region34: #{gpt_forward.9} parent=5 // pred_check_branch
        %335 = sbr.rel (%p333) target = $region36
      $region35: #{gpt_forward.9} parent=5 // pred_region
        // Predicated region
        $region37: #{gpt_forward.9} parent=35 // pred_check
          %p336 = pneg %p57
        $region38: #{gpt_forward.9} parent=35 // pred_check_branch
          %338 = sbr.rel (%p336) target = $region40
        $region39: #{gpt_forward.9} parent=35 // pred_region
          %s339 = smul.u32 4, %s24
          %p340 = scmp.lt.s32.totalorder %s23, 1
          %s341 = scalar_select %p340, %s23, 1
          %p342 = scmp.lt.s32.totalorder %s339, 7
          %s343 = scalar_select %p342, %s339, 7
          %s344 = smul.addr %s341, 8
          %s345 = sadd.s32 %s343, %s344
          %s346 = smul.addr %s345, 4
          %s347 = scalar_lea.vmem %s0, %s346
          %s348 = smul.u32 4, %s24
        $region40: #{gpt_forward.9} parent=35 // pred_fallthru
          _
        // Predicated region
        $region41: #{gpt_forward.9} parent=35 // pred_check
          %p349 = pneg %p85
        $region42: #{gpt_forward.9} parent=35 // pred_check_branch
          %351 = sbr.rel (%p349) target = $region44
        $region43: #{gpt_forward.9} parent=35 // pred_region
          %s352 = smul.u32 4, %s24
          %p353 = scmp.lt.s32.totalorder %s23, 1
          %s354 = scalar_select %p353, %s23, 1
          %p355 = scmp.lt.s32.totalorder %s352, 7
          %s356 = scalar_select %p355, %s352, 7
          %s357 = smul.addr %s354, 8
          %s358 = sadd.s32 %s356, %s357
          %s359 = smul.addr %s358, 4
          %s360 = scalar_lea.vmem %s1, %s359
          %s361 = smul.u32 4, %s24
        $region44: #{gpt_forward.9} parent=35 // pred_fallthru
          _
        // Predicated region
        $region45: #{gpt_forward.9} parent=35 // pred_check
          %p362 = pneg %p195
        $region46: #{gpt_forward.9} parent=35 // pred_check_branch
          %364 = sbr.rel (%p362) target = $region48
        $region47: #{gpt_forward.9} parent=35 // pred_region
          %s365 = sand.u32 %s185, 1
          %s366 = sand.u32 %s185, 1
          %s367 = smul.addr %s366, 32
          %s368 = scalar_lea.vmem [#allocation4], %s367
          %s369 = smul.addr %s25, 4
          %s370 = scalar_lea.vmem %s6, %s369
          // Predicated region
          $region49: #{gpt_forward.9} parent=47 // pred_check
            _
          $region50: #{gpt_forward.9} parent=47 // pred_check_branch
            %372 = sbr.rel (0) target = $region52
          $region51: #{gpt_forward.9} parent=47 // pred_region
            // Predicated region
            $region53: #{gpt_forward.9} parent=51 // pred_check
              _
            $region54: #{gpt_forward.9} parent=51 // pred_check_branch
              %374 = sbr.rel target = $region56
            $region55: #{gpt_forward.9} parent=51 // pred_region
              // Predicated region
              $region68: #{gpt_forward.9} parent=55 // pred_check
                _
              $region69: #{gpt_forward.9} parent=55 // pred_check_branch
                %404 = sbr.rel (0) target = $region71
              $region70: #{gpt_forward.9} parent=55 // pred_region
                loop: start=0, step=1, limit=1
                $region72: #{gpt_forward.9} parent=70 // loop_pre_header
                  _
                $region73: #{gpt_forward.9} parent=70 // loop_header
                  %s406 = sphi 0, %s410
                  %p407 = scmp.ge.s32.totalorder %s406, 1
                  %s411 = sphi %s370, %s370
                  %s412 = sphi %s368, %s368
                $region74: #{gpt_forward.9} parent=70 // loop_header_branch
                  %409 = sbr.rel (%p407) target = $region78
                $region75: #{gpt_forward.9} parent=70 // loop_body
                  _
                $region76: #{gpt_forward.9} parent=70 // loop_footer
                  %s410 = sadd.s32 1, %s406
                $region77: #{gpt_forward.9} parent=70 // loop_footer_branch
                  %405 = sbr.rel target = $region73
                $region78: #{gpt_forward.9} parent=70 // loop_exit
                  _
                %s414 = ssub.s32 16, 1
                loop: start=0, step=1, limit=1
                $region79: #{gpt_forward.9} parent=70 // loop_pre_header
                  _
                $region80: #{gpt_forward.9} parent=70 // loop_header
                  %s416 = sphi 0, %s420
                  %p417 = scmp.ge.s32.totalorder %s416, 1
                  %s421 = sphi %s370, %s370
                  %s422 = sphi %s368, %s368
                $region81: #{gpt_forward.9} parent=70 // loop_header_branch
                  %419 = sbr.rel (%p417) target = $region85
                $region82: #{gpt_forward.9} parent=70 // loop_body
                  %v423 = vld [vmem:[%s421] sm:%s414]
                  %424 = vst [vmem:[%s422] sm:%s414] %v423
                  %v425 = vld [vmem:[%s421 + $0x8] sm:%s414]
                  %426 = vst [vmem:[%s422 + $0x4] sm:%s414] %v425
                  %v427 = vld [vmem:[%s421 + $0x10] sm:%s414]
                  %428 = vst [vmem:[%s422 + $0x8] sm:%s414] %v427
                  %v429 = vld [vmem:[%s421 + $0x18] sm:%s414]
                  %430 = vst [vmem:[%s422 + $0xc] sm:%s414] %v429
                  %v431 = vld [vmem:[%s421 + $0x20] sm:%s414]
                  %432 = vst [vmem:[%s422 + $0x10] sm:%s414] %v431
                  %v433 = vld [vmem:[%s421 + $0x28] sm:%s414]
                  %434 = vst [vmem:[%s422 + $0x14] sm:%s414] %v433
                  %v435 = vld [vmem:[%s421 + $0x30] sm:%s414]
                  %436 = vst [vmem:[%s422 + $0x18] sm:%s414] %v435
                  %v437 = vld [vmem:[%s421 + $0x38] sm:%s414]
                  %438 = vst [vmem:[%s422 + $0x1c] sm:%s414] %v437
                $region83: #{gpt_forward.9} parent=70 // loop_footer
                  %s420 = sadd.s32 1, %s416
                $region84: #{gpt_forward.9} parent=70 // loop_footer_branch
                  %415 = sbr.rel target = $region80
                $region85: #{gpt_forward.9} parent=70 // loop_exit
                  _
              $region71: #{gpt_forward.9} parent=55 // pred_fallthru
                _
            $region56: #{gpt_forward.9} parent=51 // pred_fallthru
              _
            // Predicated region
            $region57: #{gpt_forward.9} parent=51 // pred_check
              _
            $region58: #{gpt_forward.9} parent=51 // pred_check_branch
              %376 = sbr.rel (0) target = $region60
            $region59: #{gpt_forward.9} parent=51 // pred_region
              %s378 = ssub.s32 16, 1
              loop: start=0, step=1, limit=1
              $region61: #{gpt_forward.9} parent=59 // loop_pre_header
                _
              $region62: #{gpt_forward.9} parent=59 // loop_header
                %s380 = sphi 0, %s384
                %p381 = scmp.ge.s32.totalorder %s380, 1
                %s385 = sphi %s370, %s370
                %s386 = sphi %s368, %s368
              $region63: #{gpt_forward.9} parent=59 // loop_header_branch
                %383 = sbr.rel (%p381) target = $region67
              $region64: #{gpt_forward.9} parent=59 // loop_body
                %v387 = vld [vmem:[%s385] sm:%s378]
                %388 = vst [vmem:[%s386] sm:%s378] %v387
                %v389 = vld [vmem:[%s385 + $0x8] sm:%s378]
                %390 = vst [vmem:[%s386 + $0x4] sm:%s378] %v389
                %v391 = vld [vmem:[%s385 + $0x10] sm:%s378]
                %392 = vst [vmem:[%s386 + $0x8] sm:%s378] %v391
                %v393 = vld [vmem:[%s385 + $0x18] sm:%s378]
                %394 = vst [vmem:[%s386 + $0xc] sm:%s378] %v393
                %v395 = vld [vmem:[%s385 + $0x20] sm:%s378]
                %396 = vst [vmem:[%s386 + $0x10] sm:%s378] %v395
                %v397 = vld [vmem:[%s385 + $0x28] sm:%s378]
                %398 = vst [vmem:[%s386 + $0x14] sm:%s378] %v397
                %v399 = vld [vmem:[%s385 + $0x30] sm:%s378]
                %400 = vst [vmem:[%s386 + $0x18] sm:%s378] %v399
                %v401 = vld [vmem:[%s385 + $0x38] sm:%s378]
                %402 = vst [vmem:[%s386 + $0x1c] sm:%s378] %v401
              $region65: #{gpt_forward.9} parent=59 // loop_footer
                %s384 = sadd.s32 1, %s380
              $region66: #{gpt_forward.9} parent=59 // loop_footer_branch
                %379 = sbr.rel target = $region62
              $region67: #{gpt_forward.9} parent=59 // loop_exit
                _
            $region60: #{gpt_forward.9} parent=51 // pred_fallthru
              _
          $region52: #{gpt_forward.9} parent=47 // pred_fallthru
            _
          %439 = vnop
        $region48: #{gpt_forward.9} parent=35 // pred_fallthru
          _
        // Predicated region
        $region86: #{gpt_forward.9} parent=35 // pred_check
          %p440 = pneg %p221
        $region87: #{gpt_forward.9} parent=35 // pred_check_branch
          %442 = sbr.rel (%p440) target = $region89
        $region88: #{gpt_forward.9} parent=35 // pred_region
          %p443 = scmp.lt.s32.totalorder %s25, 1
          %s444 = scalar_select %p443, %s25, 1
          %s445 = scalar_lea.vmem %s7, %s444
        $region89: #{gpt_forward.9} parent=35 // pred_fallthru
          _
        // Predicated region
        $region90: #{gpt_forward.9} parent=35 // pred_check
          %p446 = pneg %p247
        $region91: #{gpt_forward.9} parent=35 // pred_check_branch
          %448 = sbr.rel (%p446) target = $region93
        $region92: #{gpt_forward.9} parent=35 // pred_region
          %s449 = smul.u32 16, %s25
          %p450 = scmp.lt.s32.totalorder %s449, 31
          %s451 = scalar_select %p450, %s449, 31
          %s452 = smul.addr %s451, 4
          %s453 = scalar_lea.vmem %s8, %s452
          %s454 = smul.u32 16, %s25
        $region93: #{gpt_forward.9} parent=35 // pred_fallthru
          _
      $region36: #{gpt_forward.9} parent=5 // pred_fallthru
        _
      %p455 = scmp.le.s32.totalorder 1, %s16
      %p456 = scmp.lt.s32.totalorder %s16, 9
      %p457 = pnand %p455, %p456
      %p458 = pneg %p457
      // Predicated region
      $region94: #{gpt_forward.9} parent=5 // pred_check
        _
      $region95: #{gpt_forward.9} parent=5 // pred_check_branch
        %460 = sbr.rel (%p457) target = $region97
      $region96: #{gpt_forward.9} parent=5 // pred_region
        %s461 = ssub.s32 %s16, 1
        %s462 = sand.u32 %s188, 1
        %s463 = sand.u32 %s188, 1
        %s464 = smul.addr %s463, 32
        %s465 = scalar_lea.vmem [#allocation4], %s464
        // Predicated region
        $region98: #{gpt_forward.9} parent=96 // pred_check
          %p466 = pneg %p201
        $region99: #{gpt_forward.9} parent=96 // pred_check_branch
          %468 = sbr.rel (%p466) target = $region101
        $region100: #{gpt_forward.9} parent=96 // pred_region
          _
        $region101: #{gpt_forward.9} parent=96 // pred_fallthru
          _
        %s469 = smul.u32 4, %s27
        %p470 = scmp.lt.s32.totalorder %s26, 1
        %s471 = scalar_select %p470, %s26, 1
        %p472 = scmp.lt.s32.totalorder %s469, 7
        %s473 = scalar_select %p472, %s469, 7
        %s474 = smul.addr %s471, 8
        %s475 = sadd.s32 %s473, %s474
        %s476 = smul.addr %s475, 4
        %s477 = scalar_lea.vmem %s0, %s476
        %p478 = pneg %p63
        %p479 = pneg %p60
        %s480 = smul.u32 4, %s27
        %p481 = scmp.lt.s32.totalorder %s26, 1
        %s482 = scalar_select %p481, %s26, 1
        %p483 = scmp.lt.s32.totalorder %s480, 7
        %s484 = scalar_select %p483, %s480, 7
        %s485 = smul.addr %s482, 8
        %s486 = sadd.s32 %s484, %s485
        %s487 = smul.addr %s486, 4
        %s488 = scalar_lea.vmem %s1, %s487
        %p489 = pneg %p91
        %p490 = pneg %p88
        %p491 = pneg %p112
        %p492 = pneg %p109
        %p493 = pneg %p133
        %p494 = pneg %p130
        %p495 = pneg %p154
        %p496 = pneg %p151
        %p497 = pneg %p175
        %p498 = pneg %p172
        %s499 = sand.u32 %s188, 1
        %s500 = sand.u32 %s188, 1
        %s501 = smul.addr %s500, 32
        %s502 = scalar_lea.vmem [#allocation4], %s501
        %p503 = pneg %p201
        %p504 = pneg %p198
        %p505 = scmp.lt.s32.totalorder %s28, 1
        %s506 = scalar_select %p505, %s28, 1
        %s507 = scalar_lea.vmem %s7, %s506
        %p508 = pneg %p227
        %p509 = pneg %p224
        %s510 = smul.u32 16, %s28
        %p511 = scmp.lt.s32.totalorder %s510, 31
        %s512 = scalar_select %p511, %s510, 31
        %s513 = smul.addr %s512, 4
        %s514 = scalar_lea.vmem %s8, %s513
        %p515 = pneg %p253
        %p516 = pneg %p250
        %p517 = pneg %p274
        %p518 = pneg %p271
        %p519 = pneg %p302
        %p520 = pneg %p299
        %s521 = smul.u32 4, %s27
        %p522 = scmp.lt.s32.totalorder %s26, 1
        %s523 = scalar_select %p522, %s26, 1
        %p524 = scmp.lt.s32.totalorder %s521, 7
        %s525 = scalar_select %p524, %s521, 7
        %s526 = smul.addr %s523, 8
        %s527 = sadd.s32 %s525, %s526
        %s528 = smul.addr %s527, 4
        %s529 = scalar_lea.vmem %s10, %s528
        %s530 = smul.u32 4, %s27
        %p531 = scmp.lt.s32.totalorder %s26, 1
        %s532 = scalar_select %p531, %s26, 1
        %p533 = scmp.lt.s32.totalorder %s530, 7
        %s534 = scalar_select %p533, %s530, 7
        %s535 = smul.addr %s532, 8
        %s536 = sadd.s32 %s534, %s535
        %s537 = smul.addr %s536, 4
        %s538 = scalar_lea.vmem %s0, %s537
        %s539 = smul.u32 4, %s27
        %s540 = smul.u32 4, %s27
        %p541 = scmp.lt.s32.totalorder %s26, 1
        %s542 = scalar_select %p541, %s26, 1
        %p543 = scmp.lt.s32.totalorder %s540, 7
        %s544 = scalar_select %p543, %s540, 7
        %s545 = smul.addr %s542, 8
        %s546 = sadd.s32 %s544, %s545
        %s547 = smul.addr %s546, 4
        %s548 = scalar_lea.vmem %s1, %s547
        %s549 = smul.u32 4, %s27
        %p550 = scmp.lt.s32.totalorder %s28, 1
        %s551 = scalar_select %p550, %s28, 1
        %s552 = scalar_lea.vmem %s7, %s551
        %s553 = smul.u32 16, %s28
        %p554 = scmp.lt.s32.totalorder %s553, 31
        %s555 = scalar_select %p554, %s553, 31
        %s556 = smul.addr %s555, 4
        %s557 = scalar_lea.vmem %s8, %s556
        %s558 = smul.u32 16, %s28
        %s559 = smul.u32 4, %s27
        %p560 = scmp.lt.s32.totalorder %s26, 1
        %s561 = scalar_select %p560, %s26, 1
        %p562 = scmp.lt.s32.totalorder %s559, 7
        %s563 = scalar_select %p562, %s559, 7
        %s564 = smul.addr %s561, 8
        %s565 = sadd.s32 %s563, %s564
        %s566 = smul.addr %s565, 4
        %s567 = scalar_lea.vmem %s10, %s566
        %s568 = smul.u32 4, %s27
        %p570 = scmp.eq.s32.totalorder %s28, 0
        // Predicated region
        $region102: #{gpt_forward.9} parent=96 // pred_check
          %p571 = pneg %p570
        $region103: #{gpt_forward.9} parent=96 // pred_check_branch
          %573 = sbr.rel (%p571) target = $region105
        $region104: #{gpt_forward.9} parent=96 // pred_region
          %v574 = vld [vmem:[%s538] sm:$0xf]
          %v575 = vld [vmem:[%s538 + $0x4] sm:$0xf]
          %v576 = vld [vmem:[%s538 + $0x8] sm:$0xf]
          %v577 = vld [vmem:[%s538 + $0xc] sm:$0xf]
          %v578 = vld [vmem:[%s2] sm:$0xf]
          %v579 = vld [vmem:[%s2 + $0x4] sm:$0xf]
          %v580 = vld [vmem:[%s2 + $0x8] sm:$0xf]
          %v581 = vld [vmem:[%s2 + $0xc] sm:$0xf]
          %v582 = vld [vmem:[%s2 + $0x10] sm:$0xf]
          %v583 = vld [vmem:[%s2 + $0x14] sm:$0xf]
          %v584 = vld [vmem:[%s2 + $0x18] sm:$0xf]
          %v585 = vld [vmem:[%s2 + $0x1c] sm:$0xf]
          %v586 = vld [vmem:[%s3] sm:$0x1]
          %v587 = vunpack.c.l.bf16 %v586
          %v588 = vlaneseq
          %v589 = vshrl.u32 %v588, 7
          %v590 = vsub.s32 0, %v589
          %v591 = vrot.slane %v587, %v590
          %v596 = vunpack.c.l.b16 %v574
          %v597 = vunpack.c.l.b16 %v575
          %v598 = vunpack.c.l.b16 %v576
          %v599 = vunpack.c.l.b16 %v577
          %v600 = vpack.c.b16 %v597, %v596
          %v601 = vpack.c.b16 %v599, %v598
          %v610 = vunpack.c.l.b16 %v578
          %v611 = vunpack.c.l.b16 %v579
          %v612 = vunpack.c.l.b16 %v580
          %v613 = vunpack.c.l.b16 %v581
          %v614 = vunpack.c.l.b16 %v582
          %v615 = vunpack.c.l.b16 %v583
          %v616 = vunpack.c.l.b16 %v584
          %v617 = vunpack.c.l.b16 %v585
          %v618 = vpack.c.b16 %v611, %v610
          %v619 = vpack.c.b16 %v613, %v612
          %v620 = vpack.c.b16 %v615, %v614
          %v621 = vpack.c.b16 %v617, %v616
          %vm626 = vcmask 523264
          %v628 = vsel %vm626, %v600, 0
          %v631 = vsel %vm626, %v601, 0
          %633 = vmatprep.subr.bf16.mxu0 0
          %634 = vmatpush1.bf16.msra.mxu0 0
          %635 = vmatprep.subr.bf16.mxu0 0
          %636 = vmatpush1.bf16.msra.mxu0 0
          %637 = vmatprep.subr.bf16.mxu0 0
          %638 = vmatpush1.bf16.msra.mxu0 0
          %639 = vmatprep.subr.bf16.mxu0 0
          %640 = vmatpush1.bf16.msra.mxu0 0
          %641 = vmatprep.subr.bf16.mxu0 0
          %642 = vmatpush1.bf16.msra.mxu0 %v621
          %643 = vmatprep.subr.bf16.mxu0 0
          %644 = vmatpush1.bf16.msra.mxu0 %v620
          %645 = vmatprep.subr.bf16.mxu0 0
          %646 = vmatpush1.bf16.msra.mxu0 %v619
          %647 = vmatprep.subr.bf16.mxu0 0
          %648 = vmatpush1.bf16.msra.mxu0 %v618
          %649 = vmatprep.subr.bf16.mxu0 0
          %650 = vmatpush2.bf16.msra.mxu0 0
          %651 = vmatprep.subr.bf16.mxu0 0
          %652 = vmatpush2.bf16.msra.mxu0 0
          %653 = vmatprep.subr.bf16.mxu0 0
          %654 = vmatpush2.bf16.msra.mxu0 0
          %655 = vmatprep.subr.bf16.mxu0 0
          %656 = vmatpush2.bf16.msra.mxu0 0
          %657 = vmatprep.subr.bf16.mxu0 0
          %658 = vmatpush2.bf16.msra.mxu0 0
          %659 = vmatprep.subr.bf16.mxu0 0
          %660 = vmatpush2.bf16.msra.mxu0 0
          %661 = vmatprep.subr.bf16.mxu0 0
          %662 = vmatpush2.bf16.msra.mxu0 0
          %663 = vmatprep.subr.bf16.mxu0 0
          %664 = vmatpush2.bf16.msra.mxu0 0
          %665 = vmatprep.mubr.bf16.mxu0 0
          %666 = vmatmul.mubr.bf16.gmra.mxu0 %v628
          %v667 = vpop.f32.mrf.mxu0
          %v668 = vadd.f32 %v591, %v667
          %v669 = vpop.f32.mrf.mxu0
          %v670 = vpop.f32.mrf.mxu0
          %v671 = vadd.f32 %v591, %v670
          %v672 = vpop.f32.mrf.mxu0
          %673 = vmatprep.mubr.bf16.mxu0 0
          %674 = vmatmul.mubr.bf16.gmra.mxu0 %v631
          %v675 = vpop.f32.mrf.mxu0
          %v676 = vadd.f32 %v591, %v675
          %v677 = vpop.f32.mrf.mxu0
          %v678 = vpop.f32.mrf.mxu0
          %v679 = vadd.f32 %v591, %v678
          %v680 = vpop.f32.mrf.mxu0
          %681 = vdwg.mxu0
          %v682 = vld [vmem:[%s548] sm:$0xf]
          %v683 = vld [vmem:[%s548 + $0x4] sm:$0xf]
          %v684 = vld [vmem:[%s548 + $0x8] sm:$0xf]
          %v685 = vld [vmem:[%s548 + $0xc] sm:$0xf]
          %v686 = vunpack.c.l.bf16 %v682
          %v687 = vunpack.c.l.bf16 %v683
          %v688 = vunpack.c.l.bf16 %v684
          %v689 = vunpack.c.l.bf16 %v685
          %v690 = vadd.f32 %v686, %v668
          %v691 = vadd.f32 %v687, %v671
          %v692 = vadd.f32 %v688, %v676
          %v693 = vadd.f32 %v689, %v679
          %v694 = vld [vmem:[%s4] sm:$0x1]
          %v695 = vld [vmem:[%s5] sm:$0x1]
          %v696 = vsel %vm626, %v690, 0.0
          %697 = vadd.xlane.f32.xlu0 %v696
          %v698 = vpop.xlane.xlu0 %697
          %v699 = vsel %vm626, %v691, 0.0
          %700 = vadd.xlane.f32.xlu0 %v699
          %v701 = vpop.xlane.xlu0 %700
          %v702 = vsel %vm626, %v692, 0.0
          %703 = vadd.xlane.f32.xlu0 %v702
          %v704 = vpop.xlane.xlu0 %703
          %v705 = vsel %vm626, %v693, 0.0
          %706 = vadd.xlane.f32.xlu0 %v705
          %v707 = vpop.xlane.xlu0 %706
          %v708 = vrcp.pop 64.0
          %v709 = vmul.f32 %v698, %v708
          %v710 = vmul.f32 %v701, %v708
          %v711 = vmul.f32 %v704, %v708
          %v712 = vmul.f32 %v707, %v708
          %v713 = vsub.f32 %v690, %v709
          %v714 = vsub.f32 %v691, %v710
          %v715 = vsub.f32 %v692, %v711
          %v716 = vsub.f32 %v693, %v712
          %v717 = vmul.f32 %v713, %v713
          %v718 = vmul.f32 %v714, %v714
          %v719 = vmul.f32 %v715, %v715
          %v720 = vmul.f32 %v716, %v716
          %v721 = vsel %vm626, %v717, 0.0
          %722 = vadd.xlane.f32.xlu0 %v721
          %v723 = vpop.xlane.xlu0 %722
          %v724 = vsel %vm626, %v718, 0.0
          %725 = vadd.xlane.f32.xlu0 %v724
          %v726 = vpop.xlane.xlu0 %725
          %v727 = vsel %vm626, %v719, 0.0
          %728 = vadd.xlane.f32.xlu0 %v727
          %v729 = vpop.xlane.xlu0 %728
          %v730 = vsel %vm626, %v720, 0.0
          %731 = vadd.xlane.f32.xlu0 %v730
          %v732 = vpop.xlane.xlu0 %731
          %v733 = vmul.f32 %v723, %v708
          %v734 = vmul.f32 %v726, %v708
          %v735 = vmul.f32 %v729, %v708
          %v736 = vmul.f32 %v732, %v708
          %v737 = vadd.f32 %v733, 1e-05
          %v738 = vadd.f32 %v734, 1e-05
          %v739 = vadd.f32 %v735, 1e-05
          %v740 = vadd.f32 %v736, 1e-05
          %v741 = vrsqrt.pop %v737
          %v742 = vrsqrt.pop %v738
          %v743 = vrsqrt.pop %v739
          %v744 = vrsqrt.pop %v740
          %v745 = vmul.f32 %v713, %v741
          %v746 = vmul.f32 %v714, %v742
          %v747 = vmul.f32 %v715, %v743
          %v748 = vmul.f32 %v716, %v744
          %v749 = vunpack.c.l.bf16 %v694
          %v750 = vlaneseq
          %v751 = vshrl.u32 %v750, 7
          %v752 = vsub.s32 0, %v751
          %v753 = vrot.slane %v749, %v752
          %v754 = vmul.f32 %v745, %v753
          %v755 = vmul.f32 %v746, %v753
          %v756 = vmul.f32 %v747, %v753
          %v757 = vmul.f32 %v748, %v753
          %v758 = vunpack.c.l.bf16 %v695
          %v759 = vlaneseq
          %v760 = vshrl.u32 %v759, 7
          %v761 = vsub.s32 0, %v760
          %v762 = vrot.slane %v758, %v761
          %v763 = vadd.f32 %v754, %v762
          %v764 = vadd.f32 %v755, %v762
          %v765 = vadd.f32 %v756, %v762
          %v766 = vadd.f32 %v757, %v762
          %v767 = vpack.c.bf16 %v764, %v763
          %v768 = vpack.c.bf16 %v766, %v765
          %v771 = vunpack.c.l.b16 %v767
          %v772 = vunpack.c.h.b16 %v767
          %v773 = vunpack.c.l.b16 %v768
          %v774 = vunpack.c.h.b16 %v768
          %v775 = vpack.c.b16 %v771, %v771
          %v776 = vpack.c.b16 %v772, %v772
          %v777 = vpack.c.b16 %v773, %v773
          %v778 = vpack.c.b16 %v774, %v774
          %vm783 = vcmask 519168
          %784 = vst.msk [vmem:[#allocation2] sm:$0xf] %vm783, %v775
          %785 = vst.msk [vmem:[#allocation2 + $0x4] sm:$0xf] %vm783, %v776
          %786 = vst.msk [vmem:[#allocation2 + $0x8] sm:$0xf] %vm783, %v777
          %787 = vst.msk [vmem:[#allocation2 + $0xc] sm:$0xf] %vm783, %v778
          %v788 = vld [vmem:[%s9] sm:$0x1]
          %v789 = vunpack.c.l.bf16 %v788
          %v790 = vlaneseq
          %v791 = vshrl.u32 %v790, 7
          %v792 = vsub.s32 0, %v791
          %v793 = vrot.slane %v789, %v792
          %v794 = vadd.f32 %v690, %v793
          %v795 = vadd.f32 %v691, %v793
          %v796 = vadd.f32 %v692, %v793
          %v797 = vadd.f32 %v693, %v793
          %798 = vst.msk [vmem:[#allocation3] sm:$0xff] %vm626, %v794
          %799 = vst.msk [vmem:[#allocation3 + $0x8] sm:$0xff] %vm626, %v795
          %800 = vst.msk [vmem:[#allocation3 + $0x10] sm:$0xff] %vm626, %v796
          %801 = vst.msk [vmem:[#allocation3 + $0x18] sm:$0xff] %vm626, %v797
        $region105: #{gpt_forward.9} parent=96 // pred_fallthru
          _
        %v802 = vld [vmem:[#allocation2] sm:$0xf]
        %v803 = vld [vmem:[#allocation2 + $0x4] sm:$0xf]
        %v804 = vld [vmem:[#allocation2 + $0x8] sm:$0xf]
        %v805 = vld [vmem:[#allocation2 + $0xc] sm:$0xf]
        %v806 = vld [vmem:[%s465] sm:$0xf]
        %v807 = vld [vmem:[%s465 + $0x4] sm:$0xf]
        %v808 = vld [vmem:[%s465 + $0x8] sm:$0xf]
        %v809 = vld [vmem:[%s465 + $0xc] sm:$0xf]
        %v810 = vld [vmem:[%s465 + $0x10] sm:$0xf]
        %v811 = vld [vmem:[%s465 + $0x14] sm:$0xf]
        %v812 = vld [vmem:[%s465 + $0x18] sm:$0xf]
        %v813 = vld [vmem:[%s465 + $0x1c] sm:$0xf]
        %v814 = vld [vmem:[%s552] sm:$0x1]
        %v815 = vunpack.c.l.bf16 %v814
        %v816 = vlaneseq
        %v817 = vshrl.u32 %v816, 7
        %v818 = vsub.s32 0, %v817
        %v819 = vrot.slane %v815, %v818
        %v824 = vunpack.c.l.b16 %v802
        %v825 = vunpack.c.l.b16 %v803
        %v826 = vunpack.c.l.b16 %v804
        %v827 = vunpack.c.l.b16 %v805
        %v828 = vpack.c.b16 %v825, %v824
        %v829 = vpack.c.b16 %v827, %v826
        %v838 = vunpack.c.l.b16 %v806
        %v839 = vunpack.c.l.b16 %v807
        %v840 = vunpack.c.l.b16 %v808
        %v841 = vunpack.c.l.b16 %v809
        %v842 = vunpack.c.l.b16 %v810
        %v843 = vunpack.c.l.b16 %v811
        %v844 = vunpack.c.l.b16 %v812
        %v845 = vunpack.c.l.b16 %v813
        %v846 = vpack.c.b16 %v839, %v838
        %v847 = vpack.c.b16 %v841, %v840
        %v848 = vpack.c.b16 %v843, %v842
        %v849 = vpack.c.b16 %v845, %v844
        %vm854 = vcmask 523264
        %v856 = vsel %vm854, %v828, 0
        %v859 = vsel %vm854, %v829, 0
        %861 = vmatprep.subr.bf16.mxu0 0
        %862 = vmatpush1.bf16.msra.mxu0 0
        %863 = vmatprep.subr.bf16.mxu0 0
        %864 = vmatpush1.bf16.msra.mxu0 0
        %865 = vmatprep.subr.bf16.mxu0 0
        %866 = vmatpush1.bf16.msra.mxu0 0
        %867 = vmatprep.subr.bf16.mxu0 0
        %868 = vmatpush1.bf16.msra.mxu0 0
        %869 = vmatprep.subr.bf16.mxu0 0
        %870 = vmatpush1.bf16.msra.mxu0 %v849
        %871 = vmatprep.subr.bf16.mxu0 0
        %872 = vmatpush1.bf16.msra.mxu0 %v848
        %873 = vmatprep.subr.bf16.mxu0 0
        %874 = vmatpush1.bf16.msra.mxu0 %v847
        %875 = vmatprep.subr.bf16.mxu0 0
        %876 = vmatpush1.bf16.msra.mxu0 %v846
        %877 = vmatprep.subr.bf16.mxu0 0
        %878 = vmatpush2.bf16.msra.mxu0 0
        %879 = vmatprep.subr.bf16.mxu0 0
        %880 = vmatpush2.bf16.msra.mxu0 0
        %881 = vmatprep.subr.bf16.mxu0 0
        %882 = vmatpush2.bf16.msra.mxu0 0
        %883 = vmatprep.subr.bf16.mxu0 0
        %884 = vmatpush2.bf16.msra.mxu0 0
        %885 = vmatprep.subr.bf16.mxu0 0
        %886 = vmatpush2.bf16.msra.mxu0 0
        %887 = vmatprep.subr.bf16.mxu0 0
        %888 = vmatpush2.bf16.msra.mxu0 0
        %889 = vmatprep.subr.bf16.mxu0 0
        %890 = vmatpush2.bf16.msra.mxu0 0
        %891 = vmatprep.subr.bf16.mxu0 0
        %892 = vmatpush2.bf16.msra.mxu0 0
        %893 = vmatprep.mubr.bf16.mxu0 0
        %894 = vmatmul.mubr.bf16.gmra.mxu0 %v856
        %v895 = vpop.f32.mrf.mxu0
        %v896 = vadd.f32 %v819, %v895
        %v897 = vpop.f32.mrf.mxu0
        %v898 = vpop.f32.mrf.mxu0
        %v899 = vadd.f32 %v819, %v898
        %v900 = vpop.f32.mrf.mxu0
        %901 = vmatprep.mubr.bf16.mxu0 0
        %902 = vmatmul.mubr.bf16.gmra.mxu0 %v859
        %v903 = vpop.f32.mrf.mxu0
        %v904 = vadd.f32 %v819, %v903
        %v905 = vpop.f32.mrf.mxu0
        %v906 = vpop.f32.mrf.mxu0
        %v907 = vadd.f32 %v819, %v906
        %v908 = vpop.f32.mrf.mxu0
        %909 = vdwg.mxu0
        %v910 = vmul.f32 %v896, 0.5
        %v911 = vmul.f32 %v899, 0.5
        %v912 = vmul.f32 %v904, 0.5
        %v913 = vmul.f32 %v907, 0.5
        %v914 = vmul.f32 %v896, 0.044715
        %v915 = vmul.f32 %v899, 0.044715
        %v916 = vmul.f32 %v904, 0.044715
        %v917 = vmul.f32 %v907, 0.044715
        %v918 = vmul.f32 %v914, %v896
        %v919 = vmul.f32 %v915, %v899
        %v920 = vmul.f32 %v916, %v904
        %v921 = vmul.f32 %v917, %v907
        %v922 = vmul.f32 %v918, %v896
        %v923 = vmul.f32 %v919, %v899
        %v924 = vmul.f32 %v920, %v904
        %v925 = vmul.f32 %v921, %v907
        %v926 = vadd.f32 %v896, %v922
        %v927 = vadd.f32 %v899, %v923
        %v928 = vadd.f32 %v904, %v924
        %v929 = vadd.f32 %v907, %v925
        %v930 = vmul.f32 %v926, 0.7978846
        %v931 = vmul.f32 %v927, 0.7978846
        %v932 = vmul.f32 %v928, 0.7978846
        %v933 = vmul.f32 %v929, 0.7978846
        %v934 = vtanh.pop %v930
        %v935 = vtanh.pop %v931
        %v936 = vtanh.pop %v932
        %v937 = vtanh.pop %v933
        %v938 = vadd.f32 %v934, 1.0
        %v939 = vadd.f32 %v935, 1.0
        %v940 = vadd.f32 %v936, 1.0
        %v941 = vadd.f32 %v937, 1.0
        %v942 = vmul.f32 %v910, %v938
        %v943 = vmul.f32 %v911, %v939
        %v944 = vmul.f32 %v912, %v940
        %v945 = vmul.f32 %v913, %v941
        %v946 = vld [vmem:[#allocation3] sm:$0xff]
        %v947 = vld [vmem:[#allocation3 + $0x8] sm:$0xff]
        %v948 = vld [vmem:[#allocation3 + $0x10] sm:$0xff]
        %v949 = vld [vmem:[#allocation3 + $0x18] sm:$0xff]
        %v950 = vpack.c.bf16 %v943, %v942
        %v951 = vpack.c.bf16 %v945, %v944
        %v952 = vld [vmem:[%s557] sm:$0xf]
        %v953 = vld [vmem:[%s557 + $0x4] sm:$0xf]
        %v954 = vld [vmem:[%s557 + $0x8] sm:$0xf]
        %v955 = vld [vmem:[%s557 + $0xc] sm:$0xf]
        %v956 = vld [vmem:[%s557 + $0x10] sm:$0xf]
        %v957 = vld [vmem:[%s557 + $0x14] sm:$0xf]
        %v958 = vld [vmem:[%s557 + $0x18] sm:$0xf]
        %v959 = vld [vmem:[%s557 + $0x1c] sm:$0xf]
        %v960 = vld [vmem:[%s557 + $0x20] sm:$0xf]
        %v961 = vld [vmem:[%s557 + $0x24] sm:$0xf]
        %v962 = vld [vmem:[%s557 + $0x28] sm:$0xf]
        %v963 = vld [vmem:[%s557 + $0x2c] sm:$0xf]
        %v964 = vld [vmem:[%s557 + $0x30] sm:$0xf]
        %v965 = vld [vmem:[%s557 + $0x34] sm:$0xf]
        %v966 = vld [vmem:[%s557 + $0x38] sm:$0xf]
        %v967 = vld [vmem:[%s557 + $0x3c] sm:$0xf]
        %v984 = vunpack.c.l.b16 %v952
        %v985 = vunpack.c.l.b16 %v953
        %v986 = vunpack.c.l.b16 %v954
        %v987 = vunpack.c.l.b16 %v955
        %v988 = vunpack.c.l.b16 %v956
        %v989 = vunpack.c.l.b16 %v957
        %v990 = vunpack.c.l.b16 %v958
        %v991 = vunpack.c.l.b16 %v959
        %v992 = vunpack.c.l.b16 %v960
        %v993 = vunpack.c.l.b16 %v961
        %v994 = vunpack.c.l.b16 %v962
        %v995 = vunpack.c.l.b16 %v963
        %v996 = vunpack.c.l.b16 %v964
        %v997 = vunpack.c.l.b16 %v965
        %v998 = vunpack.c.l.b16 %v966
        %v999 = vunpack.c.l.b16 %v967
        %v1000 = vpack.c.b16 %v985, %v984
        %v1001 = vpack.c.b16 %v987, %v986
        %v1002 = vpack.c.b16 %v989, %v988
        %v1003 = vpack.c.b16 %v991, %v990
        %v1004 = vpack.c.b16 %v993, %v992
        %v1005 = vpack.c.b16 %v995, %v994
        %v1006 = vpack.c.b16 %v997, %v996
        %v1007 = vpack.c.b16 %v999, %v998
        %1016 = vmatprep.subr.bf16.mxu0 0
        %1017 = vmatpush1.bf16.msra.mxu0 %v1007
        %1018 = vmatprep.subr.bf16.mxu0 0
        %1019 = vmatpush1.bf16.msra.mxu0 %v1006
        %1020 = vmatprep.subr.bf16.mxu0 0
        %1021 = vmatpush1.bf16.msra.mxu0 %v1005
        %1022 = vmatprep.subr.bf16.mxu0 0
        %1023 = vmatpush1.bf16.msra.mxu0 %v1004
        %1024 = vmatprep.subr.bf16.mxu0 0
        %1025 = vmatpush1.bf16.msra.mxu0 %v1003
        %1026 = vmatprep.subr.bf16.mxu0 0
        %1027 = vmatpush1.bf16.msra.mxu0 %v1002
        %1028 = vmatprep.subr.bf16.mxu0 0
        %1029 = vmatpush1.bf16.msra.mxu0 %v1001
        %1030 = vmatprep.subr.bf16.mxu0 0
        %1031 = vmatpush1.bf16.msra.mxu0 %v1000
        %1032 = vmatprep.subr.bf16.mxu0 0
        %1033 = vmatpush2.bf16.msra.mxu0 0
        %1034 = vmatprep.subr.bf16.mxu0 0
        %1035 = vmatpush2.bf16.msra.mxu0 0
        %1036 = vmatprep.subr.bf16.mxu0 0
        %1037 = vmatpush2.bf16.msra.mxu0 0
        %1038 = vmatprep.subr.bf16.mxu0 0
        %1039 = vmatpush2.bf16.msra.mxu0 0
        %1040 = vmatprep.subr.bf16.mxu0 0
        %1041 = vmatpush2.bf16.msra.mxu0 0
        %1042 = vmatprep.subr.bf16.mxu0 0
        %1043 = vmatpush2.bf16.msra.mxu0 0
        %1044 = vmatprep.subr.bf16.mxu0 0
        %1045 = vmatpush2.bf16.msra.mxu0 0
        %1046 = vmatprep.subr.bf16.mxu0 0
        %1047 = vmatpush2.bf16.msra.mxu0 0
        %1048 = vmatprep.mubr.bf16.mxu0 0
        %1049 = vmatmul.mubr.bf16.gmra.mxu0 %v950
        %v1050 = vpop.f32.mrf.mxu0
        %v1051 = vadd.f32 0.0, %v1050
        %v1052 = vpop.f32.mrf.mxu0
        %v1053 = vpop.f32.mrf.mxu0
        %v1054 = vadd.f32 0.0, %v1053
        %v1055 = vpop.f32.mrf.mxu0
        %1056 = vmatprep.mubr.bf16.mxu0 0
        %1057 = vmatmul.mubr.bf16.gmra.mxu0 %v951
        %v1058 = vpop.f32.mrf.mxu0
        %v1059 = vadd.f32 0.0, %v1058
        %v1060 = vpop.f32.mrf.mxu0
        %v1061 = vpop.f32.mrf.mxu0
        %v1062 = vadd.f32 0.0, %v1061
        %v1063 = vpop.f32.mrf.mxu0
        %1064 = vdwg.mxu0
        %v1065 = vadd.f32 %v946, %v1051
        %v1066 = vadd.f32 %v947, %v1054
        %v1067 = vadd.f32 %v948, %v1059
        %v1068 = vadd.f32 %v949, %v1062
        %1069 = vst.msk [vmem:[#allocation3] sm:$0xff] %vm854, %v1065
        %1070 = vst.msk [vmem:[#allocation3 + $0x8] sm:$0xff] %vm854, %v1066
        %1071 = vst.msk [vmem:[#allocation3 + $0x10] sm:$0xff] %vm854, %v1067
        %1072 = vst.msk [vmem:[#allocation3 + $0x18] sm:$0xff] %vm854, %v1068
        %p1073 = scmp.eq.s32.totalorder %s28, 1
        // Predicated region
        $region106: #{gpt_forward.9} parent=96 // pred_check
          %p1074 = pneg %p1073
        $region107: #{gpt_forward.9} parent=96 // pred_check_branch
          %1076 = sbr.rel (%p1074) target = $region109
        $region108: #{gpt_forward.9} parent=96 // pred_region
          %v1077 = vld [vmem:[#allocation3] sm:$0xff]
          %v1078 = vld [vmem:[#allocation3 + $0x8] sm:$0xff]
          %v1079 = vld [vmem:[#allocation3 + $0x10] sm:$0xff]
          %v1080 = vld [vmem:[#allocation3 + $0x18] sm:$0xff]
          %v1081 = vpack.c.bf16 %v1078, %v1077
          %v1082 = vpack.c.bf16 %v1080, %v1079
          %v1085 = vunpack.c.l.b16 %v1081
          %v1086 = vunpack.c.h.b16 %v1081
          %v1087 = vunpack.c.l.b16 %v1082
          %v1088 = vunpack.c.h.b16 %v1082
          %v1089 = vpack.c.b16 %v1085, %v1085
          %v1090 = vpack.c.b16 %v1086, %v1086
          %v1091 = vpack.c.b16 %v1087, %v1087
          %v1092 = vpack.c.b16 %v1088, %v1088
          %vm1097 = vcmask 519168
          %1098 = vst.msk [vmem:[%s567] sm:$0xf] %vm1097, %v1089
          %1099 = vst.msk [vmem:[%s567 + $0x4] sm:$0xf] %vm1097, %v1090
          %1100 = vst.msk [vmem:[%s567 + $0x8] sm:$0xf] %vm1097, %v1091
          %1101 = vst.msk [vmem:[%s567 + $0xc] sm:$0xf] %vm1097, %v1092
        $region109: #{gpt_forward.9} parent=96 // pred_fallthru
          _
        %s1102 = smul.u32 4, %s27
        %p1103 = scmp.lt.s32.totalorder %s26, 1
        %s1104 = scalar_select %p1103, %s26, 1
        %p1105 = scmp.lt.s32.totalorder %s1102, 7
        %s1106 = scalar_select %p1105, %s1102, 7
        %s1107 = smul.addr %s1104, 8
        %s1108 = sadd.s32 %s1106, %s1107
        %s1109 = smul.addr %s1108, 4
        %s1110 = scalar_lea.vmem %s10, %s1109
        // Predicated region
        $region110: #{gpt_forward.9} parent=96 // pred_check
          %p1111 = pneg %p299
        $region111: #{gpt_forward.9} parent=96 // pred_check_branch
          %1113 = sbr.rel (%p1111) target = $region113
        $region112: #{gpt_forward.9} parent=96 // pred_region
          %s1114 = smul.u32 4, %s27
        $region113: #{gpt_forward.9} parent=96 // pred_fallthru
          _
      $region97: #{gpt_forward.9} parent=5 // pred_fallthru
        _
      %p1115 = scmp.le.s32.totalorder 2, %s16
      // Predicated region
      $region114: #{gpt_forward.9} parent=5 // pred_check
        %p1116 = pneg %p1115
      $region115: #{gpt_forward.9} parent=5 // pred_check_branch
        %1118 = sbr.rel (%p1116) target = $region117
      $region116: #{gpt_forward.9} parent=5 // pred_region
        %s1119 = ssub.s32 %s16, 2
        // Predicated region
        $region118: #{gpt_forward.9} parent=116 // pred_check
          %p1120 = pneg %p305
        $region119: #{gpt_forward.9} parent=116 // pred_check_branch
          %1122 = sbr.rel (%p1120) target = $region121
        $region120: #{gpt_forward.9} parent=116 // pred_region
          %s1123 = smul.u32 4, %s30
          %p1124 = scmp.lt.s32.totalorder %s29, 1
          %s1125 = scalar_select %p1124, %s29, 1
          %p1126 = scmp.lt.s32.totalorder %s1123, 7
          %s1127 = scalar_select %p1126, %s1123, 7
          %s1128 = smul.addr %s1125, 8
          %s1129 = sadd.s32 %s1127, %s1128
          %s1130 = smul.addr %s1129, 4
          %s1131 = scalar_lea.vmem %s10, %s1130
        $region121: #{gpt_forward.9} parent=116 // pred_fallthru
          _
      $region117: #{gpt_forward.9} parent=5 // pred_fallthru
        _
    $region6: #{gpt_forward.9} parent=1 // loop_footer
      %s20 = sadd.s32 1, %s16
    $region7: #{gpt_forward.9} parent=1 // loop_footer_branch
      %15 = sbr.rel target = $region3
    $region8: #{gpt_forward.9} parent=1 // loop_exit
      _

// kernel: gpt_forward.8
$region0: #{gpt_forward.8}
  #allocation0 [shape = 'u32[]', space=smem, size = 0x4, offset = 0x4, fixed_abs, tag = 'smem constant byte address 0x4 - core index']
  #allocation1 [shape = 'u32[144,128]{1,0:T(1,128)}', space=vmem, size = 0x12000, scoped, tag = 'internal scratch']
  #allocation2 [shape = 'f32[4,32,1]{2,1,0:T(8,128)}', space=vmem, size = 0x10000, scoped, tag = 'scratch operand']
  #allocation3 [shape = 'f32[4,32,1]{2,1,0:T(8,128)}', space=vmem, size = 0x10000, scoped, tag = 'scratch operand']
  #allocation4 [shape = 'f32[4,32,16]{2,1,0:T(8,128)}', space=vmem, size = 0x10000, scoped, tag = 'scratch operand']
  %s0 = inlined_call_operand.vmem [shape: bf16[2,4,64,16], index: 0, kind: input, shape index: {}]
  %s1 = inlined_call_operand.vmem [shape: bf16[2,4,64,16], index: 1, kind: input, shape index: {}]
  %s2 = inlined_call_operand.vmem [shape: bf16[2,4,64,16], index: 2, kind: input, shape index: {}]
  %s3 = inlined_call_operand.vmem [shape: bf16[2,4,64,16], index: 3, kind: output, shape index: {}]
  %s4 = sld [smem:[#allocation0]]
  $region217: #{gpt_forward.8} parent=0
    _
  %s6 = ssub.s32 1, %s4
  %s7 = scalar_select 0, %s6, %s4
  $region1: #{gpt_forward.8} parent=0
    #allocation5 [shape = 'u8[65536]{0}', space=vmem, size = 0x10000, scoped, tag = 'input window, operand 0']
    #allocation6 [shape = 'u8[65536]{0}', space=vmem, size = 0x10000, scoped, tag = 'input window, operand 1']
    #allocation7 [shape = 'u8[65536]{0}', space=vmem, size = 0x10000, scoped, tag = 'input window, operand 2']
    #allocation8 [shape = 'u8[65536]{0}', space=vmem, size = 0x10000, scoped, tag = 'output window, operand 0']
    loop: start=0, step=1, limit=10
    $region2: #{gpt_forward.8} parent=1 // loop_pre_header
      _
    $region3: #{gpt_forward.8} parent=1 // loop_header
      %s9 = sphi 0, %s13
      %p10 = scmp.ge.s32.totalorder %s9, 10
      %s16 = sphi 0, %s35
      %s17 = sphi 0, %s31
      %s18 = sphi 0, %s27
      %s19 = sphi 0, %s16
      %s20 = sphi 0, %s17
      %s21 = sphi 0, %s18
      %s22 = sphi 0, %s19
      %s23 = sphi 0, %s20
      %s24 = sphi 0, %s21
      %s40 = sphi 0, %s42
      %s43 = sphi 0, %s40
      %s44 = sphi 0, %s43
      %s60 = sphi 0, %s44
      %s68 = sphi 0, %s70
      %s71 = sphi 0, %s68
      %s72 = sphi 0, %s71
      %s88 = sphi 0, %s72
      %s96 = sphi 0, %s98
      %s99 = sphi 0, %s96
      %s100 = sphi 0, %s99
      %s116 = sphi 0, %s100
      %s124 = sphi 0, %s126
      %s127 = sphi 0, %s124
      %s128 = sphi 0, %s127
      %s144 = sphi 0, %s128
    $region4: #{gpt_forward.8} parent=1 // loop_header_branch
      %12 = sbr.rel (%p10) target = $region8
    $region5: #{gpt_forward.8} parent=1 // loop_body
      %s14 = ssub.s32 %s9, 1
      %s15 = ssub.s32 %s9, 2
      %s25 = sadd.s32 1, %s18
      %p26 = scmp.ge.s32.totalorder %s25, 2
      %s27 = scalar_select %p26, 0, %s25
      %s28 = sadd.s32 1, %s17
      %s29 = scalar_select %p26, %s28, %s17
      %p30 = scmp.ge.s32.totalorder %s29, 2
      %s31 = scalar_select %p30, 0, %s29
      %s32 = sadd.s32 1, %s16
      %s33 = scalar_select %p30, %s32, %s16
      %p34 = scmp.ge.s32.totalorder %s33, 2
      %s35 = scalar_select %p34, 0, %s33
      %s36 = ssub.s32 %s16, %s35
      %s37 = ssub.s32 %s17, %s31
      %s38 = sor.u32 %s36, %s37
      %p39 = scmp.eq.s32.totalorder %s38, 0
      %s41 = sadd.s32 %s40, 1
      %s42 = scalar_select %p39, %s40, %s41
      %p45 = pneg %p39
      %p46 = scmp.eq.s32.totalorder %s9, 7
      %p47 = por %p45, %p46
      %p48 = scmp.ne.s32.totalorder %s40, %s43
      %p49 = scmp.eq.s32.totalorder %s9, 0
      %p50 = por %p48, %p49
      %p51 = scmp.ne.s32.totalorder %s40, %s43
      %p52 = scmp.eq.s32.totalorder %s14, 7
      %p53 = por %p51, %p52
      %p54 = scmp.ne.s32.totalorder %s43, %s44
      %p55 = scmp.eq.s32.totalorder %s14, 0
      %p56 = por %p54, %p55
      %p57 = scmp.ne.s32.totalorder %s43, %s44
      %p58 = scmp.eq.s32.totalorder %s15, 7
      %p59 = por %p57, %p58
      %p61 = scmp.ne.s32.totalorder %s44, %s60
      %p62 = scmp.eq.s32.totalorder %s15, 0
      %p63 = por %p61, %p62
      %s64 = ssub.s32 %s16, %s35
      %s65 = ssub.s32 %s18, %s27
      %s66 = sor.u32 %s64, %s65
      %p67 = scmp.eq.s32.totalorder %s66, 0
      %s69 = sadd.s32 %s68, 1
      %s70 = scalar_select %p67, %s68, %s69
      %p73 = pneg %p67
      %p74 = scmp.eq.s32.totalorder %s9, 7
      %p75 = por %p73, %p74
      %p76 = scmp.ne.s32.totalorder %s68, %s71
      %p77 = scmp.eq.s32.totalorder %s9, 0
      %p78 = por %p76, %p77
      %p79 = scmp.ne.s32.totalorder %s68, %s71
      %p80 = scmp.eq.s32.totalorder %s14, 7
      %p81 = por %p79, %p80
      %p82 = scmp.ne.s32.totalorder %s71, %s72
      %p83 = scmp.eq.s32.totalorder %s14, 0
      %p84 = por %p82, %p83
      %p85 = scmp.ne.s32.totalorder %s71, %s72
      %p86 = scmp.eq.s32.totalorder %s15, 7
      %p87 = por %p85, %p86
      %p89 = scmp.ne.s32.totalorder %s72, %s88
      %p90 = scmp.eq.s32.totalorder %s15, 0
      %p91 = por %p89, %p90
      %s92 = ssub.s32 %s16, %s35
      %s93 = ssub.s32 %s18, %s27
      %s94 = sor.u32 %s92, %s93
      %p95 = scmp.eq.s32.totalorder %s94, 0
      %s97 = sadd.s32 %s96, 1
      %s98 = scalar_select %p95, %s96, %s97
      %p101 = pneg %p95
      %p102 = scmp.eq.s32.totalorder %s9, 7
      %p103 = por %p101, %p102
      %p104 = scmp.ne.s32.totalorder %s96, %s99
      %p105 = scmp.eq.s32.totalorder %s9, 0
      %p106 = por %p104, %p105
      %p107 = scmp.ne.s32.totalorder %s96, %s99
      %p108 = scmp.eq.s32.totalorder %s14, 7
      %p109 = por %p107, %p108
      %p110 = scmp.ne.s32.totalorder %s99, %s100
      %p111 = scmp.eq.s32.totalorder %s14, 0
      %p112 = por %p110, %p111
      %p113 = scmp.ne.s32.totalorder %s99, %s100
      %p114 = scmp.eq.s32.totalorder %s15, 7
      %p115 = por %p113, %p114
      %p117 = scmp.ne.s32.totalorder %s100, %s116
      %p118 = scmp.eq.s32.totalorder %s15, 0
      %p119 = por %p117, %p118
      %s120 = ssub.s32 %s16, %s35
      %s121 = ssub.s32 %s17, %s31
      %s122 = sor.u32 %s120, %s121
      %p123 = scmp.eq.s32.totalorder %s122, 0
      %s125 = sadd.s32 %s124, 1
      %s126 = scalar_select %p123, %s124, %s125
      %p129 = pneg %p123
      %p130 = scmp.eq.s32.totalorder %s9, 7
      %p131 = por %p129, %p130
      %p132 = scmp.ne.s32.totalorder %s124, %s127
      %p133 = scmp.eq.s32.totalorder %s9, 0
      %p134 = por %p132, %p133
      %p135 = scmp.ne.s32.totalorder %s124, %s127
      %p136 = scmp.eq.s32.totalorder %s14, 7
      %p137 = por %p135, %p136
      %p138 = scmp.ne.s32.totalorder %s127, %s128
      %p139 = scmp.eq.s32.totalorder %s14, 0
      %p140 = por %p138, %p139
      %p141 = scmp.ne.s32.totalorder %s127, %s128
      %p142 = scmp.eq.s32.totalorder %s15, 7
      %p143 = por %p141, %p142
      %p145 = scmp.ne.s32.totalorder %s128, %s144
      %p146 = scmp.eq.s32.totalorder %s15, 0
      %p147 = por %p145, %p146
      %p148 = scmp.le.s32.totalorder 1, %s9
      %p149 = scmp.lt.s32.totalorder %s9, 9
      %p150 = pnand %p148, %p149
      %p151 = pneg %p150
      // Predicated region
      $region9: #{gpt_forward.8} parent=5 // pred_check
        _
      $region10: #{gpt_forward.8} parent=5 // pred_check_branch
        %153 = sbr.rel (%p150) target = $region12
      $region11: #{gpt_forward.8} parent=5 // pred_region
        %s154 = ssub.s32 %s9, 1
      $region12: #{gpt_forward.8} parent=5 // pred_fallthru
        _
      %p155 = scmp.lt.s32.totalorder %s9, 8
      // Predicated region
      $region13: #{gpt_forward.8} parent=5 // pred_check
        %p156 = pneg %p155
      $region14: #{gpt_forward.8} parent=5 // pred_check_branch
        %158 = sbr.rel (%p156) target = $region16
      $region15: #{gpt_forward.8} parent=5 // pred_region
        // Predicated region
        $region17: #{gpt_forward.8} parent=15 // pred_check
          %p159 = pneg %p50
        $region18: #{gpt_forward.8} parent=15 // pred_check_branch
          %161 = sbr.rel (%p159) target = $region20
        $region19: #{gpt_forward.8} parent=15 // pred_region
          %s162 = sand.u32 %s40, 1
          %s163 = sand.u32 %s40, 1
          %s164 = smul.addr %s163, 64
          %s165 = scalar_lea.vmem [#allocation5], %s164
          %s166 = smul.u32 4, %s17
          %s167 = smul.addr %s16, 32
          %s168 = sadd.s32 %s166, %s167
          %s169 = smul.addr %s168, 4
          %s170 = scalar_lea.vmem %s0, %s169
          // Predicated region
          $region21: #{gpt_forward.8} parent=19 // pred_check
            _
          $region22: #{gpt_forward.8} parent=19 // pred_check_branch
            %172 = sbr.rel (0) target = $region24
          $region23: #{gpt_forward.8} parent=19 // pred_region
            // Predicated region
            $region25: #{gpt_forward.8} parent=23 // pred_check
              _
            $region26: #{gpt_forward.8} parent=23 // pred_check_branch
              %174 = sbr.rel target = $region28
            $region27: #{gpt_forward.8} parent=23 // pred_region
              // Predicated region
              $region40: #{gpt_forward.8} parent=27 // pred_check
                _
              $region41: #{gpt_forward.8} parent=27 // pred_check_branch
                %220 = sbr.rel (0) target = $region43
              $region42: #{gpt_forward.8} parent=27 // pred_region
                loop: start=0, step=1, limit=1
                $region44: #{gpt_forward.8} parent=42 // loop_pre_header
                  _
                $region45: #{gpt_forward.8} parent=42 // loop_header
                  %s222 = sphi 0, %s226
                  %p223 = scmp.ge.s32.totalorder %s222, 1
                  %s227 = sphi %s170, %s170
                  %s228 = sphi %s165, %s165
                $region46: #{gpt_forward.8} parent=42 // loop_header_branch
                  %225 = sbr.rel (%p223) target = $region50
                $region47: #{gpt_forward.8} parent=42 // loop_body
                  _
                $region48: #{gpt_forward.8} parent=42 // loop_footer
                  %s226 = sadd.s32 1, %s222
                $region49: #{gpt_forward.8} parent=42 // loop_footer_branch
                  %221 = sbr.rel target = $region45
                $region50: #{gpt_forward.8} parent=42 // loop_exit
                  _
                %s230 = ssub.s32 16, 1
                loop: start=0, step=1, limit=1
                $region51: #{gpt_forward.8} parent=42 // loop_pre_header
                  _
                $region52: #{gpt_forward.8} parent=42 // loop_header
                  %s232 = sphi 0, %s236
                  %p233 = scmp.ge.s32.totalorder %s232, 1
                  %s237 = sphi %s170, %s170
                  %s238 = sphi %s165, %s165
                $region53: #{gpt_forward.8} parent=42 // loop_header_branch
                  %235 = sbr.rel (%p233) target = $region57
                $region54: #{gpt_forward.8} parent=42 // loop_body
                  %v239 = vld [vmem:[%s237] sm:%s230]
                  %240 = vst [vmem:[%s238] sm:%s230] %v239
                  %v241 = vld [vmem:[%s237 + $0x4] sm:%s230]
                  %242 = vst [vmem:[%s238 + $0x4] sm:%s230] %v241
                  %v243 = vld [vmem:[%s237 + $0x8] sm:%s230]
                  %244 = vst [vmem:[%s238 + $0x8] sm:%s230] %v243
                  %v245 = vld [vmem:[%s237 + $0xc] sm:%s230]
                  %246 = vst [vmem:[%s238 + $0xc] sm:%s230] %v245
                  %v247 = vld [vmem:[%s237 + $0x20] sm:%s230]
                  %248 = vst [vmem:[%s238 + $0x10] sm:%s230] %v247
                  %v249 = vld [vmem:[%s237 + $0x24] sm:%s230]
                  %250 = vst [vmem:[%s238 + $0x14] sm:%s230] %v249
                  %v251 = vld [vmem:[%s237 + $0x28] sm:%s230]
                  %252 = vst [vmem:[%s238 + $0x18] sm:%s230] %v251
                  %v253 = vld [vmem:[%s237 + $0x2c] sm:%s230]
                  %254 = vst [vmem:[%s238 + $0x1c] sm:%s230] %v253
                  %v255 = vld [vmem:[%s237 + $0x40] sm:%s230]
                  %256 = vst [vmem:[%s238 + $0x20] sm:%s230] %v255
                  %v257 = vld [vmem:[%s237 + $0x44] sm:%s230]
                  %258 = vst [vmem:[%s238 + $0x24] sm:%s230] %v257
                  %v259 = vld [vmem:[%s237 + $0x48] sm:%s230]
                  %260 = vst [vmem:[%s238 + $0x28] sm:%s230] %v259
                  %v261 = vld [vmem:[%s237 + $0x4c] sm:%s230]
                  %262 = vst [vmem:[%s238 + $0x2c] sm:%s230] %v261
                  %v263 = vld [vmem:[%s237 + $0x60] sm:%s230]
                  %264 = vst [vmem:[%s238 + $0x30] sm:%s230] %v263
                  %v265 = vld [vmem:[%s237 + $0x64] sm:%s230]
                  %266 = vst [vmem:[%s238 + $0x34] sm:%s230] %v265
                  %v267 = vld [vmem:[%s237 + $0x68] sm:%s230]
                  %268 = vst [vmem:[%s238 + $0x38] sm:%s230] %v267
                  %v269 = vld [vmem:[%s237 + $0x6c] sm:%s230]
                  %270 = vst [vmem:[%s238 + $0x3c] sm:%s230] %v269
                $region55: #{gpt_forward.8} parent=42 // loop_footer
                  %s236 = sadd.s32 1, %s232
                $region56: #{gpt_forward.8} parent=42 // loop_footer_branch
                  %231 = sbr.rel target = $region52
                $region57: #{gpt_forward.8} parent=42 // loop_exit
                  _
              $region43: #{gpt_forward.8} parent=27 // pred_fallthru
                _
            $region28: #{gpt_forward.8} parent=23 // pred_fallthru
              _
            // Predicated region
            $region29: #{gpt_forward.8} parent=23 // pred_check
              _
            $region30: #{gpt_forward.8} parent=23 // pred_check_branch
              %176 = sbr.rel (0) target = $region32
            $region31: #{gpt_forward.8} parent=23 // pred_region
              %s178 = ssub.s32 16, 1
              loop: start=0, step=1, limit=1
              $region33: #{gpt_forward.8} parent=31 // loop_pre_header
                _
              $region34: #{gpt_forward.8} parent=31 // loop_header
                %s180 = sphi 0, %s184
                %p181 = scmp.ge.s32.totalorder %s180, 1
                %s185 = sphi %s170, %s170
                %s186 = sphi %s165, %s165
              $region35: #{gpt_forward.8} parent=31 // loop_header_branch
                %183 = sbr.rel (%p181) target = $region39
              $region36: #{gpt_forward.8} parent=31 // loop_body
                %v187 = vld [vmem:[%s185] sm:%s178]
                %188 = vst [vmem:[%s186] sm:%s178] %v187
                %v189 = vld [vmem:[%s185 + $0x4] sm:%s178]
                %190 = vst [vmem:[%s186 + $0x4] sm:%s178] %v189
                %v191 = vld [vmem:[%s185 + $0x8] sm:%s178]
                %192 = vst [vmem:[%s186 + $0x8] sm:%s178] %v191
                %v193 = vld [vmem:[%s185 + $0xc] sm:%s178]
                %194 = vst [vmem:[%s186 + $0xc] sm:%s178] %v193
                %v195 = vld [vmem:[%s185 + $0x20] sm:%s178]
                %196 = vst [vmem:[%s186 + $0x10] sm:%s178] %v195
                %v197 = vld [vmem:[%s185 + $0x24] sm:%s178]
                %198 = vst [vmem:[%s186 + $0x14] sm:%s178] %v197
                %v199 = vld [vmem:[%s185 + $0x28] sm:%s178]
                %200 = vst [vmem:[%s186 + $0x18] sm:%s178] %v199
                %v201 = vld [vmem:[%s185 + $0x2c] sm:%s178]
                %202 = vst [vmem:[%s186 + $0x1c] sm:%s178] %v201
                %v203 = vld [vmem:[%s185 + $0x40] sm:%s178]
                %204 = vst [vmem:[%s186 + $0x20] sm:%s178] %v203
                %v205 = vld [vmem:[%s185 + $0x44] sm:%s178]
                %206 = vst [vmem:[%s186 + $0x24] sm:%s178] %v205
                %v207 = vld [vmem:[%s185 + $0x48] sm:%s178]
                %208 = vst [vmem:[%s186 + $0x28] sm:%s178] %v207
                %v209 = vld [vmem:[%s185 + $0x4c] sm:%s178]
                %210 = vst [vmem:[%s186 + $0x2c] sm:%s178] %v209
                %v211 = vld [vmem:[%s185 + $0x60] sm:%s178]
                %212 = vst [vmem:[%s186 + $0x30] sm:%s178] %v211
                %v213 = vld [vmem:[%s185 + $0x64] sm:%s178]
                %214 = vst [vmem:[%s186 + $0x34] sm:%s178] %v213
                %v215 = vld [vmem:[%s185 + $0x68] sm:%s178]
                %216 = vst [vmem:[%s186 + $0x38] sm:%s178] %v215
                %v217 = vld [vmem:[%s185 + $0x6c] sm:%s178]
                %218 = vst [vmem:[%s186 + $0x3c] sm:%s178] %v217
              $region37: #{gpt_forward.8} parent=31 // loop_footer
                %s184 = sadd.s32 1, %s180
              $region38: #{gpt_forward.8} parent=31 // loop_footer_branch
                %179 = sbr.rel target = $region34
              $region39: #{gpt_forward.8} parent=31 // loop_exit
                _
            $region32: #{gpt_forward.8} parent=23 // pred_fallthru
              _
          $region24: #{gpt_forward.8} parent=19 // pred_fallthru
            _
          %271 = vnop
        $region20: #{gpt_forward.8} parent=15 // pred_fallthru
          _
        // Predicated region
        $region58: #{gpt_forward.8} parent=15 // pred_check
          %p272 = pneg %p78
        $region59: #{gpt_forward.8} parent=15 // pred_check_branch
          %274 = sbr.rel (%p272) target = $region61
        $region60: #{gpt_forward.8} parent=15 // pred_region
          %s275 = sand.u32 %s68, 1
          %s276 = sand.u32 %s68, 1
          %s277 = smul.addr %s276, 64
          %s278 = scalar_lea.vmem [#allocation6], %s277
          %s279 = smul.u32 4, %s18
          %s280 = smul.addr %s16, 32
          %s281 = sadd.s32 %s279, %s280
          %s282 = smul.addr %s281, 4
          %s283 = scalar_lea.vmem %s1, %s282
          // Predicated region
          $region62: #{gpt_forward.8} parent=60 // pred_check
            _
          $region63: #{gpt_forward.8} parent=60 // pred_check_branch
            %285 = sbr.rel (0) target = $region65
          $region64: #{gpt_forward.8} parent=60 // pred_region
            // Predicated region
            $region66: #{gpt_forward.8} parent=64 // pred_check
              _
            $region67: #{gpt_forward.8} parent=64 // pred_check_branch
              %287 = sbr.rel target = $region69
            $region68: #{gpt_forward.8} parent=64 // pred_region
              // Predicated region
              $region81: #{gpt_forward.8} parent=68 // pred_check
                _
              $region82: #{gpt_forward.8} parent=68 // pred_check_branch
                %333 = sbr.rel (0) target = $region84
              $region83: #{gpt_forward.8} parent=68 // pred_region
                loop: start=0, step=1, limit=1
                $region85: #{gpt_forward.8} parent=83 // loop_pre_header
                  _
                $region86: #{gpt_forward.8} parent=83 // loop_header
                  %s335 = sphi 0, %s339
                  %p336 = scmp.ge.s32.totalorder %s335, 1
                  %s340 = sphi %s283, %s283
                  %s341 = sphi %s278, %s278
                $region87: #{gpt_forward.8} parent=83 // loop_header_branch
                  %338 = sbr.rel (%p336) target = $region91
                $region88: #{gpt_forward.8} parent=83 // loop_body
                  _
                $region89: #{gpt_forward.8} parent=83 // loop_footer
                  %s339 = sadd.s32 1, %s335
                $region90: #{gpt_forward.8} parent=83 // loop_footer_branch
                  %334 = sbr.rel target = $region86
                $region91: #{gpt_forward.8} parent=83 // loop_exit
                  _
                %s343 = ssub.s32 16, 1
                loop: start=0, step=1, limit=1
                $region92: #{gpt_forward.8} parent=83 // loop_pre_header
                  _
                $region93: #{gpt_forward.8} parent=83 // loop_header
                  %s345 = sphi 0, %s349
                  %p346 = scmp.ge.s32.totalorder %s345, 1
                  %s350 = sphi %s283, %s283
                  %s351 = sphi %s278, %s278
                $region94: #{gpt_forward.8} parent=83 // loop_header_branch
                  %348 = sbr.rel (%p346) target = $region98
                $region95: #{gpt_forward.8} parent=83 // loop_body
                  %v352 = vld [vmem:[%s350] sm:%s343]
                  %353 = vst [vmem:[%s351] sm:%s343] %v352
                  %v354 = vld [vmem:[%s350 + $0x4] sm:%s343]
                  %355 = vst [vmem:[%s351 + $0x4] sm:%s343] %v354
                  %v356 = vld [vmem:[%s350 + $0x8] sm:%s343]
                  %357 = vst [vmem:[%s351 + $0x8] sm:%s343] %v356
                  %v358 = vld [vmem:[%s350 + $0xc] sm:%s343]
                  %359 = vst [vmem:[%s351 + $0xc] sm:%s343] %v358
                  %v360 = vld [vmem:[%s350 + $0x20] sm:%s343]
                  %361 = vst [vmem:[%s351 + $0x10] sm:%s343] %v360
                  %v362 = vld [vmem:[%s350 + $0x24] sm:%s343]
                  %363 = vst [vmem:[%s351 + $0x14] sm:%s343] %v362
                  %v364 = vld [vmem:[%s350 + $0x28] sm:%s343]
                  %365 = vst [vmem:[%s351 + $0x18] sm:%s343] %v364
                  %v366 = vld [vmem:[%s350 + $0x2c] sm:%s343]
                  %367 = vst [vmem:[%s351 + $0x1c] sm:%s343] %v366
                  %v368 = vld [vmem:[%s350 + $0x40] sm:%s343]
                  %369 = vst [vmem:[%s351 + $0x20] sm:%s343] %v368
                  %v370 = vld [vmem:[%s350 + $0x44] sm:%s343]
                  %371 = vst [vmem:[%s351 + $0x24] sm:%s343] %v370
                  %v372 = vld [vmem:[%s350 + $0x48] sm:%s343]
                  %373 = vst [vmem:[%s351 + $0x28] sm:%s343] %v372
                  %v374 = vld [vmem:[%s350 + $0x4c] sm:%s343]
                  %375 = vst [vmem:[%s351 + $0x2c] sm:%s343] %v374
                  %v376 = vld [vmem:[%s350 + $0x60] sm:%s343]
                  %377 = vst [vmem:[%s351 + $0x30] sm:%s343] %v376
                  %v378 = vld [vmem:[%s350 + $0x64] sm:%s343]
                  %379 = vst [vmem:[%s351 + $0x34] sm:%s343] %v378
                  %v380 = vld [vmem:[%s350 + $0x68] sm:%s343]
                  %381 = vst [vmem:[%s351 + $0x38] sm:%s343] %v380
                  %v382 = vld [vmem:[%s350 + $0x6c] sm:%s343]
                  %383 = vst [vmem:[%s351 + $0x3c] sm:%s343] %v382
                $region96: #{gpt_forward.8} parent=83 // loop_footer
                  %s349 = sadd.s32 1, %s345
                $region97: #{gpt_forward.8} parent=83 // loop_footer_branch
                  %344 = sbr.rel target = $region93
                $region98: #{gpt_forward.8} parent=83 // loop_exit
                  _
              $region84: #{gpt_forward.8} parent=68 // pred_fallthru
                _
            $region69: #{gpt_forward.8} parent=64 // pred_fallthru
              _
            // Predicated region
            $region70: #{gpt_forward.8} parent=64 // pred_check
              _
            $region71: #{gpt_forward.8} parent=64 // pred_check_branch
              %289 = sbr.rel (0) target = $region73
            $region72: #{gpt_forward.8} parent=64 // pred_region
              %s291 = ssub.s32 16, 1
              loop: start=0, step=1, limit=1
              $region74: #{gpt_forward.8} parent=72 // loop_pre_header
                _
              $region75: #{gpt_forward.8} parent=72 // loop_header
                %s293 = sphi 0, %s297
                %p294 = scmp.ge.s32.totalorder %s293, 1
                %s298 = sphi %s283, %s283
                %s299 = sphi %s278, %s278
              $region76: #{gpt_forward.8} parent=72 // loop_header_branch
                %296 = sbr.rel (%p294) target = $region80
              $region77: #{gpt_forward.8} parent=72 // loop_body
                %v300 = vld [vmem:[%s298] sm:%s291]
                %301 = vst [vmem:[%s299] sm:%s291] %v300
                %v302 = vld [vmem:[%s298 + $0x4] sm:%s291]
                %303 = vst [vmem:[%s299 + $0x4] sm:%s291] %v302
                %v304 = vld [vmem:[%s298 + $0x8] sm:%s291]
                %305 = vst [vmem:[%s299 + $0x8] sm:%s291] %v304
                %v306 = vld [vmem:[%s298 + $0xc] sm:%s291]
                %307 = vst [vmem:[%s299 + $0xc] sm:%s291] %v306
                %v308 = vld [vmem:[%s298 + $0x20] sm:%s291]
                %309 = vst [vmem:[%s299 + $0x10] sm:%s291] %v308
                %v310 = vld [vmem:[%s298 + $0x24] sm:%s291]
                %311 = vst [vmem:[%s299 + $0x14] sm:%s291] %v310
                %v312 = vld [vmem:[%s298 + $0x28] sm:%s291]
                %313 = vst [vmem:[%s299 + $0x18] sm:%s291] %v312
                %v314 = vld [vmem:[%s298 + $0x2c] sm:%s291]
                %315 = vst [vmem:[%s299 + $0x1c] sm:%s291] %v314
                %v316 = vld [vmem:[%s298 + $0x40] sm:%s291]
                %317 = vst [vmem:[%s299 + $0x20] sm:%s291] %v316
                %v318 = vld [vmem:[%s298 + $0x44] sm:%s291]
                %319 = vst [vmem:[%s299 + $0x24] sm:%s291] %v318
                %v320 = vld [vmem:[%s298 + $0x48] sm:%s291]
                %321 = vst [vmem:[%s299 + $0x28] sm:%s291] %v320
                %v322 = vld [vmem:[%s298 + $0x4c] sm:%s291]
                %323 = vst [vmem:[%s299 + $0x2c] sm:%s291] %v322
                %v324 = vld [vmem:[%s298 + $0x60] sm:%s291]
                %325 = vst [vmem:[%s299 + $0x30] sm:%s291] %v324
                %v326 = vld [vmem:[%s298 + $0x64] sm:%s291]
                %327 = vst [vmem:[%s299 + $0x34] sm:%s291] %v326
                %v328 = vld [vmem:[%s298 + $0x68] sm:%s291]
                %329 = vst [vmem:[%s299 + $0x38] sm:%s291] %v328
                %v330 = vld [vmem:[%s298 + $0x6c] sm:%s291]
                %331 = vst [vmem:[%s299 + $0x3c] sm:%s291] %v330
              $region78: #{gpt_forward.8} parent=72 // loop_footer
                %s297 = sadd.s32 1, %s293
              $region79: #{gpt_forward.8} parent=72 // loop_footer_branch
                %292 = sbr.rel target = $region75
              $region80: #{gpt_forward.8} parent=72 // loop_exit
                _
            $region73: #{gpt_forward.8} parent=64 // pred_fallthru
              _
          $region65: #{gpt_forward.8} parent=60 // pred_fallthru
            _
          %384 = vnop
        $region61: #{gpt_forward.8} parent=15 // pred_fallthru
          _
        // Predicated region
        $region99: #{gpt_forward.8} parent=15 // pred_check
          %p385 = pneg %p106
        $region100: #{gpt_forward.8} parent=15 // pred_check_branch
          %387 = sbr.rel (%p385) target = $region102
        $region101: #{gpt_forward.8} parent=15 // pred_region
          %s388 = sand.u32 %s96, 1
          %s389 = sand.u32 %s96, 1
          %s390 = smul.addr %s389, 64
          %s391 = scalar_lea.vmem [#allocation7], %s390
          %s392 = smul.u32 4, %s18
          %s393 = smul.addr %s16, 32
          %s394 = sadd.s32 %s392, %s393
          %s395 = smul.addr %s394, 4
          %s396 = scalar_lea.vmem %s2, %s395
          // Predicated region
          $region103: #{gpt_forward.8} parent=101 // pred_check
            _
          $region104: #{gpt_forward.8} parent=101 // pred_check_branch
            %398 = sbr.rel (0) target = $region106
          $region105: #{gpt_forward.8} parent=101 // pred_region
            // Predicated region
            $region107: #{gpt_forward.8} parent=105 // pred_check
              _
            $region108: #{gpt_forward.8} parent=105 // pred_check_branch
              %400 = sbr.rel target = $region110
            $region109: #{gpt_forward.8} parent=105 // pred_region
              // Predicated region
              $region122: #{gpt_forward.8} parent=109 // pred_check
                _
              $region123: #{gpt_forward.8} parent=109 // pred_check_branch
                %446 = sbr.rel (0) target = $region125
              $region124: #{gpt_forward.8} parent=109 // pred_region
                loop: start=0, step=1, limit=1
                $region126: #{gpt_forward.8} parent=124 // loop_pre_header
                  _
                $region127: #{gpt_forward.8} parent=124 // loop_header
                  %s448 = sphi 0, %s452
                  %p449 = scmp.ge.s32.totalorder %s448, 1
                  %s453 = sphi %s396, %s396
                  %s454 = sphi %s391, %s391
                $region128: #{gpt_forward.8} parent=124 // loop_header_branch
                  %451 = sbr.rel (%p449) target = $region132
                $region129: #{gpt_forward.8} parent=124 // loop_body
                  _
                $region130: #{gpt_forward.8} parent=124 // loop_footer
                  %s452 = sadd.s32 1, %s448
                $region131: #{gpt_forward.8} parent=124 // loop_footer_branch
                  %447 = sbr.rel target = $region127
                $region132: #{gpt_forward.8} parent=124 // loop_exit
                  _
                %s456 = ssub.s32 16, 1
                loop: start=0, step=1, limit=1
                $region133: #{gpt_forward.8} parent=124 // loop_pre_header
                  _
                $region134: #{gpt_forward.8} parent=124 // loop_header
                  %s458 = sphi 0, %s462
                  %p459 = scmp.ge.s32.totalorder %s458, 1
                  %s463 = sphi %s396, %s396
                  %s464 = sphi %s391, %s391
                $region135: #{gpt_forward.8} parent=124 // loop_header_branch
                  %461 = sbr.rel (%p459) target = $region139
                $region136: #{gpt_forward.8} parent=124 // loop_body
                  %v465 = vld [vmem:[%s463] sm:%s456]
                  %466 = vst [vmem:[%s464] sm:%s456] %v465
                  %v467 = vld [vmem:[%s463 + $0x4] sm:%s456]
                  %468 = vst [vmem:[%s464 + $0x4] sm:%s456] %v467
                  %v469 = vld [vmem:[%s463 + $0x8] sm:%s456]
                  %470 = vst [vmem:[%s464 + $0x8] sm:%s456] %v469
                  %v471 = vld [vmem:[%s463 + $0xc] sm:%s456]
                  %472 = vst [vmem:[%s464 + $0xc] sm:%s456] %v471
                  %v473 = vld [vmem:[%s463 + $0x20] sm:%s456]
                  %474 = vst [vmem:[%s464 + $0x10] sm:%s456] %v473
                  %v475 = vld [vmem:[%s463 + $0x24] sm:%s456]
                  %476 = vst [vmem:[%s464 + $0x14] sm:%s456] %v475
                  %v477 = vld [vmem:[%s463 + $0x28] sm:%s456]
                  %478 = vst [vmem:[%s464 + $0x18] sm:%s456] %v477
                  %v479 = vld [vmem:[%s463 + $0x2c] sm:%s456]
                  %480 = vst [vmem:[%s464 + $0x1c] sm:%s456] %v479
                  %v481 = vld [vmem:[%s463 + $0x40] sm:%s456]
                  %482 = vst [vmem:[%s464 + $0x20] sm:%s456] %v481
                  %v483 = vld [vmem:[%s463 + $0x44] sm:%s456]
                  %484 = vst [vmem:[%s464 + $0x24] sm:%s456] %v483
                  %v485 = vld [vmem:[%s463 + $0x48] sm:%s456]
                  %486 = vst [vmem:[%s464 + $0x28] sm:%s456] %v485
                  %v487 = vld [vmem:[%s463 + $0x4c] sm:%s456]
                  %488 = vst [vmem:[%s464 + $0x2c] sm:%s456] %v487
                  %v489 = vld [vmem:[%s463 + $0x60] sm:%s456]
                  %490 = vst [vmem:[%s464 + $0x30] sm:%s456] %v489
                  %v491 = vld [vmem:[%s463 + $0x64] sm:%s456]
                  %492 = vst [vmem:[%s464 + $0x34] sm:%s456] %v491
                  %v493 = vld [vmem:[%s463 + $0x68] sm:%s456]
                  %494 = vst [vmem:[%s464 + $0x38] sm:%s456] %v493
                  %v495 = vld [vmem:[%s463 + $0x6c] sm:%s456]
                  %496 = vst [vmem:[%s464 + $0x3c] sm:%s456] %v495
                $region137: #{gpt_forward.8} parent=124 // loop_footer
                  %s462 = sadd.s32 1, %s458
                $region138: #{gpt_forward.8} parent=124 // loop_footer_branch
                  %457 = sbr.rel target = $region134
                $region139: #{gpt_forward.8} parent=124 // loop_exit
                  _
              $region125: #{gpt_forward.8} parent=109 // pred_fallthru
                _
            $region110: #{gpt_forward.8} parent=105 // pred_fallthru
              _
            // Predicated region
            $region111: #{gpt_forward.8} parent=105 // pred_check
              _
            $region112: #{gpt_forward.8} parent=105 // pred_check_branch
              %402 = sbr.rel (0) target = $region114
            $region113: #{gpt_forward.8} parent=105 // pred_region
              %s404 = ssub.s32 16, 1
              loop: start=0, step=1, limit=1
              $region115: #{gpt_forward.8} parent=113 // loop_pre_header
                _
              $region116: #{gpt_forward.8} parent=113 // loop_header
                %s406 = sphi 0, %s410
                %p407 = scmp.ge.s32.totalorder %s406, 1
                %s411 = sphi %s396, %s396
                %s412 = sphi %s391, %s391
              $region117: #{gpt_forward.8} parent=113 // loop_header_branch
                %409 = sbr.rel (%p407) target = $region121
              $region118: #{gpt_forward.8} parent=113 // loop_body
                %v413 = vld [vmem:[%s411] sm:%s404]
                %414 = vst [vmem:[%s412] sm:%s404] %v413
                %v415 = vld [vmem:[%s411 + $0x4] sm:%s404]
                %416 = vst [vmem:[%s412 + $0x4] sm:%s404] %v415
                %v417 = vld [vmem:[%s411 + $0x8] sm:%s404]
                %418 = vst [vmem:[%s412 + $0x8] sm:%s404] %v417
                %v419 = vld [vmem:[%s411 + $0xc] sm:%s404]
                %420 = vst [vmem:[%s412 + $0xc] sm:%s404] %v419
                %v421 = vld [vmem:[%s411 + $0x20] sm:%s404]
                %422 = vst [vmem:[%s412 + $0x10] sm:%s404] %v421
                %v423 = vld [vmem:[%s411 + $0x24] sm:%s404]
                %424 = vst [vmem:[%s412 + $0x14] sm:%s404] %v423
                %v425 = vld [vmem:[%s411 + $0x28] sm:%s404]
                %426 = vst [vmem:[%s412 + $0x18] sm:%s404] %v425
                %v427 = vld [vmem:[%s411 + $0x2c] sm:%s404]
                %428 = vst [vmem:[%s412 + $0x1c] sm:%s404] %v427
                %v429 = vld [vmem:[%s411 + $0x40] sm:%s404]
                %430 = vst [vmem:[%s412 + $0x20] sm:%s404] %v429
                %v431 = vld [vmem:[%s411 + $0x44] sm:%s404]
                %432 = vst [vmem:[%s412 + $0x24] sm:%s404] %v431
                %v433 = vld [vmem:[%s411 + $0x48] sm:%s404]
                %434 = vst [vmem:[%s412 + $0x28] sm:%s404] %v433
                %v435 = vld [vmem:[%s411 + $0x4c] sm:%s404]
                %436 = vst [vmem:[%s412 + $0x2c] sm:%s404] %v435
                %v437 = vld [vmem:[%s411 + $0x60] sm:%s404]
                %438 = vst [vmem:[%s412 + $0x30] sm:%s404] %v437
                %v439 = vld [vmem:[%s411 + $0x64] sm:%s404]
                %440 = vst [vmem:[%s412 + $0x34] sm:%s404] %v439
                %v441 = vld [vmem:[%s411 + $0x68] sm:%s404]
                %442 = vst [vmem:[%s412 + $0x38] sm:%s404] %v441
                %v443 = vld [vmem:[%s411 + $0x6c] sm:%s404]
                %444 = vst [vmem:[%s412 + $0x3c] sm:%s404] %v443
              $region119: #{gpt_forward.8} parent=113 // loop_footer
                %s410 = sadd.s32 1, %s406
              $region120: #{gpt_forward.8} parent=113 // loop_footer_branch
                %405 = sbr.rel target = $region116
              $region121: #{gpt_forward.8} parent=113 // loop_exit
                _
            $region114: #{gpt_forward.8} parent=105 // pred_fallthru
              _
          $region106: #{gpt_forward.8} parent=101 // pred_fallthru
            _
          %497 = vnop
        $region102: #{gpt_forward.8} parent=15 // pred_fallthru
          _
      $region16: #{gpt_forward.8} parent=5 // pred_fallthru
        _
      %p498 = scmp.le.s32.totalorder 1, %s9
      %p499 = scmp.lt.s32.totalorder %s9, 9
      %p500 = pnand %p498, %p499
      %p501 = pneg %p500
      // Predicated region
      $region140: #{gpt_forward.8} parent=5 // pred_check
        _
      $region141: #{gpt_forward.8} parent=5 // pred_check_branch
        %503 = sbr.rel (%p500) target = $region143
      $region142: #{gpt_forward.8} parent=5 // pred_region
        %s504 = ssub.s32 %s9, 1
        %s505 = sand.u32 %s43, 1
        %s506 = sand.u32 %s43, 1
        %s507 = smul.addr %s506, 64
        %s508 = scalar_lea.vmem [#allocation5], %s507
        // Predicated region
        $region144: #{gpt_forward.8} parent=142 // pred_check
          %p509 = pneg %p56
        $region145: #{gpt_forward.8} parent=142 // pred_check_branch
          %511 = sbr.rel (%p509) target = $region147
        $region146: #{gpt_forward.8} parent=142 // pred_region
          _
        $region147: #{gpt_forward.8} parent=142 // pred_fallthru
          _
        %s512 = sand.u32 %s71, 1
        %s513 = sand.u32 %s71, 1
        %s514 = smul.addr %s513, 64
        %s515 = scalar_lea.vmem [#allocation6], %s514
        // Predicated region
        $region148: #{gpt_forward.8} parent=142 // pred_check
          %p516 = pneg %p84
        $region149: #{gpt_forward.8} parent=142 // pred_check_branch
          %518 = sbr.rel (%p516) target = $region151
        $region150: #{gpt_forward.8} parent=142 // pred_region
          _
        $region151: #{gpt_forward.8} parent=142 // pred_fallthru
          _
        %s519 = sand.u32 %s99, 1
        %s520 = sand.u32 %s99, 1
        %s521 = smul.addr %s520, 64
        %s522 = scalar_lea.vmem [#allocation7], %s521
        // Predicated region
        $region152: #{gpt_forward.8} parent=142 // pred_check
          %p523 = pneg %p112
        $region153: #{gpt_forward.8} parent=142 // pred_check_branch
          %525 = sbr.rel (%p523) target = $region155
        $region154: #{gpt_forward.8} parent=142 // pred_region
          _
        $region155: #{gpt_forward.8} parent=142 // pred_fallthru
          _
        %s526 = sand.u32 %s43, 1
        %s527 = sand.u32 %s43, 1
        %s528 = smul.addr %s527, 64
        %s529 = scalar_lea.vmem [#allocation5], %s528
        %p530 = pneg %p56
        %p531 = pneg %p53
        %s532 = sand.u32 %s71, 1
        %s533 = sand.u32 %s71, 1
        %s534 = smul.addr %s533, 64
        %s535 = scalar_lea.vmem [#allocation6], %s534
        %p536 = pneg %p84
        %p537 = pneg %p81
        %s538 = sand.u32 %s99, 1
        %s539 = sand.u32 %s99, 1
        %s540 = smul.addr %s539, 64
        %s541 = scalar_lea.vmem [#allocation7], %s540
        %p542 = pneg %p112
        %p543 = pneg %p109
        %p544 = pneg %p140
        %p545 = pneg %p137
        %s546 = sand.u32 %s127, 1
        %s547 = sand.u32 %s127, 1
        %s548 = smul.addr %s547, 64
        %s549 = scalar_lea.vmem [#allocation8], %s548
        %s550 = smul.u32 4, %s20
        %s551 = smul.u32 4, %s21
        %s552 = smul.u32 4, %s21
        %s553 = smul.u32 4, %s20
        %p555 = scmp.eq.s32.totalorder %s21, 0
        // Predicated region
        $region156: #{gpt_forward.8} parent=142 // pred_check
          %p556 = pneg %p555
        $region157: #{gpt_forward.8} parent=142 // pred_check_branch
          %558 = sbr.rel (%p556) target = $region159
        $region158: #{gpt_forward.8} parent=142 // pred_region
          %vm559 = vcmask 7168
          %560 = vst.msk [vmem:[#allocation2] sm:$0xff] %vm559, -1e+30
          %561 = vst.msk [vmem:[#allocation2 + $0x8] sm:$0xff] %vm559, -1e+30
          %562 = vst.msk [vmem:[#allocation2 + $0x10] sm:$0xff] %vm559, -1e+30
          %563 = vst.msk [vmem:[#allocation2 + $0x18] sm:$0xff] %vm559, -1e+30
          %564 = vst.msk [vmem:[#allocation2 + $0x20] sm:$0xff] %vm559, -1e+30
          %565 = vst.msk [vmem:[#allocation2 + $0x28] sm:$0xff] %vm559, -1e+30
          %566 = vst.msk [vmem:[#allocation2 + $0x30] sm:$0xff] %vm559, -1e+30
          %567 = vst.msk [vmem:[#allocation2 + $0x38] sm:$0xff] %vm559, -1e+30
          %568 = vst.msk [vmem:[#allocation2 + $0x40] sm:$0xff] %vm559, -1e+30
          %569 = vst.msk [vmem:[#allocation2 + $0x48] sm:$0xff] %vm559, -1e+30
          %570 = vst.msk [vmem:[#allocation2 + $0x50] sm:$0xff] %vm559, -1e+30
          %571 = vst.msk [vmem:[#allocation2 + $0x58] sm:$0xff] %vm559, -1e+30
          %572 = vst.msk [vmem:[#allocation2 + $0x60] sm:$0xff] %vm559, -1e+30
          %573 = vst.msk [vmem:[#allocation2 + $0x68] sm:$0xff] %vm559, -1e+30
          %574 = vst.msk [vmem:[#allocation2 + $0x70] sm:$0xff] %vm559, -1e+30
          %575 = vst.msk [vmem:[#allocation2 + $0x78] sm:$0xff] %vm559, -1e+30
          %576 = vst.msk [vmem:[#allocation3] sm:$0xff] %vm559, 0.0
          %577 = vst.msk [vmem:[#allocation3 + $0x8] sm:$0xff] %vm559, 0.0
          %578 = vst.msk [vmem:[#allocation3 + $0x10] sm:$0xff] %vm559, 0.0
          %579 = vst.msk [vmem:[#allocation3 + $0x18] sm:$0xff] %vm559, 0.0
          %580 = vst.msk [vmem:[#allocation3 + $0x20] sm:$0xff] %vm559, 0.0
          %581 = vst.msk [vmem:[#allocation3 + $0x28] sm:$0xff] %vm559, 0.0
          %582 = vst.msk [vmem:[#allocation3 + $0x30] sm:$0xff] %vm559, 0.0
          %583 = vst.msk [vmem:[#allocation3 + $0x38] sm:$0xff] %vm559, 0.0
          %584 = vst.msk [vmem:[#allocation3 + $0x40] sm:$0xff] %vm559, 0.0
          %585 = vst.msk [vmem:[#allocation3 + $0x48] sm:$0xff] %vm559, 0.0
          %586 = vst.msk [vmem:[#allocation3 + $0x50] sm:$0xff] %vm559, 0.0
          %587 = vst.msk [vmem:[#allocation3 + $0x58] sm:$0xff] %vm559, 0.0
          %588 = vst.msk [vmem:[#allocation3 + $0x60] sm:$0xff] %vm559, 0.0
          %589 = vst.msk [vmem:[#allocation3 + $0x68] sm:$0xff] %vm559, 0.0
          %590 = vst.msk [vmem:[#allocation3 + $0x70] sm:$0xff] %vm559, 0.0
          %591 = vst.msk [vmem:[#allocation3 + $0x78] sm:$0xff] %vm559, 0.0
          %vm592 = vcmask 130048
          %593 = vst.msk [vmem:[#allocation4] sm:$0xff] %vm592, 0.0
          %594 = vst.msk [vmem:[#allocation4 + $0x8] sm:$0xff] %vm592, 0.0
          %595 = vst.msk [vmem:[#allocation4 + $0x10] sm:$0xff] %vm592, 0.0
          %596 = vst.msk [vmem:[#allocation4 + $0x18] sm:$0xff] %vm592, 0.0
          %597 = vst.msk [vmem:[#allocation4 + $0x20] sm:$0xff] %vm592, 0.0
          %598 = vst.msk [vmem:[#allocation4 + $0x28] sm:$0xff] %vm592, 0.0
          %599 = vst.msk [vmem:[#allocation4 + $0x30] sm:$0xff] %vm592, 0.0
          %600 = vst.msk [vmem:[#allocation4 + $0x38] sm:$0xff] %vm592, 0.0
          %601 = vst.msk [vmem:[#allocation4 + $0x40] sm:$0xff] %vm592, 0.0
          %602 = vst.msk [vmem:[#allocation4 + $0x48] sm:$0xff] %vm592, 0.0
          %603 = vst.msk [vmem:[#allocation4 + $0x50] sm:$0xff] %vm592, 0.0
          %604 = vst.msk [vmem:[#allocation4 + $0x58] sm:$0xff] %vm592, 0.0
          %605 = vst.msk [vmem:[#allocation4 + $0x60] sm:$0xff] %vm592, 0.0
          %606 = vst.msk [vmem:[#allocation4 + $0x68] sm:$0xff] %vm592, 0.0
          %607 = vst.msk [vmem:[#allocation4 + $0x70] sm:$0xff] %vm592, 0.0
          %608 = vst.msk [vmem:[#allocation4 + $0x78] sm:$0xff] %vm592, 0.0
        $region159: #{gpt_forward.8} parent=142 // pred_fallthru
          _
        %p609 = scmp.le.s32.totalorder %s21, %s20
        // Predicated region
        $region160: #{gpt_forward.8} parent=142 // pred_check
          %p610 = pneg %p609
        $region161: #{gpt_forward.8} parent=142 // pred_check_branch
          %612 = sbr.rel (%p610) target = $region163
        $region162: #{gpt_forward.8} parent=142 // pred_region
          %v613 = vld [vmem:[%s508] sm:$0xf]
          %v614 = vld [vmem:[%s508 + $0x4] sm:$0xf]
          %v615 = vld [vmem:[%s508 + $0x8] sm:$0xf]
          %v616 = vld [vmem:[%s508 + $0xc] sm:$0xf]
          %v617 = vld [vmem:[%s508 + $0x10] sm:$0xf]
          %v618 = vld [vmem:[%s508 + $0x14] sm:$0xf]
          %v619 = vld [vmem:[%s508 + $0x18] sm:$0xf]
          %v620 = vld [vmem:[%s508 + $0x1c] sm:$0xf]
          %v621 = vld [vmem:[%s508 + $0x20] sm:$0xf]
          %v622 = vld [vmem:[%s508 + $0x24] sm:$0xf]
          %v623 = vld [vmem:[%s508 + $0x28] sm:$0xf]
          %v624 = vld [vmem:[%s508 + $0x2c] sm:$0xf]
          %v625 = vld [vmem:[%s508 + $0x30] sm:$0xf]
          %v626 = vld [vmem:[%s508 + $0x34] sm:$0xf]
          %v627 = vld [vmem:[%s508 + $0x38] sm:$0xf]
          %v628 = vld [vmem:[%s508 + $0x3c] sm:$0xf]
          %v629 = vld [vmem:[%s515] sm:$0xf]
          %v630 = vld [vmem:[%s515 + $0x4] sm:$0xf]
          %v631 = vld [vmem:[%s515 + $0x8] sm:$0xf]
          %v632 = vld [vmem:[%s515 + $0xc] sm:$0xf]
          %v633 = vld [vmem:[%s515 + $0x10] sm:$0xf]
          %v634 = vld [vmem:[%s515 + $0x14] sm:$0xf]
          %v635 = vld [vmem:[%s515 + $0x18] sm:$0xf]
          %v636 = vld [vmem:[%s515 + $0x1c] sm:$0xf]
          %v637 = vld [vmem:[%s515 + $0x20] sm:$0xf]
          %v638 = vld [vmem:[%s515 + $0x24] sm:$0xf]
          %v639 = vld [vmem:[%s515 + $0x28] sm:$0xf]
          %v640 = vld [vmem:[%s515 + $0x2c] sm:$0xf]
          %v641 = vld [vmem:[%s515 + $0x30] sm:$0xf]
          %v642 = vld [vmem:[%s515 + $0x34] sm:$0xf]
          %v643 = vld [vmem:[%s515 + $0x38] sm:$0xf]
          %v644 = vld [vmem:[%s515 + $0x3c] sm:$0xf]
          %v645 = vld [vmem:[%s522] sm:$0xf]
          %v646 = vld [vmem:[%s522 + $0x4] sm:$0xf]
          %v647 = vld [vmem:[%s522 + $0x8] sm:$0xf]
          %v648 = vld [vmem:[%s522 + $0xc] sm:$0xf]
          %v649 = vld [vmem:[%s522 + $0x10] sm:$0xf]
          %v650 = vld [vmem:[%s522 + $0x14] sm:$0xf]
          %v651 = vld [vmem:[%s522 + $0x18] sm:$0xf]
          %v652 = vld [vmem:[%s522 + $0x1c] sm:$0xf]
          %v653 = vld [vmem:[%s522 + $0x20] sm:$0xf]
          %v654 = vld [vmem:[%s522 + $0x24] sm:$0xf]
          %v655 = vld [vmem:[%s522 + $0x28] sm:$0xf]
          %v656 = vld [vmem:[%s522 + $0x2c] sm:$0xf]
          %v657 = vld [vmem:[%s522 + $0x30] sm:$0xf]
          %v658 = vld [vmem:[%s522 + $0x34] sm:$0xf]
          %v659 = vld [vmem:[%s522 + $0x38] sm:$0xf]
          %v660 = vld [vmem:[%s522 + $0x3c] sm:$0xf]
          %v665 = vunpack.c.l.b16 %v613
          %v666 = vunpack.c.l.b16 %v614
          %v667 = vunpack.c.l.b16 %v615
          %v668 = vunpack.c.l.b16 %v616
          %v669 = vpack.c.b16 %v666, %v665
          %v670 = vpack.c.b16 %v668, %v667
          %v675 = vunpack.c.l.b16 %v629
          %v676 = vunpack.c.l.b16 %v630
          %v677 = vunpack.c.l.b16 %v631
          %v678 = vunpack.c.l.b16 %v632
          %v679 = vpack.c.b16 %v676, %v675
          %v680 = vpack.c.b16 %v678, %v677
          %vm681 = vcmask 130048
          %v683 = vsel %vm681, %v669, 0
          %v686 = vsel %vm681, %v670, 0
          %v689 = vsel %vm681, %v679, 0
          %v692 = vsel %vm681, %v680, 0
          %694 = vmatprep.subr.bf16.mxu0 0
          %695 = vmatpush1.bf16.xpose.msra.mxu0 0
          %696 = vmatprep.subr.bf16.mxu0 0
          %697 = vmatpush1.bf16.xpose.msra.mxu0 0
          %698 = vmatprep.subr.bf16.mxu0 0
          %699 = vmatpush1.bf16.xpose.msra.mxu0 0
          %700 = vmatprep.subr.bf16.mxu0 0
          %701 = vmatpush1.bf16.xpose.msra.mxu0 0
          %702 = vmatprep.subr.bf16.mxu0 0
          %703 = vmatpush1.bf16.xpose.msra.mxu0 0
          %704 = vmatprep.subr.bf16.mxu0 0
          %705 = vmatpush1.bf16.xpose.msra.mxu0 0
          %706 = vmatprep.subr.bf16.mxu0 0
          %707 = vmatpush1.bf16.xpose.msra.mxu0 %v692
          %708 = vmatprep.subr.bf16.mxu0 0
          %709 = vmatpush1.bf16.xpose.msra.mxu0 %v689
          %710 = vmatprep.subr.bf16.mxu0 0
          %711 = vmatpush2.bf16.xpose.msra.mxu0 0
          %712 = vmatprep.subr.bf16.mxu0 0
          %713 = vmatpush2.bf16.xpose.msra.mxu0 0
          %714 = vmatprep.subr.bf16.mxu0 0
          %715 = vmatpush2.bf16.xpose.msra.mxu0 0
          %716 = vmatprep.subr.bf16.mxu0 0
          %717 = vmatpush2.bf16.xpose.msra.mxu0 0
          %718 = vmatprep.subr.bf16.mxu0 0
          %719 = vmatpush2.bf16.xpose.msra.mxu0 0
          %720 = vmatprep.subr.bf16.mxu0 0
          %721 = vmatpush2.bf16.xpose.msra.mxu0 0
          %722 = vmatprep.subr.bf16.mxu0 0
          %723 = vmatpush2.bf16.xpose.msra.mxu0 0
          %724 = vmatprep.subr.bf16.mxu0 0
          %725 = vmatpush2.bf16.xpose.msra.mxu0 0
          %726 = vmatprep.mubr.bf16.mxu0 0
          %727 = vmatmul.mubr.bf16.gmra.mxu0 %v683
          %v728 = vpop.f32.mrf.mxu0
          %v729 = vadd.f32 0.0, %v728
          %v730 = vpop.f32.mrf.mxu0
          %v731 = vpop.f32.mrf.mxu0
          %v732 = vadd.f32 0.0, %v731
          %v733 = vpop.f32.mrf.mxu0
          %734 = vmatprep.mubr.bf16.mxu0 0
          %735 = vmatmul.mubr.bf16.gmra.mxu0 %v686
          %v736 = vpop.f32.mrf.mxu0
          %v737 = vadd.f32 0.0, %v736
          %v738 = vpop.f32.mrf.mxu0
          %v739 = vpop.f32.mrf.mxu0
          %v740 = vadd.f32 0.0, %v739
          %v741 = vpop.f32.mrf.mxu0
          %742 = vdwg.mxu0
          %v747 = vunpack.c.l.b16 %v617
          %v748 = vunpack.c.l.b16 %v618
          %v749 = vunpack.c.l.b16 %v619
          %v750 = vunpack.c.l.b16 %v620
          %v751 = vpack.c.b16 %v748, %v747
          %v752 = vpack.c.b16 %v750, %v749
          %v757 = vunpack.c.l.b16 %v633
          %v758 = vunpack.c.l.b16 %v634
          %v759 = vunpack.c.l.b16 %v635
          %v760 = vunpack.c.l.b16 %v636
          %v761 = vpack.c.b16 %v758, %v757
          %v762 = vpack.c.b16 %v760, %v759
          %v764 = vsel %vm681, %v751, 0
          %v767 = vsel %vm681, %v752, 0
          %v770 = vsel %vm681, %v761, 0
          %v773 = vsel %vm681, %v762, 0
          %775 = vmatprep.subr.bf16.mxu0 0
          %776 = vmatpush1.bf16.xpose.msra.mxu0 0
          %777 = vmatprep.subr.bf16.mxu0 0
          %778 = vmatpush1.bf16.xpose.msra.mxu0 0
          %779 = vmatprep.subr.bf16.mxu0 0
          %780 = vmatpush1.bf16.xpose.msra.mxu0 0
          %781 = vmatprep.subr.bf16.mxu0 0
          %782 = vmatpush1.bf16.xpose.msra.mxu0 0
          %783 = vmatprep.subr.bf16.mxu0 0
          %784 = vmatpush1.bf16.xpose.msra.mxu0 0
          %785 = vmatprep.subr.bf16.mxu0 0
          %786 = vmatpush1.bf16.xpose.msra.mxu0 0
          %787 = vmatprep.subr.bf16.mxu0 0
          %788 = vmatpush1.bf16.xpose.msra.mxu0 %v773
          %789 = vmatprep.subr.bf16.mxu0 0
          %790 = vmatpush1.bf16.xpose.msra.mxu0 %v770
          %791 = vmatprep.subr.bf16.mxu0 0
          %792 = vmatpush2.bf16.xpose.msra.mxu0 0
          %793 = vmatprep.subr.bf16.mxu0 0
          %794 = vmatpush2.bf16.xpose.msra.mxu0 0
          %795 = vmatprep.subr.bf16.mxu0 0
          %796 = vmatpush2.bf16.xpose.msra.mxu0 0
          %797 = vmatprep.subr.bf16.mxu0 0
          %798 = vmatpush2.bf16.xpose.msra.mxu0 0
          %799 = vmatprep.subr.bf16.mxu0 0
          %800 = vmatpush2.bf16.xpose.msra.mxu0 0
          %801 = vmatprep.subr.bf16.mxu0 0
          %802 = vmatpush2.bf16.xpose.msra.mxu0 0
          %803 = vmatprep.subr.bf16.mxu0 0
          %804 = vmatpush2.bf16.xpose.msra.mxu0 0
          %805 = vmatprep.subr.bf16.mxu0 0
          %806 = vmatpush2.bf16.xpose.msra.mxu0 0
          %807 = vmatprep.mubr.bf16.mxu0 0
          %808 = vmatmul.mubr.bf16.gmra.mxu0 %v764
          %v809 = vpop.f32.mrf.mxu0
          %v810 = vadd.f32 0.0, %v809
          %v811 = vpop.f32.mrf.mxu0
          %v812 = vpop.f32.mrf.mxu0
          %v813 = vadd.f32 0.0, %v812
          %v814 = vpop.f32.mrf.mxu0
          %815 = vmatprep.mubr.bf16.mxu0 0
          %816 = vmatmul.mubr.bf16.gmra.mxu0 %v767
          %v817 = vpop.f32.mrf.mxu0
          %v818 = vadd.f32 0.0, %v817
          %v819 = vpop.f32.mrf.mxu0
          %v820 = vpop.f32.mrf.mxu0
          %v821 = vadd.f32 0.0, %v820
          %v822 = vpop.f32.mrf.mxu0
          %823 = vdwg.mxu0
          %v828 = vunpack.c.l.b16 %v621
          %v829 = vunpack.c.l.b16 %v622
          %v830 = vunpack.c.l.b16 %v623
          %v831 = vunpack.c.l.b16 %v624
          %v832 = vpack.c.b16 %v829, %v828
          %v833 = vpack.c.b16 %v831, %v830
          %v838 = vunpack.c.l.b16 %v637
          %v839 = vunpack.c.l.b16 %v638
          %v840 = vunpack.c.l.b16 %v639
          %v841 = vunpack.c.l.b16 %v640
          %v842 = vpack.c.b16 %v839, %v838
          %v843 = vpack.c.b16 %v841, %v840
          %v845 = vsel %vm681, %v832, 0
          %v848 = vsel %vm681, %v833, 0
          %v851 = vsel %vm681, %v842, 0
          %v854 = vsel %vm681, %v843, 0
          %856 = vmatprep.subr.bf16.mxu0 0
          %857 = vmatpush1.bf16.xpose.msra.mxu0 0
          %858 = vmatprep.subr.bf16.mxu0 0
          %859 = vmatpush1.bf16.xpose.msra.mxu0 0
          %860 = vmatprep.subr.bf16.mxu0 0
          %861 = vmatpush1.bf16.xpose.msra.mxu0 0
          %862 = vmatprep.subr.bf16.mxu0 0
          %863 = vmatpush1.bf16.xpose.msra.mxu0 0
          %864 = vmatprep.subr.bf16.mxu0 0
          %865 = vmatpush1.bf16.xpose.msra.mxu0 0
          %866 = vmatprep.subr.bf16.mxu0 0
          %867 = vmatpush1.bf16.xpose.msra.mxu0 0
          %868 = vmatprep.subr.bf16.mxu0 0
          %869 = vmatpush1.bf16.xpose.msra.mxu0 %v854
          %870 = vmatprep.subr.bf16.mxu0 0
          %871 = vmatpush1.bf16.xpose.msra.mxu0 %v851
          %872 = vmatprep.subr.bf16.mxu0 0
          %873 = vmatpush2.bf16.xpose.msra.mxu0 0
          %874 = vmatprep.subr.bf16.mxu0 0
          %875 = vmatpush2.bf16.xpose.msra.mxu0 0
          %876 = vmatprep.subr.bf16.mxu0 0
          %877 = vmatpush2.bf16.xpose.msra.mxu0 0
          %878 = vmatprep.subr.bf16.mxu0 0
          %879 = vmatpush2.bf16.xpose.msra.mxu0 0
          %880 = vmatprep.subr.bf16.mxu0 0
          %881 = vmatpush2.bf16.xpose.msra.mxu0 0
          %882 = vmatprep.subr.bf16.mxu0 0
          %883 = vmatpush2.bf16.xpose.msra.mxu0 0
          %884 = vmatprep.subr.bf16.mxu0 0
          %885 = vmatpush2.bf16.xpose.msra.mxu0 0
          %886 = vmatprep.subr.bf16.mxu0 0
          %887 = vmatpush2.bf16.xpose.msra.mxu0 0
          %888 = vmatprep.mubr.bf16.mxu0 0
          %889 = vmatmul.mubr.bf16.gmra.mxu0 %v845
          %v890 = vpop.f32.mrf.mxu0
          %v891 = vadd.f32 0.0, %v890
          %v892 = vpop.f32.mrf.mxu0
          %v893 = vpop.f32.mrf.mxu0
          %v894 = vadd.f32 0.0, %v893
          %v895 = vpop.f32.mrf.mxu0
          %896 = vmatprep.mubr.bf16.mxu0 0
          %897 = vmatmul.mubr.bf16.gmra.mxu0 %v848
          %v898 = vpop.f32.mrf.mxu0
          %v899 = vadd.f32 0.0, %v898
          %v900 = vpop.f32.mrf.mxu0
          %v901 = vpop.f32.mrf.mxu0
          %v902 = vadd.f32 0.0, %v901
          %v903 = vpop.f32.mrf.mxu0
          %904 = vdwg.mxu0
          %v909 = vunpack.c.l.b16 %v625
          %v910 = vunpack.c.l.b16 %v626
          %v911 = vunpack.c.l.b16 %v627
          %v912 = vunpack.c.l.b16 %v628
          %v913 = vpack.c.b16 %v910, %v909
          %v914 = vpack.c.b16 %v912, %v911
          %v919 = vunpack.c.l.b16 %v641
          %v920 = vunpack.c.l.b16 %v642
          %v921 = vunpack.c.l.b16 %v643
          %v922 = vunpack.c.l.b16 %v644
          %v923 = vpack.c.b16 %v920, %v919
          %v924 = vpack.c.b16 %v922, %v921
          %v926 = vsel %vm681, %v913, 0
          %v929 = vsel %vm681, %v914, 0
          %v932 = vsel %vm681, %v923, 0
          %v935 = vsel %vm681, %v924, 0
          %937 = vmatprep.subr.bf16.mxu0 0
          %938 = vmatpush1.bf16.xpose.msra.mxu0 0
          %939 = vmatprep.subr.bf16.mxu0 0
          %940 = vmatpush1.bf16.xpose.msra.mxu0 0
          %941 = vmatprep.subr.bf16.mxu0 0
          %942 = vmatpush1.bf16.xpose.msra.mxu0 0
          %943 = vmatprep.subr.bf16.mxu0 0
          %944 = vmatpush1.bf16.xpose.msra.mxu0 0
          %945 = vmatprep.subr.bf16.mxu0 0
          %946 = vmatpush1.bf16.xpose.msra.mxu0 0
          %947 = vmatprep.subr.bf16.mxu0 0
          %948 = vmatpush1.bf16.xpose.msra.mxu0 0
          %949 = vmatprep.subr.bf16.mxu0 0
          %950 = vmatpush1.bf16.xpose.msra.mxu0 %v935
          %951 = vmatprep.subr.bf16.mxu0 0
          %952 = vmatpush1.bf16.xpose.msra.mxu0 %v932
          %953 = vmatprep.subr.bf16.mxu0 0
          %954 = vmatpush2.bf16.xpose.msra.mxu0 0
          %955 = vmatprep.subr.bf16.mxu0 0
          %956 = vmatpush2.bf16.xpose.msra.mxu0 0
          %957 = vmatprep.subr.bf16.mxu0 0
          %958 = vmatpush2.bf16.xpose.msra.mxu0 0
          %959 = vmatprep.subr.bf16.mxu0 0
          %960 = vmatpush2.bf16.xpose.msra.mxu0 0
          %961 = vmatprep.subr.bf16.mxu0 0
          %962 = vmatpush2.bf16.xpose.msra.mxu0 0
          %963 = vmatprep.subr.bf16.mxu0 0
          %964 = vmatpush2.bf16.xpose.msra.mxu0 0
          %965 = vmatprep.subr.bf16.mxu0 0
          %966 = vmatpush2.bf16.xpose.msra.mxu0 0
          %967 = vmatprep.subr.bf16.mxu0 0
          %968 = vmatpush2.bf16.xpose.msra.mxu0 0
          %969 = vmatprep.mubr.bf16.mxu0 0
          %970 = vmatmul.mubr.bf16.gmra.mxu0 %v926
          %v971 = vpop.f32.mrf.mxu0
          %v972 = vadd.f32 0.0, %v971
          %v973 = vpop.f32.mrf.mxu0
          %v974 = vpop.f32.mrf.mxu0
          %v975 = vadd.f32 0.0, %v974
          %v976 = vpop.f32.mrf.mxu0
          %977 = vmatprep.mubr.bf16.mxu0 0
          %978 = vmatmul.mubr.bf16.gmra.mxu0 %v929
          %v979 = vpop.f32.mrf.mxu0
          %v980 = vadd.f32 0.0, %v979
          %v981 = vpop.f32.mrf.mxu0
          %v982 = vpop.f32.mrf.mxu0
          %v983 = vadd.f32 0.0, %v982
          %v984 = vpop.f32.mrf.mxu0
          %985 = vdwg.mxu0
          %s986 = smul.u32 %s20, 32
          %v987 = vlaneseq
          %v988 = vshrl.u32 %v987, 7
          %v989 = vadd.s32 %v988, 8
          %v990 = vadd.s32 %v988, 16
          %v991 = vadd.s32 %v988, 24
          %v992 = vstv %s986
          %v993 = vadd.s32 %v992, %v988
          %v994 = vadd.s32 %v992, %v989
          %v995 = vadd.s32 %v992, %v990
          %v996 = vadd.s32 %v992, %v991
          %s997 = smul.u32 %s21, 32
          %v998 = vlaneseq
          %v999 = vand.u32 %v998, 127
          %v1000 = vstv %s997
          %v1001 = vadd.s32 %v1000, %v999
          %vm1002 = vcmp.gt.s32.totalorder %v1001, %v993
          %vm1003 = vcmp.gt.s32.totalorder %v1001, %v994
          %vm1004 = vcmp.gt.s32.totalorder %v1001, %v995
          %vm1005 = vcmp.gt.s32.totalorder %v1001, %v996
          %v1006 = vsel %vm1002, -1e+30, %v729
          %v1007 = vsel %vm1003, -1e+30, %v732
          %v1008 = vsel %vm1004, -1e+30, %v737
          %v1009 = vsel %vm1005, -1e+30, %v740
          %v1010 = vsel %vm1002, -1e+30, %v810
          %v1011 = vsel %vm1003, -1e+30, %v813
          %v1012 = vsel %vm1004, -1e+30, %v818
          %v1013 = vsel %vm1005, -1e+30, %v821
          %v1014 = vsel %vm1002, -1e+30, %v891
          %v1015 = vsel %vm1003, -1e+30, %v894
          %v1016 = vsel %vm1004, -1e+30, %v899
          %v1017 = vsel %vm1005, -1e+30, %v902
          %v1018 = vsel %vm1002, -1e+30, %v972
          %v1019 = vsel %vm1003, -1e+30, %v975
          %v1020 = vsel %vm1004, -1e+30, %v980
          %v1021 = vsel %vm1005, -1e+30, %v983
          %v1022 = vld [vmem:[#allocation2] sm:$0xff]
          %v1023 = vld [vmem:[#allocation2 + $0x8] sm:$0xff]
          %v1024 = vld [vmem:[#allocation2 + $0x10] sm:$0xff]
          %v1025 = vld [vmem:[#allocation2 + $0x18] sm:$0xff]
          %v1026 = vld [vmem:[#allocation2 + $0x20] sm:$0xff]
          %v1027 = vld [vmem:[#allocation2 + $0x28] sm:$0xff]
          %v1028 = vld [vmem:[#allocation2 + $0x30] sm:$0xff]
          %v1029 = vld [vmem:[#allocation2 + $0x38] sm:$0xff]
          %v1030 = vld [vmem:[#allocation2 + $0x40] sm:$0xff]
          %v1031 = vld [vmem:[#allocation2 + $0x48] sm:$0xff]
          %v1032 = vld [vmem:[#allocation2 + $0x50] sm:$0xff]
          %v1033 = vld [vmem:[#allocation2 + $0x58] sm:$0xff]
          %v1034 = vld [vmem:[#allocation2 + $0x60] sm:$0xff]
          %v1035 = vld [vmem:[#allocation2 + $0x68] sm:$0xff]
          %v1036 = vld [vmem:[#allocation2 + $0x70] sm:$0xff]
          %v1037 = vld [vmem:[#allocation2 + $0x78] sm:$0xff]
          %vm1038 = vcmask 261120
          %v1039 = vsel %vm1038, %v1006, -inf
          %1040 = vmax.xlane.f32.xlu0 %v1039
          %v1041 = vpop.xlane.xlu0 %1040
          %v1042 = vsel %vm1038, %v1007, -inf
          %1043 = vmax.xlane.f32.xlu0 %v1042
          %v1044 = vpop.xlane.xlu0 %1043
          %v1045 = vsel %vm1038, %v1008, -inf
          %1046 = vmax.xlane.f32.xlu0 %v1045
          %v1047 = vpop.xlane.xlu0 %1046
          %v1048 = vsel %vm1038, %v1009, -inf
          %1049 = vmax.xlane.f32.xlu0 %v1048
          %v1050 = vpop.xlane.xlu0 %1049
          %v1051 = vsel %vm1038, %v1010, -inf
          %1052 = vmax.xlane.f32.xlu0 %v1051
          %v1053 = vpop.xlane.xlu0 %1052
          %v1054 = vsel %vm1038, %v1011, -inf
          %1055 = vmax.xlane.f32.xlu0 %v1054
          %v1056 = vpop.xlane.xlu0 %1055
          %v1057 = vsel %vm1038, %v1012, -inf
          %1058 = vmax.xlane.f32.xlu0 %v1057
          %v1059 = vpop.xlane.xlu0 %1058
          %v1060 = vsel %vm1038, %v1013, -inf
          %1061 = vmax.xlane.f32.xlu0 %v1060
          %v1062 = vpop.xlane.xlu0 %1061
          %v1063 = vsel %vm1038, %v1014, -inf
          %1064 = vmax.xlane.f32.xlu0 %v1063
          %v1065 = vpop.xlane.xlu0 %1064
          %v1066 = vsel %vm1038, %v1015, -inf
          %1067 = vmax.xlane.f32.xlu0 %v1066
          %v1068 = vpop.xlane.xlu0 %1067
          %v1069 = vsel %vm1038, %v1016, -inf
          %1070 = vmax.xlane.f32.xlu0 %v1069
          %v1071 = vpop.xlane.xlu0 %1070
          %v1072 = vsel %vm1038, %v1017, -inf
          %1073 = vmax.xlane.f32.xlu0 %v1072
          %v1074 = vpop.xlane.xlu0 %1073
          %v1075 = vsel %vm1038, %v1018, -inf
          %1076 = vmax.xlane.f32.xlu0 %v1075
          %v1077 = vpop.xlane.xlu0 %1076
          %v1078 = vsel %vm1038, %v1019, -inf
          %1079 = vmax.xlane.f32.xlu0 %v1078
          %v1080 = vpop.xlane.xlu0 %1079
          %v1081 = vsel %vm1038, %v1020, -inf
          %1082 = vmax.xlane.f32.xlu0 %v1081
          %v1083 = vpop.xlane.xlu0 %1082
          %v1084 = vsel %vm1038, %v1021, -inf
          %1085 = vmax.xlane.f32.xlu0 %v1084
          %v1086 = vpop.xlane.xlu0 %1085
          %v1087 = vmax.f32 %v1022, %v1041
          %v1088 = vmax.f32 %v1023, %v1044
          %v1089 = vmax.f32 %v1024, %v1047
          %v1090 = vmax.f32 %v1025, %v1050
          %v1091 = vmax.f32 %v1026, %v1053
          %v1092 = vmax.f32 %v1027, %v1056
          %v1093 = vmax.f32 %v1028, %v1059
          %v1094 = vmax.f32 %v1029, %v1062
          %v1095 = vmax.f32 %v1030, %v1065
          %v1096 = vmax.f32 %v1031, %v1068
          %v1097 = vmax.f32 %v1032, %v1071
          %v1098 = vmax.f32 %v1033, %v1074
          %v1099 = vmax.f32 %v1034, %v1077
          %v1100 = vmax.f32 %v1035, %v1080
          %v1101 = vmax.f32 %v1036, %v1083
          %v1102 = vmax.f32 %v1037, %v1086
          %v1103 = vsub.f32 %v1022, %v1087
          %v1104 = vsub.f32 %v1023, %v1088
          %v1105 = vsub.f32 %v1024, %v1089
          %v1106 = vsub.f32 %v1025, %v1090
          %v1107 = vsub.f32 %v1026, %v1091
          %v1108 = vsub.f32 %v1027, %v1092
          %v1109 = vsub.f32 %v1028, %v1093
          %v1110 = vsub.f32 %v1029, %v1094
          %v1111 = vsub.f32 %v1030, %v1095
          %v1112 = vsub.f32 %v1031, %v1096
          %v1113 = vsub.f32 %v1032, %v1097
          %v1114 = vsub.f32 %v1033, %v1098
          %v1115 = vsub.f32 %v1034, %v1099
          %v1116 = vsub.f32 %v1035, %v1100
          %v1117 = vsub.f32 %v1036, %v1101
          %v1118 = vsub.f32 %v1037, %v1102
          %v1119 = vmul.f32 %v1103, 1.442695
          %v1120 = vpow.pop %v1119
          %v1121 = vmul.f32 %v1104, 1.442695
          %v1122 = vpow.pop %v1121
          %v1123 = vmul.f32 %v1105, 1.442695
          %v1124 = vpow.pop %v1123
          %v1125 = vmul.f32 %v1106, 1.442695
          %v1126 = vpow.pop %v1125
          %v1127 = vmul.f32 %v1107, 1.442695
          %v1128 = vpow.pop %v1127
          %v1129 = vmul.f32 %v1108, 1.442695
          %v1130 = vpow.pop %v1129
          %v1131 = vmul.f32 %v1109, 1.442695
          %v1132 = vpow.pop %v1131
          %v1133 = vmul.f32 %v1110, 1.442695
          %v1134 = vpow.pop %v1133
          %v1135 = vmul.f32 %v1111, 1.442695
          %v1136 = vpow.pop %v1135
          %v1137 = vmul.f32 %v1112, 1.442695
          %v1138 = vpow.pop %v1137
          %v1139 = vmul.f32 %v1113, 1.442695
          %v1140 = vpow.pop %v1139
          %v1141 = vmul.f32 %v1114, 1.442695
          %v1142 = vpow.pop %v1141
          %v1143 = vmul.f32 %v1115, 1.442695
          %v1144 = vpow.pop %v1143
          %v1145 = vmul.f32 %v1116, 1.442695
          %v1146 = vpow.pop %v1145
          %v1147 = vmul.f32 %v1117, 1.442695
          %v1148 = vpow.pop %v1147
          %v1149 = vmul.f32 %v1118, 1.442695
          %v1150 = vpow.pop %v1149
          %1152 = vset.pattern.permute.xlu0 0
          %1153 = vperm.xlu0 %1152, %v1087
          %v1154 = vpop.permute.xlu0 %1153
          %1157 = vset.pattern.permute.xlu0 0
          %1158 = vperm.xlu0 %1157, %v1088
          %v1159 = vpop.permute.xlu0 %1158
          %1162 = vset.pattern.permute.xlu0 0
          %1163 = vperm.xlu0 %1162, %v1089
          %v1164 = vpop.permute.xlu0 %1163
          %1167 = vset.pattern.permute.xlu0 0
          %1168 = vperm.xlu0 %1167, %v1090
          %v1169 = vpop.permute.xlu0 %1168
          %1172 = vset.pattern.permute.xlu0 0
          %1173 = vperm.xlu0 %1172, %v1091
          %v1174 = vpop.permute.xlu0 %1173
          %1177 = vset.pattern.permute.xlu0 0
          %1178 = vperm.xlu0 %1177, %v1092
          %v1179 = vpop.permute.xlu0 %1178
          %1182 = vset.pattern.permute.xlu0 0
          %1183 = vperm.xlu0 %1182, %v1093
          %v1184 = vpop.permute.xlu0 %1183
          %1187 = vset.pattern.permute.xlu0 0
          %1188 = vperm.xlu0 %1187, %v1094
          %v1189 = vpop.permute.xlu0 %1188
          %1192 = vset.pattern.permute.xlu0 0
          %1193 = vperm.xlu0 %1192, %v1095
          %v1194 = vpop.permute.xlu0 %1193
          %1197 = vset.pattern.permute.xlu0 0
          %1198 = vperm.xlu0 %1197, %v1096
          %v1199 = vpop.permute.xlu0 %1198
          %1202 = vset.pattern.permute.xlu0 0
          %1203 = vperm.xlu0 %1202, %v1097
          %v1204 = vpop.permute.xlu0 %1203
          %1207 = vset.pattern.permute.xlu0 0
          %1208 = vperm.xlu0 %1207, %v1098
          %v1209 = vpop.permute.xlu0 %1208
          %1212 = vset.pattern.permute.xlu0 0
          %1213 = vperm.xlu0 %1212, %v1099
          %v1214 = vpop.permute.xlu0 %1213
          %1217 = vset.pattern.permute.xlu0 0
          %1218 = vperm.xlu0 %1217, %v1100
          %v1219 = vpop.permute.xlu0 %1218
          %1222 = vset.pattern.permute.xlu0 0
          %1223 = vperm.xlu0 %1222, %v1101
          %v1224 = vpop.permute.xlu0 %1223
          %1227 = vset.pattern.permute.xlu0 0
          %1228 = vperm.xlu0 %1227, %v1102
          %v1229 = vpop.permute.xlu0 %1228
          %v1231 = vsub.f32 %v1006, %v1154
          %v1232 = vsub.f32 %v1007, %v1159
          %v1233 = vsub.f32 %v1008, %v1164
          %v1234 = vsub.f32 %v1009, %v1169
          %v1235 = vsub.f32 %v1010, %v1174
          %v1236 = vsub.f32 %v1011, %v1179
          %v1237 = vsub.f32 %v1012, %v1184
          %v1238 = vsub.f32 %v1013, %v1189
          %v1239 = vsub.f32 %v1014, %v1194
          %v1240 = vsub.f32 %v1015, %v1199
          %v1241 = vsub.f32 %v1016, %v1204
          %v1242 = vsub.f32 %v1017, %v1209
          %v1243 = vsub.f32 %v1018, %v1214
          %v1244 = vsub.f32 %v1019, %v1219
          %v1245 = vsub.f32 %v1020, %v1224
          %v1246 = vsub.f32 %v1021, %v1229
          %v1247 = vmul.f32 %v1231, 1.442695
          %v1248 = vpow.pop %v1247
          %v1249 = vmul.f32 %v1232, 1.442695
          %v1250 = vpow.pop %v1249
          %v1251 = vmul.f32 %v1233, 1.442695
          %v1252 = vpow.pop %v1251
          %v1253 = vmul.f32 %v1234, 1.442695
          %v1254 = vpow.pop %v1253
          %v1255 = vmul.f32 %v1235, 1.442695
          %v1256 = vpow.pop %v1255
          %v1257 = vmul.f32 %v1236, 1.442695
          %v1258 = vpow.pop %v1257
          %v1259 = vmul.f32 %v1237, 1.442695
          %v1260 = vpow.pop %v1259
          %v1261 = vmul.f32 %v1238, 1.442695
          %v1262 = vpow.pop %v1261
          %v1263 = vmul.f32 %v1239, 1.442695
          %v1264 = vpow.pop %v1263
          %v1265 = vmul.f32 %v1240, 1.442695
          %v1266 = vpow.pop %v1265
          %v1267 = vmul.f32 %v1241, 1.442695
          %v1268 = vpow.pop %v1267
          %v1269 = vmul.f32 %v1242, 1.442695
          %v1270 = vpow.pop %v1269
          %v1271 = vmul.f32 %v1243, 1.442695
          %v1272 = vpow.pop %v1271
          %v1273 = vmul.f32 %v1244, 1.442695
          %v1274 = vpow.pop %v1273
          %v1275 = vmul.f32 %v1245, 1.442695
          %v1276 = vpow.pop %v1275
          %v1277 = vmul.f32 %v1246, 1.442695
          %v1278 = vpow.pop %v1277
          %v1279 = vld [vmem:[#allocation3] sm:$0xff]
          %v1280 = vld [vmem:[#allocation3 + $0x8] sm:$0xff]
          %v1281 = vld [vmem:[#allocation3 + $0x10] sm:$0xff]
          %v1282 = vld [vmem:[#allocation3 + $0x18] sm:$0xff]
          %v1283 = vld [vmem:[#allocation3 + $0x20] sm:$0xff]
          %v1284 = vld [vmem:[#allocation3 + $0x28] sm:$0xff]
          %v1285 = vld [vmem:[#allocation3 + $0x30] sm:$0xff]
          %v1286 = vld [vmem:[#allocation3 + $0x38] sm:$0xff]
          %v1287 = vld [vmem:[#allocation3 + $0x40] sm:$0xff]
          %v1288 = vld [vmem:[#allocation3 + $0x48] sm:$0xff]
          %v1289 = vld [vmem:[#allocation3 + $0x50] sm:$0xff]
          %v1290 = vld [vmem:[#allocation3 + $0x58] sm:$0xff]
          %v1291 = vld [vmem:[#allocation3 + $0x60] sm:$0xff]
          %v1292 = vld [vmem:[#allocation3 + $0x68] sm:$0xff]
          %v1293 = vld [vmem:[#allocation3 + $0x70] sm:$0xff]
          %v1294 = vld [vmem:[#allocation3 + $0x78] sm:$0xff]
          %v1295 = vmul.f32 %v1120, %v1279
          %v1296 = vmul.f32 %v1122, %v1280
          %v1297 = vmul.f32 %v1124, %v1281
          %v1298 = vmul.f32 %v1126, %v1282
          %v1299 = vmul.f32 %v1128, %v1283
          %v1300 = vmul.f32 %v1130, %v1284
          %v1301 = vmul.f32 %v1132, %v1285
          %v1302 = vmul.f32 %v1134, %v1286
          %v1303 = vmul.f32 %v1136, %v1287
          %v1304 = vmul.f32 %v1138, %v1288
          %v1305 = vmul.f32 %v1140, %v1289
          %v1306 = vmul.f32 %v1142, %v1290
          %v1307 = vmul.f32 %v1144, %v1291
          %v1308 = vmul.f32 %v1146, %v1292
          %v1309 = vmul.f32 %v1148, %v1293
          %v1310 = vmul.f32 %v1150, %v1294
          %v1311 = vsel %vm1038, %v1248, 0.0
          %1312 = vadd.xlane.f32.xlu0 %v1311
          %v1313 = vpop.xlane.xlu0 %1312
          %v1314 = vsel %vm1038, %v1250, 0.0
          %1315 = vadd.xlane.f32.xlu0 %v1314
          %v1316 = vpop.xlane.xlu0 %1315
          %v1317 = vsel %vm1038, %v1252, 0.0
          %1318 = vadd.xlane.f32.xlu0 %v1317
          %v1319 = vpop.xlane.xlu0 %1318
          %v1320 = vsel %vm1038, %v1254, 0.0
          %1321 = vadd.xlane.f32.xlu0 %v1320
          %v1322 = vpop.xlane.xlu0 %1321
          %v1323 = vsel %vm1038, %v1256, 0.0
          %1324 = vadd.xlane.f32.xlu0 %v1323
          %v1325 = vpop.xlane.xlu0 %1324
          %v1326 = vsel %vm1038, %v1258, 0.0
          %1327 = vadd.xlane.f32.xlu0 %v1326
          %v1328 = vpop.xlane.xlu0 %1327
          %v1329 = vsel %vm1038, %v1260, 0.0
          %1330 = vadd.xlane.f32.xlu0 %v1329
          %v1331 = vpop.xlane.xlu0 %1330
          %v1332 = vsel %vm1038, %v1262, 0.0
          %1333 = vadd.xlane.f32.xlu0 %v1332
          %v1334 = vpop.xlane.xlu0 %1333
          %v1335 = vsel %vm1038, %v1264, 0.0
          %1336 = vadd.xlane.f32.xlu0 %v1335
          %v1337 = vpop.xlane.xlu0 %1336
          %v1338 = vsel %vm1038, %v1266, 0.0
          %1339 = vadd.xlane.f32.xlu0 %v1338
          %v1340 = vpop.xlane.xlu0 %1339
          %v1341 = vsel %vm1038, %v1268, 0.0
          %1342 = vadd.xlane.f32.xlu0 %v1341
          %v1343 = vpop.xlane.xlu0 %1342
          %v1344 = vsel %vm1038, %v1270, 0.0
          %1345 = vadd.xlane.f32.xlu0 %v1344
          %v1346 = vpop.xlane.xlu0 %1345
          %v1347 = vsel %vm1038, %v1272, 0.0
          %1348 = vadd.xlane.f32.xlu0 %v1347
          %v1349 = vpop.xlane.xlu0 %1348
          %v1350 = vsel %vm1038, %v1274, 0.0
          %1351 = vadd.xlane.f32.xlu0 %v1350
          %v1352 = vpop.xlane.xlu0 %1351
          %v1353 = vsel %vm1038, %v1276, 0.0
          %1354 = vadd.xlane.f32.xlu0 %v1353
          %v1355 = vpop.xlane.xlu0 %1354
          %v1356 = vsel %vm1038, %v1278, 0.0
          %1357 = vadd.xlane.f32.xlu0 %v1356
          %v1358 = vpop.xlane.xlu0 %1357
          %v1359 = vadd.f32 %v1295, %v1313
          %v1360 = vadd.f32 %v1296, %v1316
          %v1361 = vadd.f32 %v1297, %v1319
          %v1362 = vadd.f32 %v1298, %v1322
          %v1363 = vadd.f32 %v1299, %v1325
          %v1364 = vadd.f32 %v1300, %v1328
          %v1365 = vadd.f32 %v1301, %v1331
          %v1366 = vadd.f32 %v1302, %v1334
          %v1367 = vadd.f32 %v1303, %v1337
          %v1368 = vadd.f32 %v1304, %v1340
          %v1369 = vadd.f32 %v1305, %v1343
          %v1370 = vadd.f32 %v1306, %v1346
          %v1371 = vadd.f32 %v1307, %v1349
          %v1372 = vadd.f32 %v1308, %v1352
          %v1373 = vadd.f32 %v1309, %v1355
          %v1374 = vadd.f32 %v1310, %v1358
          %vm1375 = vcmask 7168
          %1376 = vst.msk [vmem:[#allocation3] sm:$0xff] %vm1375, %v1359
          %1377 = vst.msk [vmem:[#allocation3 + $0x8] sm:$0xff] %vm1375, %v1360
          %1378 = vst.msk [vmem:[#allocation3 + $0x10] sm:$0xff] %vm1375, %v1361
          %1379 = vst.msk [vmem:[#allocation3 + $0x18] sm:$0xff] %vm1375, %v1362
          %1380 = vst.msk [vmem:[#allocation3 + $0x20] sm:$0xff] %vm1375, %v1363
          %1381 = vst.msk [vmem:[#allocation3 + $0x28] sm:$0xff] %vm1375, %v1364
          %1382 = vst.msk [vmem:[#allocation3 + $0x30] sm:$0xff] %vm1375, %v1365
          %1383 = vst.msk [vmem:[#allocation3 + $0x38] sm:$0xff] %vm1375, %v1366
          %1384 = vst.msk [vmem:[#allocation3 + $0x40] sm:$0xff] %vm1375, %v1367
          %1385 = vst.msk [vmem:[#allocation3 + $0x48] sm:$0xff] %vm1375, %v1368
          %1386 = vst.msk [vmem:[#allocation3 + $0x50] sm:$0xff] %vm1375, %v1369
          %1387 = vst.msk [vmem:[#allocation3 + $0x58] sm:$0xff] %vm1375, %v1370
          %1388 = vst.msk [vmem:[#allocation3 + $0x60] sm:$0xff] %vm1375, %v1371
          %1389 = vst.msk [vmem:[#allocation3 + $0x68] sm:$0xff] %vm1375, %v1372
          %1390 = vst.msk [vmem:[#allocation3 + $0x70] sm:$0xff] %vm1375, %v1373
          %1391 = vst.msk [vmem:[#allocation3 + $0x78] sm:$0xff] %vm1375, %v1374
          %v1392 = vld [vmem:[#allocation4] sm:$0xff]
          %v1393 = vld [vmem:[#allocation4 + $0x8] sm:$0xff]
          %v1394 = vld [vmem:[#allocation4 + $0x10] sm:$0xff]
          %v1395 = vld [vmem:[#allocation4 + $0x18] sm:$0xff]
          %v1396 = vld [vmem:[#allocation4 + $0x20] sm:$0xff]
          %v1397 = vld [vmem:[#allocation4 + $0x28] sm:$0xff]
          %v1398 = vld [vmem:[#allocation4 + $0x30] sm:$0xff]
          %v1399 = vld [vmem:[#allocation4 + $0x38] sm:$0xff]
          %v1400 = vld [vmem:[#allocation4 + $0x40] sm:$0xff]
          %v1401 = vld [vmem:[#allocation4 + $0x48] sm:$0xff]
          %v1402 = vld [vmem:[#allocation4 + $0x50] sm:$0xff]
          %v1403 = vld [vmem:[#allocation4 + $0x58] sm:$0xff]
          %v1404 = vld [vmem:[#allocation4 + $0x60] sm:$0xff]
          %v1405 = vld [vmem:[#allocation4 + $0x68] sm:$0xff]
          %v1406 = vld [vmem:[#allocation4 + $0x70] sm:$0xff]
          %v1407 = vld [vmem:[#allocation4 + $0x78] sm:$0xff]
          %1409 = vset.pattern.permute.xlu0 0
          %1410 = vperm.xlu0 %1409, %v1120
          %v1411 = vpop.permute.xlu0 %1410
          %1414 = vset.pattern.permute.xlu0 0
          %1415 = vperm.xlu0 %1414, %v1122
          %v1416 = vpop.permute.xlu0 %1415
          %1419 = vset.pattern.permute.xlu0 0
          %1420 = vperm.xlu0 %1419, %v1124
          %v1421 = vpop.permute.xlu0 %1420
          %1424 = vset.pattern.permute.xlu0 0
          %1425 = vperm.xlu0 %1424, %v1126
          %v1426 = vpop.permute.xlu0 %1425
          %1429 = vset.pattern.permute.xlu0 0
          %1430 = vperm.xlu0 %1429, %v1128
          %v1431 = vpop.permute.xlu0 %1430
          %1434 = vset.pattern.permute.xlu0 0
          %1435 = vperm.xlu0 %1434, %v1130
          %v1436 = vpop.permute.xlu0 %1435
          %1439 = vset.pattern.permute.xlu0 0
          %1440 = vperm.xlu0 %1439, %v1132
          %v1441 = vpop.permute.xlu0 %1440
          %1444 = vset.pattern.permute.xlu0 0
          %1445 = vperm.xlu0 %1444, %v1134
          %v1446 = vpop.permute.xlu0 %1445
          %1449 = vset.pattern.permute.xlu0 0
          %1450 = vperm.xlu0 %1449, %v1136
          %v1451 = vpop.permute.xlu0 %1450
          %1454 = vset.pattern.permute.xlu0 0
          %1455 = vperm.xlu0 %1454, %v1138
          %v1456 = vpop.permute.xlu0 %1455
          %1459 = vset.pattern.permute.xlu0 0
          %1460 = vperm.xlu0 %1459, %v1140
          %v1461 = vpop.permute.xlu0 %1460
          %1464 = vset.pattern.permute.xlu0 0
          %1465 = vperm.xlu0 %1464, %v1142
          %v1466 = vpop.permute.xlu0 %1465
          %1469 = vset.pattern.permute.xlu0 0
          %1470 = vperm.xlu0 %1469, %v1144
          %v1471 = vpop.permute.xlu0 %1470
          %1474 = vset.pattern.permute.xlu0 0
          %1475 = vperm.xlu0 %1474, %v1146
          %v1476 = vpop.permute.xlu0 %1475
          %1479 = vset.pattern.permute.xlu0 0
          %1480 = vperm.xlu0 %1479, %v1148
          %v1481 = vpop.permute.xlu0 %1480
          %1484 = vset.pattern.permute.xlu0 0
          %1485 = vperm.xlu0 %1484, %v1150
          %v1486 = vpop.permute.xlu0 %1485
          %v1488 = vmul.f32 %v1411, %v1392
          %v1489 = vmul.f32 %v1416, %v1393
          %v1490 = vmul.f32 %v1421, %v1394
          %v1491 = vmul.f32 %v1426, %v1395
          %v1492 = vmul.f32 %v1431, %v1396
          %v1493 = vmul.f32 %v1436, %v1397
          %v1494 = vmul.f32 %v1441, %v1398
          %v1495 = vmul.f32 %v1446, %v1399
          %v1496 = vmul.f32 %v1451, %v1400
          %v1497 = vmul.f32 %v1456, %v1401
          %v1498 = vmul.f32 %v1461, %v1402
          %v1499 = vmul.f32 %v1466, %v1403
          %v1500 = vmul.f32 %v1471, %v1404
          %v1501 = vmul.f32 %v1476, %v1405
          %v1502 = vmul.f32 %v1481, %v1406
          %v1503 = vmul.f32 %v1486, %v1407
          %v1504 = vpack.c.bf16 %v1250, %v1248
          %v1505 = vpack.c.bf16 %v1254, %v1252
          %v1506 = vpack.c.bf16 %v1258, %v1256
          %v1507 = vpack.c.bf16 %v1262, %v1260
          %v1508 = vpack.c.bf16 %v1266, %v1264
          %v1509 = vpack.c.bf16 %v1270, %v1268
          %v1510 = vpack.c.bf16 %v1274, %v1272
          %v1511 = vpack.c.bf16 %v1278, %v1276
          %v1516 = vunpack.c.l.b16 %v645
          %v1517 = vunpack.c.l.b16 %v646
          %v1518 = vunpack.c.l.b16 %v647
          %v1519 = vunpack.c.l.b16 %v648
          %v1520 = vpack.c.b16 %v1517, %v1516
          %v1521 = vpack.c.b16 %v1519, %v1518
          %v1525 = vsel %vm1038, %v1504, 0
          %v1528 = vsel %vm1038, %v1505, 0
          %1530 = vmatprep.subr.bf16.mxu0 0
          %1531 = vmatpush1.bf16.msra.mxu0 0
          %1532 = vmatprep.subr.bf16.mxu0 0
          %1533 = vmatpush1.bf16.msra.mxu0 0
          %1534 = vmatprep.subr.bf16.mxu0 0
          %1535 = vmatpush1.bf16.msra.mxu0 0
          %1536 = vmatprep.subr.bf16.mxu0 0
          %1537 = vmatpush1.bf16.msra.mxu0 0
          %1538 = vmatprep.subr.bf16.mxu0 0
          %1539 = vmatpush1.bf16.msra.mxu0 0
          %1540 = vmatprep.subr.bf16.mxu0 0
          %1541 = vmatpush1.bf16.msra.mxu0 0
          %1542 = vmatprep.subr.bf16.mxu0 0
          %1543 = vmatpush1.bf16.msra.mxu0 %v1521
          %1544 = vmatprep.subr.bf16.mxu0 0
          %1545 = vmatpush1.bf16.msra.mxu0 %v1520
          %1546 = vmatprep.subr.bf16.mxu0 0
          %1547 = vmatpush2.bf16.msra.mxu0 0
          %1548 = vmatprep.subr.bf16.mxu0 0
          %1549 = vmatpush2.bf16.msra.mxu0 0
          %1550 = vmatprep.subr.bf16.mxu0 0
          %1551 = vmatpush2.bf16.msra.mxu0 0
          %1552 = vmatprep.subr.bf16.mxu0 0
          %1553 = vmatpush2.bf16.msra.mxu0 0
          %1554 = vmatprep.subr.bf16.mxu0 0
          %1555 = vmatpush2.bf16.msra.mxu0 0
          %1556 = vmatprep.subr.bf16.mxu0 0
          %1557 = vmatpush2.bf16.msra.mxu0 0
          %1558 = vmatprep.subr.bf16.mxu0 0
          %1559 = vmatpush2.bf16.msra.mxu0 0
          %1560 = vmatprep.subr.bf16.mxu0 0
          %1561 = vmatpush2.bf16.msra.mxu0 0
          %1562 = vmatprep.mubr.bf16.mxu0 0
          %1563 = vmatmul.mubr.bf16.gmra.mxu0 %v1525
          %v1564 = vpop.f32.mrf.mxu0
          %v1565 = vadd.f32 0.0, %v1564
          %v1566 = vpop.f32.mrf.mxu0
          %v1567 = vpop.f32.mrf.mxu0
          %v1568 = vadd.f32 0.0, %v1567
          %v1569 = vpop.f32.mrf.mxu0
          %1570 = vmatprep.mubr.bf16.mxu0 0
          %1571 = vmatmul.mubr.bf16.gmra.mxu0 %v1528
          %v1572 = vpop.f32.mrf.mxu0
          %v1573 = vadd.f32 0.0, %v1572
          %v1574 = vpop.f32.mrf.mxu0
          %v1575 = vpop.f32.mrf.mxu0
          %v1576 = vadd.f32 0.0, %v1575
          %v1577 = vpop.f32.mrf.mxu0
          %1578 = vdwg.mxu0
          %v1583 = vunpack.c.l.b16 %v649
          %v1584 = vunpack.c.l.b16 %v650
          %v1585 = vunpack.c.l.b16 %v651
          %v1586 = vunpack.c.l.b16 %v652
          %v1587 = vpack.c.b16 %v1584, %v1583
          %v1588 = vpack.c.b16 %v1586, %v1585
          %v1592 = vsel %vm1038, %v1506, 0
          %v1595 = vsel %vm1038, %v1507, 0
          %1597 = vmatprep.subr.bf16.mxu0 0
          %1598 = vmatpush1.bf16.msra.mxu0 0
          %1599 = vmatprep.subr.bf16.mxu0 0
          %1600 = vmatpush1.bf16.msra.mxu0 0
          %1601 = vmatprep.subr.bf16.mxu0 0
          %1602 = vmatpush1.bf16.msra.mxu0 0
          %1603 = vmatprep.subr.bf16.mxu0 0
          %1604 = vmatpush1.bf16.msra.mxu0 0
          %1605 = vmatprep.subr.bf16.mxu0 0
          %1606 = vmatpush1.bf16.msra.mxu0 0
          %1607 = vmatprep.subr.bf16.mxu0 0
          %1608 = vmatpush1.bf16.msra.mxu0 0
          %1609 = vmatprep.subr.bf16.mxu0 0
          %1610 = vmatpush1.bf16.msra.mxu0 %v1588
          %1611 = vmatprep.subr.bf16.mxu0 0
          %1612 = vmatpush1.bf16.msra.mxu0 %v1587
          %1613 = vmatprep.subr.bf16.mxu0 0
          %1614 = vmatpush2.bf16.msra.mxu0 0
          %1615 = vmatprep.subr.bf16.mxu0 0
          %1616 = vmatpush2.bf16.msra.mxu0 0
          %1617 = vmatprep.subr.bf16.mxu0 0
          %1618 = vmatpush2.bf16.msra.mxu0 0
          %1619 = vmatprep.subr.bf16.mxu0 0
          %1620 = vmatpush2.bf16.msra.mxu0 0
          %1621 = vmatprep.subr.bf16.mxu0 0
          %1622 = vmatpush2.bf16.msra.mxu0 0
          %1623 = vmatprep.subr.bf16.mxu0 0
          %1624 = vmatpush2.bf16.msra.mxu0 0
          %1625 = vmatprep.subr.bf16.mxu0 0
          %1626 = vmatpush2.bf16.msra.mxu0 0
          %1627 = vmatprep.subr.bf16.mxu0 0
          %1628 = vmatpush2.bf16.msra.mxu0 0
          %1629 = vmatprep.mubr.bf16.mxu0 0
          %1630 = vmatmul.mubr.bf16.gmra.mxu0 %v1592
          %v1631 = vpop.f32.mrf.mxu0
          %v1632 = vadd.f32 0.0, %v1631
          %v1633 = vpop.f32.mrf.mxu0
          %v1634 = vpop.f32.mrf.mxu0
          %v1635 = vadd.f32 0.0, %v1634
          %v1636 = vpop.f32.mrf.mxu0
          %1637 = vmatprep.mubr.bf16.mxu0 0
          %1638 = vmatmul.mubr.bf16.gmra.mxu0 %v1595
          %v1639 = vpop.f32.mrf.mxu0
          %v1640 = vadd.f32 0.0, %v1639
          %v1641 = vpop.f32.mrf.mxu0
          %v1642 = vpop.f32.mrf.mxu0
          %v1643 = vadd.f32 0.0, %v1642
          %v1644 = vpop.f32.mrf.mxu0
          %1645 = vdwg.mxu0
          %v1650 = vunpack.c.l.b16 %v653
          %v1651 = vunpack.c.l.b16 %v654
          %v1652 = vunpack.c.l.b16 %v655
          %v1653 = vunpack.c.l.b16 %v656
          %v1654 = vpack.c.b16 %v1651, %v1650
          %v1655 = vpack.c.b16 %v1653, %v1652
          %v1659 = vsel %vm1038, %v1508, 0
          %v1662 = vsel %vm1038, %v1509, 0
          %1664 = vmatprep.subr.bf16.mxu0 0
          %1665 = vmatpush1.bf16.msra.mxu0 0
          %1666 = vmatprep.subr.bf16.mxu0 0
          %1667 = vmatpush1.bf16.msra.mxu0 0
          %1668 = vmatprep.subr.bf16.mxu0 0
          %1669 = vmatpush1.bf16.msra.mxu0 0
          %1670 = vmatprep.subr.bf16.mxu0 0
          %1671 = vmatpush1.bf16.msra.mxu0 0
          %1672 = vmatprep.subr.bf16.mxu0 0
          %1673 = vmatpush1.bf16.msra.mxu0 0
          %1674 = vmatprep.subr.bf16.mxu0 0
          %1675 = vmatpush1.bf16.msra.mxu0 0
          %1676 = vmatprep.subr.bf16.mxu0 0
          %1677 = vmatpush1.bf16.msra.mxu0 %v1655
          %1678 = vmatprep.subr.bf16.mxu0 0
          %1679 = vmatpush1.bf16.msra.mxu0 %v1654
          %1680 = vmatprep.subr.bf16.mxu0 0
          %1681 = vmatpush2.bf16.msra.mxu0 0
          %1682 = vmatprep.subr.bf16.mxu0 0
          %1683 = vmatpush2.bf16.msra.mxu0 0
          %1684 = vmatprep.subr.bf16.mxu0 0
          %1685 = vmatpush2.bf16.msra.mxu0 0
          %1686 = vmatprep.subr.bf16.mxu0 0
          %1687 = vmatpush2.bf16.msra.mxu0 0
          %1688 = vmatprep.subr.bf16.mxu0 0
          %1689 = vmatpush2.bf16.msra.mxu0 0
          %1690 = vmatprep.subr.bf16.mxu0 0
          %1691 = vmatpush2.bf16.msra.mxu0 0
          %1692 = vmatprep.subr.bf16.mxu0 0
          %1693 = vmatpush2.bf16.msra.mxu0 0
          %1694 = vmatprep.subr.bf16.mxu0 0
          %1695 = vmatpush2.bf16.msra.mxu0 0
          %1696 = vmatprep.mubr.bf16.mxu0 0
          %1697 = vmatmul.mubr.bf16.gmra.mxu0 %v1659
          %v1698 = vpop.f32.mrf.mxu0
          %v1699 = vadd.f32 0.0, %v1698
          %v1700 = vpop.f32.mrf.mxu0
          %v1701 = vpop.f32.mrf.mxu0
          %v1702 = vadd.f32 0.0, %v1701
          %v1703 = vpop.f32.mrf.mxu0
          %1704 = vmatprep.mubr.bf16.mxu0 0
          %1705 = vmatmul.mubr.bf16.gmra.mxu0 %v1662
          %v1706 = vpop.f32.mrf.mxu0
          %v1707 = vadd.f32 0.0, %v1706
          %v1708 = vpop.f32.mrf.mxu0
          %v1709 = vpop.f32.mrf.mxu0
          %v1710 = vadd.f32 0.0, %v1709
          %v1711 = vpop.f32.mrf.mxu0
          %1712 = vdwg.mxu0
          %v1717 = vunpack.c.l.b16 %v657
          %v1718 = vunpack.c.l.b16 %v658
          %v1719 = vunpack.c.l.b16 %v659
          %v1720 = vunpack.c.l.b16 %v660
          %v1721 = vpack.c.b16 %v1718, %v1717
          %v1722 = vpack.c.b16 %v1720, %v1719
          %v1726 = vsel %vm1038, %v1510, 0
          %v1729 = vsel %vm1038, %v1511, 0
          %1731 = vmatprep.subr.bf16.mxu0 0
          %1732 = vmatpush1.bf16.msra.mxu0 0
          %1733 = vmatprep.subr.bf16.mxu0 0
          %1734 = vmatpush1.bf16.msra.mxu0 0
          %1735 = vmatprep.subr.bf16.mxu0 0
          %1736 = vmatpush1.bf16.msra.mxu0 0
          %1737 = vmatprep.subr.bf16.mxu0 0
          %1738 = vmatpush1.bf16.msra.mxu0 0
          %1739 = vmatprep.subr.bf16.mxu0 0
          %1740 = vmatpush1.bf16.msra.mxu0 0
          %1741 = vmatprep.subr.bf16.mxu0 0
          %1742 = vmatpush1.bf16.msra.mxu0 0
          %1743 = vmatprep.subr.bf16.mxu0 0
          %1744 = vmatpush1.bf16.msra.mxu0 %v1722
          %1745 = vmatprep.subr.bf16.mxu0 0
          %1746 = vmatpush1.bf16.msra.mxu0 %v1721
          %1747 = vmatprep.subr.bf16.mxu0 0
          %1748 = vmatpush2.bf16.msra.mxu0 0
          %1749 = vmatprep.subr.bf16.mxu0 0
          %1750 = vmatpush2.bf16.msra.mxu0 0
          %1751 = vmatprep.subr.bf16.mxu0 0
          %1752 = vmatpush2.bf16.msra.mxu0 0
          %1753 = vmatprep.subr.bf16.mxu0 0
          %1754 = vmatpush2.bf16.msra.mxu0 0
          %1755 = vmatprep.subr.bf16.mxu0 0
          %1756 = vmatpush2.bf16.msra.mxu0 0
          %1757 = vmatprep.subr.bf16.mxu0 0
          %1758 = vmatpush2.bf16.msra.mxu0 0
          %1759 = vmatprep.subr.bf16.mxu0 0
          %1760 = vmatpush2.bf16.msra.mxu0 0
          %1761 = vmatprep.subr.bf16.mxu0 0
          %1762 = vmatpush2.bf16.msra.mxu0 0
          %1763 = vmatprep.mubr.bf16.mxu0 0
          %1764 = vmatmul.mubr.bf16.gmra.mxu0 %v1726
          %v1765 = vpop.f32.mrf.mxu0
          %v1766 = vadd.f32 0.0, %v1765
          %v1767 = vpop.f32.mrf.mxu0
          %v1768 = vpop.f32.mrf.mxu0
          %v1769 = vadd.f32 0.0, %v1768
          %v1770 = vpop.f32.mrf.mxu0
          %1771 = vmatprep.mubr.bf16.mxu0 0
          %1772 = vmatmul.mubr.bf16.gmra.mxu0 %v1729
          %v1773 = vpop.f32.mrf.mxu0
          %v1774 = vadd.f32 0.0, %v1773
          %v1775 = vpop.f32.mrf.mxu0
          %v1776 = vpop.f32.mrf.mxu0
          %v1777 = vadd.f32 0.0, %v1776
          %v1778 = vpop.f32.mrf.mxu0
          %1779 = vdwg.mxu0
          %v1780 = vadd.f32 %v1488, %v1565
          %v1781 = vadd.f32 %v1489, %v1568
          %v1782 = vadd.f32 %v1490, %v1573
          %v1783 = vadd.f32 %v1491, %v1576
          %v1784 = vadd.f32 %v1492, %v1632
          %v1785 = vadd.f32 %v1493, %v1635
          %v1786 = vadd.f32 %v1494, %v1640
          %v1787 = vadd.f32 %v1495, %v1643
          %v1788 = vadd.f32 %v1496, %v1699
          %v1789 = vadd.f32 %v1497, %v1702
          %v1790 = vadd.f32 %v1498, %v1707
          %v1791 = vadd.f32 %v1499, %v1710
          %v1792 = vadd.f32 %v1500, %v1766
          %v1793 = vadd.f32 %v1501, %v1769
          %v1794 = vadd.f32 %v1502, %v1774
          %v1795 = vadd.f32 %v1503, %v1777
          %1796 = vst.msk [vmem:[#allocation4] sm:$0xff] %vm681, %v1780
          %1797 = vst.msk [vmem:[#allocation4 + $0x8] sm:$0xff] %vm681, %v1781
          %1798 = vst.msk [vmem:[#allocation4 + $0x10] sm:$0xff] %vm681, %v1782
          %1799 = vst.msk [vmem:[#allocation4 + $0x18] sm:$0xff] %vm681, %v1783
          %1800 = vst.msk [vmem:[#allocation4 + $0x20] sm:$0xff] %vm681, %v1784
          %1801 = vst.msk [vmem:[#allocation4 + $0x28] sm:$0xff] %vm681, %v1785
          %1802 = vst.msk [vmem:[#allocation4 + $0x30] sm:$0xff] %vm681, %v1786
          %1803 = vst.msk [vmem:[#allocation4 + $0x38] sm:$0xff] %vm681, %v1787
          %1804 = vst.msk [vmem:[#allocation4 + $0x40] sm:$0xff] %vm681, %v1788
          %1805 = vst.msk [vmem:[#allocation4 + $0x48] sm:$0xff] %vm681, %v1789
          %1806 = vst.msk [vmem:[#allocation4 + $0x50] sm:$0xff] %vm681, %v1790
          %1807 = vst.msk [vmem:[#allocation4 + $0x58] sm:$0xff] %vm681, %v1791
          %1808 = vst.msk [vmem:[#allocation4 + $0x60] sm:$0xff] %vm681, %v1792
          %1809 = vst.msk [vmem:[#allocation4 + $0x68] sm:$0xff] %vm681, %v1793
          %1810 = vst.msk [vmem:[#allocation4 + $0x70] sm:$0xff] %vm681, %v1794
          %1811 = vst.msk [vmem:[#allocation4 + $0x78] sm:$0xff] %vm681, %v1795
          %1812 = vst.msk [vmem:[#allocation2] sm:$0xff] %vm1375, %v1087
          %1813 = vst.msk [vmem:[#allocation2 + $0x8] sm:$0xff] %vm1375, %v1088
          %1814 = vst.msk [vmem:[#allocation2 + $0x10] sm:$0xff] %vm1375, %v1089
          %1815 = vst.msk [vmem:[#allocation2 + $0x18] sm:$0xff] %vm1375, %v1090
          %1816 = vst.msk [vmem:[#allocation2 + $0x20] sm:$0xff] %vm1375, %v1091
          %1817 = vst.msk [vmem:[#allocation2 + $0x28] sm:$0xff] %vm1375, %v1092
          %1818 = vst.msk [vmem:[#allocation2 + $0x30] sm:$0xff] %vm1375, %v1093
          %1819 = vst.msk [vmem:[#allocation2 + $0x38] sm:$0xff] %vm1375, %v1094
          %1820 = vst.msk [vmem:[#allocation2 + $0x40] sm:$0xff] %vm1375, %v1095
          %1821 = vst.msk [vmem:[#allocation2 + $0x48] sm:$0xff] %vm1375, %v1096
          %1822 = vst.msk [vmem:[#allocation2 + $0x50] sm:$0xff] %vm1375, %v1097
          %1823 = vst.msk [vmem:[#allocation2 + $0x58] sm:$0xff] %vm1375, %v1098
          %1824 = vst.msk [vmem:[#allocation2 + $0x60] sm:$0xff] %vm1375, %v1099
          %1825 = vst.msk [vmem:[#allocation2 + $0x68] sm:$0xff] %vm1375, %v1100
          %1826 = vst.msk [vmem:[#allocation2 + $0x70] sm:$0xff] %vm1375, %v1101
          %1827 = vst.msk [vmem:[#allocation2 + $0x78] sm:$0xff] %vm1375, %v1102
        $region163: #{gpt_forward.8} parent=142 // pred_fallthru
          _
        %p1828 = scmp.eq.s32.totalorder %s21, 1
        // Predicated region
        $region164: #{gpt_forward.8} parent=142 // pred_check
          %p1829 = pneg %p1828
        $region165: #{gpt_forward.8} parent=142 // pred_check_branch
          %1831 = sbr.rel (%p1829) target = $region167
        $region166: #{gpt_forward.8} parent=142 // pred_region
          %v1832 = vld [vmem:[#allocation3] sm:$0xff]
          %v1833 = vld [vmem:[#allocation3 + $0x8] sm:$0xff]
          %v1834 = vld [vmem:[#allocation3 + $0x10] sm:$0xff]
          %v1835 = vld [vmem:[#allocation3 + $0x18] sm:$0xff]
          %v1836 = vld [vmem:[#allocation3 + $0x20] sm:$0xff]
          %v1837 = vld [vmem:[#allocation3 + $0x28] sm:$0xff]
          %v1838 = vld [vmem:[#allocation3 + $0x30] sm:$0xff]
          %v1839 = vld [vmem:[#allocation3 + $0x38] sm:$0xff]
          %v1840 = vld [vmem:[#allocation3 + $0x40] sm:$0xff]
          %v1841 = vld [vmem:[#allocation3 + $0x48] sm:$0xff]
          %v1842 = vld [vmem:[#allocation3 + $0x50] sm:$0xff]
          %v1843 = vld [vmem:[#allocation3 + $0x58] sm:$0xff]
          %v1844 = vld [vmem:[#allocation3 + $0x60] sm:$0xff]
          %v1845 = vld [vmem:[#allocation3 + $0x68] sm:$0xff]
          %v1846 = vld [vmem:[#allocation3 + $0x70] sm:$0xff]
          %v1847 = vld [vmem:[#allocation3 + $0x78] sm:$0xff]
          %v1848 = vrcp.pop %v1832
          %v1849 = vrcp.pop %v1833
          %v1850 = vrcp.pop %v1834
          %v1851 = vrcp.pop %v1835
          %v1852 = vrcp.pop %v1836
          %v1853 = vrcp.pop %v1837
          %v1854 = vrcp.pop %v1838
          %v1855 = vrcp.pop %v1839
          %v1856 = vrcp.pop %v1840
          %v1857 = vrcp.pop %v1841
          %v1858 = vrcp.pop %v1842
          %v1859 = vrcp.pop %v1843
          %v1860 = vrcp.pop %v1844
          %v1861 = vrcp.pop %v1845
          %v1862 = vrcp.pop %v1846
          %v1863 = vrcp.pop %v1847
          %v1864 = vld [vmem:[#allocation4] sm:$0xff]
          %v1865 = vld [vmem:[#allocation4 + $0x8] sm:$0xff]
          %v1866 = vld [vmem:[#allocation4 + $0x10] sm:$0xff]
          %v1867 = vld [vmem:[#allocation4 + $0x18] sm:$0xff]
          %v1868 = vld [vmem:[#allocation4 + $0x20] sm:$0xff]
          %v1869 = vld [vmem:[#allocation4 + $0x28] sm:$0xff]
          %v1870 = vld [vmem:[#allocation4 + $0x30] sm:$0xff]
          %v1871 = vld [vmem:[#allocation4 + $0x38] sm:$0xff]
          %v1872 = vld [vmem:[#allocation4 + $0x40] sm:$0xff]
          %v1873 = vld [vmem:[#allocation4 + $0x48] sm:$0xff]
          %v1874 = vld [vmem:[#allocation4 + $0x50] sm:$0xff]
          %v1875 = vld [vmem:[#allocation4 + $0x58] sm:$0xff]
          %v1876 = vld [vmem:[#allocation4 + $0x60] sm:$0xff]
          %v1877 = vld [vmem:[#allocation4 + $0x68] sm:$0xff]
          %v1878 = vld [vmem:[#allocation4 + $0x70] sm:$0xff]
          %v1879 = vld [vmem:[#allocation4 + $0x78] sm:$0xff]
          %1881 = vset.pattern.permute.xlu0 0
          %1882 = vperm.xlu0 %1881, %v1848
          %v1883 = vpop.permute.xlu0 %1882
          %1886 = vset.pattern.permute.xlu0 0
          %1887 = vperm.xlu0 %1886, %v1849
          %v1888 = vpop.permute.xlu0 %1887
          %1891 = vset.pattern.permute.xlu0 0
          %1892 = vperm.xlu0 %1891, %v1850
          %v1893 = vpop.permute.xlu0 %1892
          %1896 = vset.pattern.permute.xlu0 0
          %1897 = vperm.xlu0 %1896, %v1851
          %v1898 = vpop.permute.xlu0 %1897
          %1901 = vset.pattern.permute.xlu0 0
          %1902 = vperm.xlu0 %1901, %v1852
          %v1903 = vpop.permute.xlu0 %1902
          %1906 = vset.pattern.permute.xlu0 0
          %1907 = vperm.xlu0 %1906, %v1853
          %v1908 = vpop.permute.xlu0 %1907
          %1911 = vset.pattern.permute.xlu0 0
          %1912 = vperm.xlu0 %1911, %v1854
          %v1913 = vpop.permute.xlu0 %1912
          %1916 = vset.pattern.permute.xlu0 0
          %1917 = vperm.xlu0 %1916, %v1855
          %v1918 = vpop.permute.xlu0 %1917
          %1921 = vset.pattern.permute.xlu0 0
          %1922 = vperm.xlu0 %1921, %v1856
          %v1923 = vpop.permute.xlu0 %1922
          %1926 = vset.pattern.permute.xlu0 0
          %1927 = vperm.xlu0 %1926, %v1857
          %v1928 = vpop.permute.xlu0 %1927
          %1931 = vset.pattern.permute.xlu0 0
          %1932 = vperm.xlu0 %1931, %v1858
          %v1933 = vpop.permute.xlu0 %1932
          %1936 = vset.pattern.permute.xlu0 0
          %1937 = vperm.xlu0 %1936, %v1859
          %v1938 = vpop.permute.xlu0 %1937
          %1941 = vset.pattern.permute.xlu0 0
          %1942 = vperm.xlu0 %1941, %v1860
          %v1943 = vpop.permute.xlu0 %1942
          %1946 = vset.pattern.permute.xlu0 0
          %1947 = vperm.xlu0 %1946, %v1861
          %v1948 = vpop.permute.xlu0 %1947
          %1951 = vset.pattern.permute.xlu0 0
          %1952 = vperm.xlu0 %1951, %v1862
          %v1953 = vpop.permute.xlu0 %1952
          %1956 = vset.pattern.permute.xlu0 0
          %1957 = vperm.xlu0 %1956, %v1863
          %v1958 = vpop.permute.xlu0 %1957
          %v1960 = vmul.f32 %v1864, %v1883
          %v1961 = vmul.f32 %v1865, %v1888
          %v1962 = vmul.f32 %v1866, %v1893
          %v1963 = vmul.f32 %v1867, %v1898
          %v1964 = vmul.f32 %v1868, %v1903
          %v1965 = vmul.f32 %v1869, %v1908
          %v1966 = vmul.f32 %v1870, %v1913
          %v1967 = vmul.f32 %v1871, %v1918
          %v1968 = vmul.f32 %v1872, %v1923
          %v1969 = vmul.f32 %v1873, %v1928
          %v1970 = vmul.f32 %v1874, %v1933
          %v1971 = vmul.f32 %v1875, %v1938
          %v1972 = vmul.f32 %v1876, %v1943
          %v1973 = vmul.f32 %v1877, %v1948
          %v1974 = vmul.f32 %v1878, %v1953
          %v1975 = vmul.f32 %v1879, %v1958
          %v1976 = vpack.c.bf16 %v1961, %v1960
          %v1977 = vpack.c.bf16 %v1963, %v1962
          %v1978 = vpack.c.bf16 %v1965, %v1964
          %v1979 = vpack.c.bf16 %v1967, %v1966
          %v1980 = vpack.c.bf16 %v1969, %v1968
          %v1981 = vpack.c.bf16 %v1971, %v1970
          %v1982 = vpack.c.bf16 %v1973, %v1972
          %v1983 = vpack.c.bf16 %v1975, %v1974
          %v1992 = vunpack.c.l.b16 %v1976
          %v1993 = vunpack.c.h.b16 %v1976
          %v1994 = vunpack.c.l.b16 %v1977
          %v1995 = vunpack.c.h.b16 %v1977
          %v1996 = vunpack.c.l.b16 %v1978
          %v1997 = vunpack.c.h.b16 %v1978
          %v1998 = vunpack.c.l.b16 %v1979
          %v1999 = vunpack.c.h.b16 %v1979
          %v2000 = vunpack.c.l.b16 %v1980
          %v2001 = vunpack.c.h.b16 %v1980
          %v2002 = vunpack.c.l.b16 %v1981
          %v2003 = vunpack.c.h.b16 %v1981
          %v2004 = vunpack.c.l.b16 %v1982
          %v2005 = vunpack.c.h.b16 %v1982
          %v2006 = vunpack.c.l.b16 %v1983
          %v2007 = vunpack.c.h.b16 %v1983
          %v2008 = vpack.c.b16 %v1992, %v1992
          %v2009 = vpack.c.b16 %v1993, %v1993
          %v2010 = vpack.c.b16 %v1994, %v1994
          %v2011 = vpack.c.b16 %v1995, %v1995
          %v2012 = vpack.c.b16 %v1996, %v1996
          %v2013 = vpack.c.b16 %v1997, %v1997
          %v2014 = vpack.c.b16 %v1998, %v1998
          %v2015 = vpack.c.b16 %v1999, %v1999
          %v2016 = vpack.c.b16 %v2000, %v2000
          %v2017 = vpack.c.b16 %v2001, %v2001
          %v2018 = vpack.c.b16 %v2002, %v2002
          %v2019 = vpack.c.b16 %v2003, %v2003
          %v2020 = vpack.c.b16 %v2004, %v2004
          %v2021 = vpack.c.b16 %v2005, %v2005
          %v2022 = vpack.c.b16 %v2006, %v2006
          %v2023 = vpack.c.b16 %v2007, %v2007
          %vm2040 = vcmask 125952
          %2041 = vst.msk [vmem:[%s549] sm:$0xf] %vm2040, %v2008
          %2042 = vst.msk [vmem:[%s549 + $0x4] sm:$0xf] %vm2040, %v2009
          %2043 = vst.msk [vmem:[%s549 + $0x8] sm:$0xf] %vm2040, %v2010
          %2044 = vst.msk [vmem:[%s549 + $0xc] sm:$0xf] %vm2040, %v2011
          %2045 = vst.msk [vmem:[%s549 + $0x10] sm:$0xf] %vm2040, %v2012
          %2046 = vst.msk [vmem:[%s549 + $0x14] sm:$0xf] %vm2040, %v2013
          %2047 = vst.msk [vmem:[%s549 + $0x18] sm:$0xf] %vm2040, %v2014
          %2048 = vst.msk [vmem:[%s549 + $0x1c] sm:$0xf] %vm2040, %v2015
          %2049 = vst.msk [vmem:[%s549 + $0x20] sm:$0xf] %vm2040, %v2016
          %2050 = vst.msk [vmem:[%s549 + $0x24] sm:$0xf] %vm2040, %v2017
          %2051 = vst.msk [vmem:[%s549 + $0x28] sm:$0xf] %vm2040, %v2018
          %2052 = vst.msk [vmem:[%s549 + $0x2c] sm:$0xf] %vm2040, %v2019
          %2053 = vst.msk [vmem:[%s549 + $0x30] sm:$0xf] %vm2040, %v2020
          %2054 = vst.msk [vmem:[%s549 + $0x34] sm:$0xf] %vm2040, %v2021
          %2055 = vst.msk [vmem:[%s549 + $0x38] sm:$0xf] %vm2040, %v2022
          %2056 = vst.msk [vmem:[%s549 + $0x3c] sm:$0xf] %vm2040, %v2023
        $region167: #{gpt_forward.8} parent=142 // pred_fallthru
          _
        %s2057 = sand.u32 %s127, 1
        %s2058 = sand.u32 %s127, 1
        %s2059 = smul.addr %s2058, 64
        %s2060 = scalar_lea.vmem [#allocation8], %s2059
        // Predicated region
        $region168: #{gpt_forward.8} parent=142 // pred_check
          %p2061 = pneg %p137
        $region169: #{gpt_forward.8} parent=142 // pred_check_branch
          %2063 = sbr.rel (%p2061) target = $region171
        $region170: #{gpt_forward.8} parent=142 // pred_region
          %s2064 = smul.u32 4, %s20
          %s2065 = smul.addr %s19, 32
          %s2066 = sadd.s32 %s2064, %s2065
          %s2067 = smul.addr %s2066, 4
          %s2068 = scalar_lea.vmem %s3, %s2067
          // Predicated region
          $region172: #{gpt_forward.8} parent=170 // pred_check
            _
          $region173: #{gpt_forward.8} parent=170 // pred_check_branch
            %2070 = sbr.rel (0) target = $region175
          $region174: #{gpt_forward.8} parent=170 // pred_region
            // Predicated region
            $region176: #{gpt_forward.8} parent=174 // pred_check
              _
            $region177: #{gpt_forward.8} parent=174 // pred_check_branch
              %2072 = sbr.rel target = $region179
            $region178: #{gpt_forward.8} parent=174 // pred_region
              // Predicated region
              $region191: #{gpt_forward.8} parent=178 // pred_check
                _
              $region192: #{gpt_forward.8} parent=178 // pred_check_branch
                %2118 = sbr.rel (0) target = $region194
              $region193: #{gpt_forward.8} parent=178 // pred_region
                loop: start=0, step=1, limit=1
                $region195: #{gpt_forward.8} parent=193 // loop_pre_header
                  _
                $region196: #{gpt_forward.8} parent=193 // loop_header
                  %s2120 = sphi 0, %s2124
                  %p2121 = scmp.ge.s32.totalorder %s2120, 1
                  %s2125 = sphi %s2060, %s2060
                  %s2126 = sphi %s2068, %s2068
                $region197: #{gpt_forward.8} parent=193 // loop_header_branch
                  %2123 = sbr.rel (%p2121) target = $region201
                $region198: #{gpt_forward.8} parent=193 // loop_body
                  _
                $region199: #{gpt_forward.8} parent=193 // loop_footer
                  %s2124 = sadd.s32 1, %s2120
                $region200: #{gpt_forward.8} parent=193 // loop_footer_branch
                  %2119 = sbr.rel target = $region196
                $region201: #{gpt_forward.8} parent=193 // loop_exit
                  _
                %s2128 = ssub.s32 16, 1
                loop: start=0, step=1, limit=1
                $region202: #{gpt_forward.8} parent=193 // loop_pre_header
                  _
                $region203: #{gpt_forward.8} parent=193 // loop_header
                  %s2130 = sphi 0, %s2134
                  %p2131 = scmp.ge.s32.totalorder %s2130, 1
                  %s2135 = sphi %s2060, %s2060
                  %s2136 = sphi %s2068, %s2068
                $region204: #{gpt_forward.8} parent=193 // loop_header_branch
                  %2133 = sbr.rel (%p2131) target = $region208
                $region205: #{gpt_forward.8} parent=193 // loop_body
                  %v2137 = vld [vmem:[%s2135] sm:%s2128]
                  %2138 = vst [vmem:[%s2136] sm:%s2128] %v2137
                  %v2139 = vld [vmem:[%s2135 + $0x4] sm:%s2128]
                  %2140 = vst [vmem:[%s2136 + $0x4] sm:%s2128] %v2139
                  %v2141 = vld [vmem:[%s2135 + $0x8] sm:%s2128]
                  %2142 = vst [vmem:[%s2136 + $0x8] sm:%s2128] %v2141
                  %v2143 = vld [vmem:[%s2135 + $0xc] sm:%s2128]
                  %2144 = vst [vmem:[%s2136 + $0xc] sm:%s2128] %v2143
                  %v2145 = vld [vmem:[%s2135 + $0x10] sm:%s2128]
                  %2146 = vst [vmem:[%s2136 + $0x20] sm:%s2128] %v2145
                  %v2147 = vld [vmem:[%s2135 + $0x14] sm:%s2128]
                  %2148 = vst [vmem:[%s2136 + $0x24] sm:%s2128] %v2147
                  %v2149 = vld [vmem:[%s2135 + $0x18] sm:%s2128]
                  %2150 = vst [vmem:[%s2136 + $0x28] sm:%s2128] %v2149
                  %v2151 = vld [vmem:[%s2135 + $0x1c] sm:%s2128]
                  %2152 = vst [vmem:[%s2136 + $0x2c] sm:%s2128] %v2151
                  %v2153 = vld [vmem:[%s2135 + $0x20] sm:%s2128]
                  %2154 = vst [vmem:[%s2136 + $0x40] sm:%s2128] %v2153
                  %v2155 = vld [vmem:[%s2135 + $0x24] sm:%s2128]
                  %2156 = vst [vmem:[%s2136 + $0x44] sm:%s2128] %v2155
                  %v2157 = vld [vmem:[%s2135 + $0x28] sm:%s2128]
                  %2158 = vst [vmem:[%s2136 + $0x48] sm:%s2128] %v2157
                  %v2159 = vld [vmem:[%s2135 + $0x2c] sm:%s2128]
                  %2160 = vst [vmem:[%s2136 + $0x4c] sm:%s2128] %v2159
                  %v2161 = vld [vmem:[%s2135 + $0x30] sm:%s2128]
                  %2162 = vst [vmem:[%s2136 + $0x60] sm:%s2128] %v2161
                  %v2163 = vld [vmem:[%s2135 + $0x34] sm:%s2128]
                  %2164 = vst [vmem:[%s2136 + $0x64] sm:%s2128] %v2163
                  %v2165 = vld [vmem:[%s2135 + $0x38] sm:%s2128]
                  %2166 = vst [vmem:[%s2136 + $0x68] sm:%s2128] %v2165
                  %v2167 = vld [vmem:[%s2135 + $0x3c] sm:%s2128]
                  %2168 = vst [vmem:[%s2136 + $0x6c] sm:%s2128] %v2167
                $region206: #{gpt_forward.8} parent=193 // loop_footer
                  %s2134 = sadd.s32 1, %s2130
                $region207: #{gpt_forward.8} parent=193 // loop_footer_branch
                  %2129 = sbr.rel target = $region203
                $region208: #{gpt_forward.8} parent=193 // loop_exit
                  _
              $region194: #{gpt_forward.8} parent=178 // pred_fallthru
                _
            $region179: #{gpt_forward.8} parent=174 // pred_fallthru
              _
            // Predicated region
            $region180: #{gpt_forward.8} parent=174 // pred_check
              _
            $region181: #{gpt_forward.8} parent=174 // pred_check_branch
              %2074 = sbr.rel (0) target = $region183
            $region182: #{gpt_forward.8} parent=174 // pred_region
              %s2076 = ssub.s32 16, 1
              loop: start=0, step=1, limit=1
              $region184: #{gpt_forward.8} parent=182 // loop_pre_header
                _
              $region185: #{gpt_forward.8} parent=182 // loop_header
                %s2078 = sphi 0, %s2082
                %p2079 = scmp.ge.s32.totalorder %s2078, 1
                %s2083 = sphi %s2060, %s2060
                %s2084 = sphi %s2068, %s2068
              $region186: #{gpt_forward.8} parent=182 // loop_header_branch
                %2081 = sbr.rel (%p2079) target = $region190
              $region187: #{gpt_forward.8} parent=182 // loop_body
                %v2085 = vld [vmem:[%s2083] sm:%s2076]
                %2086 = vst [vmem:[%s2084] sm:%s2076] %v2085
                %v2087 = vld [vmem:[%s2083 + $0x4] sm:%s2076]
                %2088 = vst [vmem:[%s2084 + $0x4] sm:%s2076] %v2087
                %v2089 = vld [vmem:[%s2083 + $0x8] sm:%s2076]
                %2090 = vst [vmem:[%s2084 + $0x8] sm:%s2076] %v2089
                %v2091 = vld [vmem:[%s2083 + $0xc] sm:%s2076]
                %2092 = vst [vmem:[%s2084 + $0xc] sm:%s2076] %v2091
                %v2093 = vld [vmem:[%s2083 + $0x10] sm:%s2076]
                %2094 = vst [vmem:[%s2084 + $0x20] sm:%s2076] %v2093
                %v2095 = vld [vmem:[%s2083 + $0x14] sm:%s2076]
                %2096 = vst [vmem:[%s2084 + $0x24] sm:%s2076] %v2095
                %v2097 = vld [vmem:[%s2083 + $0x18] sm:%s2076]
                %2098 = vst [vmem:[%s2084 + $0x28] sm:%s2076] %v2097
                %v2099 = vld [vmem:[%s2083 + $0x1c] sm:%s2076]
                %2100 = vst [vmem:[%s2084 + $0x2c] sm:%s2076] %v2099
                %v2101 = vld [vmem:[%s2083 + $0x20] sm:%s2076]
                %2102 = vst [vmem:[%s2084 + $0x40] sm:%s2076] %v2101
                %v2103 = vld [vmem:[%s2083 + $0x24] sm:%s2076]
                %2104 = vst [vmem:[%s2084 + $0x44] sm:%s2076] %v2103
                %v2105 = vld [vmem:[%s2083 + $0x28] sm:%s2076]
                %2106 = vst [vmem:[%s2084 + $0x48] sm:%s2076] %v2105
                %v2107 = vld [vmem:[%s2083 + $0x2c] sm:%s2076]
                %2108 = vst [vmem:[%s2084 + $0x4c] sm:%s2076] %v2107
                %v2109 = vld [vmem:[%s2083 + $0x30] sm:%s2076]
                %2110 = vst [vmem:[%s2084 + $0x60] sm:%s2076] %v2109
                %v2111 = vld [vmem:[%s2083 + $0x34] sm:%s2076]
                %2112 = vst [vmem:[%s2084 + $0x64] sm:%s2076] %v2111
                %v2113 = vld [vmem:[%s2083 + $0x38] sm:%s2076]
                %2114 = vst [vmem:[%s2084 + $0x68] sm:%s2076] %v2113
                %v2115 = vld [vmem:[%s2083 + $0x3c] sm:%s2076]
                %2116 = vst [vmem:[%s2084 + $0x6c] sm:%s2076] %v2115
              $region188: #{gpt_forward.8} parent=182 // loop_footer
                %s2082 = sadd.s32 1, %s2078
              $region189: #{gpt_forward.8} parent=182 // loop_footer_branch
                %2077 = sbr.rel target = $region185
              $region190: #{gpt_forward.8} parent=182 // loop_exit
                _
            $region183: #{gpt_forward.8} parent=174 // pred_fallthru
              _
          $region175: #{gpt_forward.8} parent=170 // pred_fallthru
            _
          %2169 = vnop
        $region171: #{gpt_forward.8} parent=142 // pred_fallthru
          _
      $region143: #{gpt_forward.8} parent=5 // pred_fallthru
        _
      %p2170 = scmp.le.s32.totalorder 2, %s9
      // Predicated region
      $region209: #{gpt_forward.8} parent=5 // pred_check
        %p2171 = pneg %p2170
      $region210: #{gpt_forward.8} parent=5 // pred_check_branch
        %2173 = sbr.rel (%p2171) target = $region212
      $region211: #{gpt_forward.8} parent=5 // pred_region
        %s2174 = ssub.s32 %s9, 2
        // Predicated region
        $region213: #{gpt_forward.8} parent=211 // pred_check
          %p2175 = pneg %p143
        $region214: #{gpt_forward.8} parent=211 // pred_check_branch
          %2177 = sbr.rel (%p2175) target = $region216
        $region215: #{gpt_forward.8} parent=211 // pred_region
          %s2178 = sand.u32 %s128, 1
          %s2179 = sand.u32 %s128, 1
          %s2180 = smul.addr %s2179, 64
          %s2181 = scalar_lea.vmem [#allocation8], %s2180
        $region216: #{gpt_forward.8} parent=211 // pred_fallthru
          _
      $region212: #{gpt_forward.8} parent=5 // pred_fallthru
        _
    $region6: #{gpt_forward.8} parent=1 // loop_footer
      %s13 = sadd.s32 1, %s9
    $region7: #{gpt_forward.8} parent=1 // loop_footer_branch
      %8 = sbr.rel target = $region3
    $region8: #{gpt_forward.8} parent=1 // loop_exit
      _

</llo_original>
